<compile_context>
chip_gen: v7x
topology: tpu7x:2x2x1
jax: 0.10.0
libtpu: 0.0.40
codegen_flags: <defaults>
</compile_context>

<pallas_src>
import jax
import jax.numpy as jnp
from jax.experimental import pallas as pl
from jax.experimental.pallas import tpu as pltpu


# ----------------------------- kernel helpers ------------------------------ #
def _softmax_last(a):
    m = jnp.max(a, axis=-1, keepdims=True)
    e = jnp.exp(a - m)
    # approx reciprocal runs on the otherwise-idle EUP slot
    return e * pl.reciprocal(jnp.sum(e, axis=-1, keepdims=True), approx=True)


def _softplus(v):
    # numerically-stable softplus: log(1 + exp(v))
    return jnp.log1p(jnp.exp(-jnp.abs(v))) + jnp.maximum(v, 0.0)


# ----------------------------- kernel --------------------------------------- #
def inference_net_kernel(
    invt_ref,                  # SMEM (1,) f32 : 1 / gumbel-softmax temperature
    x_ref,                     # (bb, x_dim)  bf16
    w1_ref, b1_ref,            # q(y|x)  Linear(x_dim, 512)
    w2_ref, b2_ref,            # q(y|x)  Linear(512, 512)
    wl_ref, bl_ref,            # GumbelSoftmax logits Linear(512, y_dim)
    gnoise_ref,                # (bb, y_dim) f32 gumbel noise
    w3x_ref, w3y_ref, b3_ref,  # q(z|x,y) Linear(x_dim+y_dim, 512), split x/y
    w4_ref, b4_ref,            # q(z|x,y) Linear(512, 512)
    wmv_ref, bmv_ref,          # fused Gaussian head Linear(512, 2*z_dim) = [mu | var]
    znoise_ref,                # (bb, z_dim) f32 standard normal noise
    out_ref,                   # (bb, 3*y_dim + 3*z_dim) f32 packed output slab
):
    f32 = jnp.float32
    bf16 = jnp.bfloat16

    x = x_ref[...]                                          # bf16

    # ---------------- q(y|x) trunk ----------------
    h = jnp.dot(x, w1_ref[...], preferred_element_type=f32) + b1_ref[...]
    h = jnp.maximum(h, 0.0).astype(bf16)
    h = jnp.dot(h, w2_ref[...], preferred_element_type=f32) + b2_ref[...]
    h = jnp.maximum(h, 0.0).astype(bf16)

    logits = jnp.dot(h, wl_ref[...], preferred_element_type=f32) + bl_ref[...]
    prob = _softmax_last(logits)

    # gumbel-softmax sample (hard=False path); multiply by 1/T instead of divide
    inv_t = invt_ref[0]
    y = _softmax_last((logits + gnoise_ref[...]) * inv_t)
    # TODO(synk): hard=True straight-through one-hot path not implemented
    #             (original forward defaults to hard=0, so it is never taken).

    # ---------------- q(z|x,y) trunk ----------------
    # concat(x, y) @ W3  ==  x @ W3_x + y @ W3_y   (avoids an in-kernel concat)
    g = (jnp.dot(x, w3x_ref[...], preferred_element_type=f32)
         + jnp.dot(y.astype(bf16), w3y_ref[...], preferred_element_type=f32)
         + b3_ref[...])
    g = jnp.maximum(g, 0.0).astype(bf16)
    g = jnp.dot(g, w4_ref[...], preferred_element_type=f32) + b4_ref[...]
    g = jnp.maximum(g, 0.0).astype(bf16)

    # fused [mu | var_pre] head: one MXU pipeline instead of two tiny-N ones
    mv = jnp.dot(g, wmv_ref[...], preferred_element_type=f32) + bmv_ref[...]
    z_dim = mv.shape[-1] // 2
    mu = mv[:, :z_dim]
    var = _softplus(mv[:, z_dim:])
    z = mu + znoise_ref[...] * jnp.sqrt(var + 1e-10)

    # ---------------- packed, lane-dense output slab ----------------
    yd = logits.shape[-1]
    out_ref[:, 0 * yd:1 * yd] = logits
    out_ref[:, 1 * yd:2 * yd] = prob
    out_ref[:, 2 * yd:3 * yd] = y
    base = 3 * yd
    out_ref[:, base:base + z_dim] = mu
    out_ref[:, base + z_dim:base + 2 * z_dim] = var
    out_ref[:, base + 2 * z_dim:base + 3 * z_dim] = z


# ----------------------------- wrapper -------------------------------------- #
def inference_net_forward(params, x, gumbel_noise, gauss_noise,
                          temperature=1.0, block_b=128):
    B, x_dim = x.shape
    y_dim = params["wl"].shape[1]
    z_dim = params["wmu"].shape[1]
    f32 = jnp.float32
    bf16 = jnp.bfloat16

    # For a repeated hot loop these casts / fusions (and ideally the bf16
    # weights themselves) should be hoisted out of the per-step call.
    wmv = jnp.concatenate([params["wmu"], params["wvar"]], axis=1)   # (512, 2*z_dim)
    bmv = jnp.concatenate([params["bmu"], params["bvar"]], axis=1)   # (1, 2*z_dim)

    # ---- batch tiling (single block at tiny B; 128-row blocks otherwise) ----
    bb = min(block_b, B)
    B_pad = ((B + bb - 1) // bb) * bb
    pad = B_pad - B
    if pad:
        x = jnp.pad(x, ((0, pad), (0, 0)))
        gumbel_noise = jnp.pad(gumbel_noise, ((0, pad), (0, 0)))
        gauss_noise = jnp.pad(gauss_noise, ((0, pad), (0, 0)))
    nb = B_pad // bb

    inv_temp = jnp.array([1.0 / float(temperature)], dtype=f32)

    def cw(w):                      # bf16 MXU operand
        return w.astype(bf16)

    smem = pl.BlockSpec(memory_space=pltpu.MemorySpace.SMEM)

    def wspec(arr):                 # VMEM-resident weight/bias (constant block idx)
        return pl.BlockSpec(arr.shape, lambda i: (0, 0))

    def bspec(feat):                # batch-tiled activations / noise / output
        return pl.BlockSpec((bb, feat), lambda i: (i, 0))

    inputs = (
        inv_temp,
        x.astype(bf16),
        cw(params["w1"]), params["b1"],
        cw(params["w2"]), params["b2"],
        cw(params["wl"]), params["bl"],
        gumbel_noise,
        cw(params["w3x"]), cw(params["w3y"]), params["b3"],
        cw(params["w4"]), params["b4"],
        cw(wmv), bmv,
        gauss_noise,
    )
    in_specs = [
        smem,
        bspec(x_dim),
        wspec(params["w1"]), wspec(params["b1"]),
        wspec(params["w2"]), wspec(params["b2"]),
        wspec(params["wl"]), wspec(params["bl"]),
        bspec(y_dim),
        wspec(params["w3x"]), wspec(params["w3y"]), wspec(params["b3"]),
        wspec(params["w4"]), wspec(params["b4"]),
        wspec(wmv), wspec(bmv),
        bspec(z_dim),
    ]

    out_w = 3 * y_dim + 3 * z_dim
    out = pl.pallas_call(
        inference_net_kernel,
        grid=(nb,),
        out_shape=jax.ShapeDtypeStruct((B_pad, out_w), f32),
        in_specs=in_specs,
        out_specs=bspec(out_w),
        compiler_params=pltpu.CompilerParams(
            dimension_semantics=("parallel",)),
    )(*inputs)

    out = out[:B]
    logits = out[:, 0:y_dim]
    prob = out[:, y_dim:2 * y_dim]
    y = out[:, 2 * y_dim:3 * y_dim]
    base = 3 * y_dim
    mu = out[:, base:base + z_dim]
    var = out[:, base + z_dim:base + 2 * z_dim]
    z = out[:, base + 2 * z_dim:base + 3 * z_dim]

    return {
        "mean": mu, "var": var, "gaussian": z,
        "logits": logits, "prob_cat": prob, "categorical": y,
    }


# ----------------------------- reference ------------------------------------ #
def reference_forward(params, x, gumbel_noise, gauss_noise, temperature=1.0):
    f32 = jnp.float32
    bf16 = jnp.bfloat16

    def mm(a, w):  # mirror kernel: bf16 operands, f32 accumulation
        return jnp.dot(a.astype(bf16), w.astype(bf16), preferred_element_type=f32)

    def softmax(a):
        a = a - jnp.max(a, axis=-1, keepdims=True)
        e = jnp.exp(a)
        return e / jnp.sum(e, axis=-1, keepdims=True)

    h = jax.nn.relu(mm(x, params["w1"]) + params["b1"])
    h = jax.nn.relu(mm(h, params["w2"]) + params["b2"])
    logits = mm(h, params["wl"]) + params["bl"]
    prob = softmax(logits)
    y = softmax((logits + gumbel_noise) / temperature)

    g = jax.nn.relu(mm(x, params["w3x"]) + mm(y, params["w3y"]) + params["b3"])
    g = jax.nn.relu(mm(g, params["w4"]) + params["b4"])
    mu = mm(g, params["wmu"]) + params["bmu"]
    var = jax.nn.softplus(mm(g, params["wvar"]) + params["bvar"])
    z = mu + gauss_noise * jnp.sqrt(var + 1e-10)
    return {"mean": mu, "var": var, "gaussian": z,
            "logits": logits, "prob_cat": prob, "categorical": y}


# ----------------------------- init ------------------------------------------ #
def init_params(key, x_dim, z_dim, y_dim, hidden=512):
    f32 = jnp.float32

    def linear(key, fan_in, fan_out):
        kw, kb = jax.random.split(key)
        bound = 1.0 / jnp.sqrt(fan_in)
        w = jax.random.uniform(kw, (fan_in, fan_out), f32, -bound, bound)
        b = jax.random.uniform(kb, (1, fan_out), f32, -bound, bound)
        return w, b

    keys = jax.random.split(key, 7)
    w1, b1 = linear(keys[0], x_dim, hidden)
    w2, b2 = linear(keys[1], hidden, hidden)
    wl, bl = linear(keys[2], hidden, y_dim)
    w3, b3 = linear(keys[3], x_dim + y_dim, hidden)
    w4, b4 = linear(keys[4], hidden, hidden)
    wmu, bmu = linear(keys[5], hidden, z_dim)
    wvar, bvar = linear(keys[6], hidden, z_dim)
    return {
        "w1": w1, "b1": b1, "w2": w2, "b2": b2, "wl": wl, "bl": bl,
        "w3x": w3[:x_dim], "w3y": w3[x_dim:], "b3": b3,
        "w4": w4, "b4": b4,
        "wmu": wmu, "bmu": bmu, "wvar": wvar, "bvar": bvar,
    }


# ----------------------------- main ------------------------------------------ #
if __name__ == "__main__":
    B, X_DIM, Y_DIM, Z_DIM = 8, 64, 16, 32
    key = jax.random.PRNGKey(0)
    k_param, k_x, k_gumbel, k_gauss = jax.random.split(key, 4)

    params = init_params(k_param, X_DIM, Z_DIM, Y_DIM)
    x = jax.random.normal(k_x, (B, X_DIM), jnp.float32)

    eps = 1e-20
    u = jax.random.uniform(k_gumbel, (B, Y_DIM), jnp.float32)
    gumbel_noise = -jnp.log(-jnp.log(u + eps) + eps)
    gauss_noise = jax.random.normal(k_gauss, (B, Z_DIM), jnp.float32)

    out = inference_net_forward(params, x, gumbel_noise, gauss_noise, temperature=1.0)
    out = jax.block_until_ready(out)

    ref = reference_forward(params, x, gumbel_noise, gauss_noise, temperature=1.0)
    # bf16 matmul operands are mirrored in the reference; remaining deltas are the
    # approx-reciprocal softmax (~2^-12 rel) and transcendental impl differences.
    for k in ("mean", "var", "gaussian", "logits", "prob_cat", "categorical"):
        assert jnp.allclose(out[k], ref[k], atol=2e-3, rtol=2e-3), k

    print("KERNEL_OK")
</pallas_src>

<mosaic_0001>
module attributes {stable_mosaic.version = 11 : i64} {
  func.func @inference_net_kernel(%arg0: i32, %arg1: memref<1xf32, #tpu.memory_space<smem>>, %arg2: memref<8x64xbf16, #tpu.memory_space<vmem>>, %arg3: memref<64x512xbf16, #tpu.memory_space<vmem>>, %arg4: memref<1x512xf32, #tpu.memory_space<vmem>>, %arg5: memref<512x512xbf16, #tpu.memory_space<vmem>>, %arg6: memref<1x512xf32, #tpu.memory_space<vmem>>, %arg7: memref<512x16xbf16, #tpu.memory_space<vmem>>, %arg8: memref<1x16xf32, #tpu.memory_space<vmem>>, %arg9: memref<8x16xf32, #tpu.memory_space<vmem>>, %arg10: memref<64x512xbf16, #tpu.memory_space<vmem>>, %arg11: memref<16x512xbf16, #tpu.memory_space<vmem>>, %arg12: memref<1x512xf32, #tpu.memory_space<vmem>>, %arg13: memref<512x512xbf16, #tpu.memory_space<vmem>>, %arg14: memref<1x512xf32, #tpu.memory_space<vmem>>, %arg15: memref<512x64xbf16, #tpu.memory_space<vmem>>, %arg16: memref<1x64xf32, #tpu.memory_space<vmem>>, %arg17: memref<8x32xf32, #tpu.memory_space<vmem>>, %arg18: memref<8x144xf32, #tpu.memory_space<vmem>>) attributes {dimension_semantics = [#tpu.dimension_semantics<parallel>], iteration_bounds = array<i64: 1>, scalar_prefetch = 0 : i64, scratch_operands = 0 : i64, tpu.core_type = #tpu.core_type<tc>, window_params = [{transform_indices = @transform_0, window_bounds = array<i64: 1>}, {transform_indices = @transform_1, window_bounds = array<i64: 8, 64>}, {pipeline_mode = #tpu.pipeline_mode<synchronous>, transform_indices = @transform_2, window_bounds = array<i64: 64, 512>}, {pipeline_mode = #tpu.pipeline_mode<synchronous>, transform_indices = @transform_3, window_bounds = array<i64: 1, 512>}, {pipeline_mode = #tpu.pipeline_mode<synchronous>, transform_indices = @transform_4, window_bounds = array<i64: 512, 512>}, {pipeline_mode = #tpu.pipeline_mode<synchronous>, transform_indices = @transform_5, window_bounds = array<i64: 1, 512>}, {pipeline_mode = #tpu.pipeline_mode<synchronous>, transform_indices = @transform_6, window_bounds = array<i64: 512, 16>}, {pipeline_mode = #tpu.pipeline_mode<synchronous>, transform_indices = @transform_7, window_bounds = array<i64: 1, 16>}, {transform_indices = @transform_8, window_bounds = array<i64: 8, 16>}, {pipeline_mode = #tpu.pipeline_mode<synchronous>, transform_indices = @transform_9, window_bounds = array<i64: 64, 512>}, {pipeline_mode = #tpu.pipeline_mode<synchronous>, transform_indices = @transform_10, window_bounds = array<i64: 16, 512>}, {pipeline_mode = #tpu.pipeline_mode<synchronous>, transform_indices = @transform_11, window_bounds = array<i64: 1, 512>}, {pipeline_mode = #tpu.pipeline_mode<synchronous>, transform_indices = @transform_12, window_bounds = array<i64: 512, 512>}, {pipeline_mode = #tpu.pipeline_mode<synchronous>, transform_indices = @transform_13, window_bounds = array<i64: 1, 512>}, {pipeline_mode = #tpu.pipeline_mode<synchronous>, transform_indices = @transform_14, window_bounds = array<i64: 512, 64>}, {pipeline_mode = #tpu.pipeline_mode<synchronous>, transform_indices = @transform_15, window_bounds = array<i64: 1, 64>}, {transform_indices = @transform_16, window_bounds = array<i64: 8, 32>}, {transform_indices = @transform_17, window_bounds = array<i64: 8, 144>}]} {
    %c0 = arith.constant 0 : index
    %c0_0 = arith.constant 0 : index
    %0 = vector.load %arg2[%c0, %c0_0] : memref<8x64xbf16, #tpu.memory_space<vmem>>, vector<8x64xbf16>
    %c0_1 = arith.constant 0 : index
    %c0_2 = arith.constant 0 : index
    %1 = vector.load %arg3[%c0_1, %c0_2] : memref<64x512xbf16, #tpu.memory_space<vmem>>, vector<64x512xbf16>
    %cst = arith.constant dense<0.000000e+00> : vector<8x512xf32>
    %2 = tpu.matmul %0, %1, %cst {dimension_numbers = #tpu.dot_dimension_numbers<[1], [0], [0], [1], [0, 0, 1, 1], [], []>} : vector<8x64xbf16>, vector<64x512xbf16>, vector<8x512xf32> -> vector<8x512xf32>
    %c0_3 = arith.constant 0 : index
    %c0_4 = arith.constant 0 : index
    %3 = vector.load %arg4[%c0_3, %c0_4] : memref<1x512xf32, #tpu.memory_space<vmem>>, vector<1x512xf32>
    %4 = vector.broadcast %3 : vector<1x512xf32> to vector<8x512xf32>
    %5 = arith.addf %2, %4 : vector<8x512xf32>
    %cst_5 = arith.constant 0.000000e+00 : f32
    %6 = vector.broadcast %cst_5 : f32 to vector<8x512xf32>
    %7 = arith.maximumf %5, %6 : vector<8x512xf32>
    %8 = arith.truncf %7 : vector<8x512xf32> to vector<8x512xbf16>
    %c0_6 = arith.constant 0 : index
    %c0_7 = arith.constant 0 : index
    %9 = vector.load %arg5[%c0_6, %c0_7] : memref<512x512xbf16, #tpu.memory_space<vmem>>, vector<512x512xbf16>
    %cst_8 = arith.constant dense<0.000000e+00> : vector<8x512xf32>
    %10 = tpu.matmul %8, %9, %cst_8 {dimension_numbers = #tpu.dot_dimension_numbers<[1], [0], [0], [1], [0, 0, 1, 1], [], []>} : vector<8x512xbf16>, vector<512x512xbf16>, vector<8x512xf32> -> vector<8x512xf32>
    %c0_9 = arith.constant 0 : index
    %c0_10 = arith.constant 0 : index
    %11 = vector.load %arg6[%c0_9, %c0_10] : memref<1x512xf32, #tpu.memory_space<vmem>>, vector<1x512xf32>
    %12 = vector.broadcast %11 : vector<1x512xf32> to vector<8x512xf32>
    %13 = arith.addf %10, %12 : vector<8x512xf32>
    %cst_11 = arith.constant 0.000000e+00 : f32
    %14 = vector.broadcast %cst_11 : f32 to vector<8x512xf32>
    %15 = arith.maximumf %13, %14 : vector<8x512xf32>
    %16 = arith.truncf %15 : vector<8x512xf32> to vector<8x512xbf16>
    %c0_12 = arith.constant 0 : index
    %c0_13 = arith.constant 0 : index
    %17 = vector.load %arg7[%c0_12, %c0_13] : memref<512x16xbf16, #tpu.memory_space<vmem>>, vector<512x16xbf16>
    %cst_14 = arith.constant dense<0.000000e+00> : vector<8x16xf32>
    %18 = tpu.matmul %16, %17, %cst_14 {dimension_numbers = #tpu.dot_dimension_numbers<[1], [0], [0], [1], [0, 0, 1, 1], [], []>} : vector<8x512xbf16>, vector<512x16xbf16>, vector<8x16xf32> -> vector<8x16xf32>
    %c0_15 = arith.constant 0 : index
    %c0_16 = arith.constant 0 : index
    %19 = vector.load %arg8[%c0_15, %c0_16] : memref<1x16xf32, #tpu.memory_space<vmem>>, vector<1x16xf32>
    %20 = vector.broadcast %19 : vector<1x16xf32> to vector<8x16xf32>
    %21 = arith.addf %18, %20 : vector<8x16xf32>
    %cst_17 = arith.constant dense<0xFF800000> : vector<8xf32>
    %22 = vector.multi_reduction <maximumf>, %21, %cst_17 [1] : vector<8x16xf32> to vector<8xf32>
    %23 = vector.shape_cast %22 : vector<8xf32> to vector<8x1xf32>
    %24 = vector.broadcast %23 : vector<8x1xf32> to vector<8x16xf32>
    %25 = arith.subf %21, %24 : vector<8x16xf32>
    %26 = math.exp %25 : vector<8x16xf32>
    %cst_18 = arith.constant dense<0.000000e+00> : vector<8xf32>
    %27 = vector.multi_reduction <add>, %26, %cst_18 [1] : vector<8x16xf32> to vector<8xf32>
    %28 = vector.shape_cast %27 : vector<8xf32> to vector<8x1xf32>
    %29 = tpu.reciprocal %28 {approx = true} : vector<8x1xf32> -> vector<8x1xf32>
    %30 = vector.broadcast %29 : vector<8x1xf32> to vector<8x16xf32>
    %31 = arith.mulf %26, %30 : vector<8x16xf32>
    %c0_19 = arith.constant 0 : index
    %32 = memref.load %arg1[%c0_19] : memref<1xf32, #tpu.memory_space<smem>>
    %c0_20 = arith.constant 0 : index
    %c0_21 = arith.constant 0 : index
    %33 = vector.load %arg9[%c0_20, %c0_21] : memref<8x16xf32, #tpu.memory_space<vmem>>, vector<8x16xf32>
    %34 = arith.addf %21, %33 : vector<8x16xf32>
    %35 = vector.broadcast %32 : f32 to vector<8x16xf32>
    %36 = arith.mulf %34, %35 : vector<8x16xf32>
    %cst_22 = arith.constant dense<0xFF800000> : vector<8xf32>
    %37 = vector.multi_reduction <maximumf>, %36, %cst_22 [1] : vector<8x16xf32> to vector<8xf32>
    %38 = vector.shape_cast %37 : vector<8xf32> to vector<8x1xf32>
    %39 = vector.broadcast %38 : vector<8x1xf32> to vector<8x16xf32>
    %40 = arith.subf %36, %39 : vector<8x16xf32>
    %41 = math.exp %40 : vector<8x16xf32>
    %cst_23 = arith.constant dense<0.000000e+00> : vector<8xf32>
    %42 = vector.multi_reduction <add>, %41, %cst_23 [1] : vector<8x16xf32> to vector<8xf32>
    %43 = vector.shape_cast %42 : vector<8xf32> to vector<8x1xf32>
    %44 = tpu.reciprocal %43 {approx = true} : vector<8x1xf32> -> vector<8x1xf32>
    %45 = vector.broadcast %44 : vector<8x1xf32> to vector<8x16xf32>
    %46 = arith.mulf %41, %45 : vector<8x16xf32>
    %c0_24 = arith.constant 0 : index
    %c0_25 = arith.constant 0 : index
    %47 = vector.load %arg10[%c0_24, %c0_25] : memref<64x512xbf16, #tpu.memory_space<vmem>>, vector<64x512xbf16>
    %cst_26 = arith.constant dense<0.000000e+00> : vector<8x512xf32>
    %48 = tpu.matmul %0, %47, %cst_26 {dimension_numbers = #tpu.dot_dimension_numbers<[1], [0], [0], [1], [0, 0, 1, 1], [], []>} : vector<8x64xbf16>, vector<64x512xbf16>, vector<8x512xf32> -> vector<8x512xf32>
    %49 = arith.truncf %46 : vector<8x16xf32> to vector<8x16xbf16>
    %c0_27 = arith.constant 0 : index
    %c0_28 = arith.constant 0 : index
    %50 = vector.load %arg11[%c0_27, %c0_28] : memref<16x512xbf16, #tpu.memory_space<vmem>>, vector<16x512xbf16>
    %cst_29 = arith.constant dense<0.000000e+00> : vector<8x512xf32>
    %51 = tpu.matmul %49, %50, %cst_29 {dimension_numbers = #tpu.dot_dimension_numbers<[1], [0], [0], [1], [0, 0, 1, 1], [], []>} : vector<8x16xbf16>, vector<16x512xbf16>, vector<8x512xf32> -> vector<8x512xf32>
    %52 = arith.addf %48, %51 : vector<8x512xf32>
    %c0_30 = arith.constant 0 : index
    %c0_31 = arith.constant 0 : index
    %53 = vector.load %arg12[%c0_30, %c0_31] : memref<1x512xf32, #tpu.memory_space<vmem>>, vector<1x512xf32>
    %54 = vector.broadcast %53 : vector<1x512xf32> to vector<8x512xf32>
    %55 = arith.addf %52, %54 : vector<8x512xf32>
    %cst_32 = arith.constant 0.000000e+00 : f32
    %56 = vector.broadcast %cst_32 : f32 to vector<8x512xf32>
    %57 = arith.maximumf %55, %56 : vector<8x512xf32>
    %58 = arith.truncf %57 : vector<8x512xf32> to vector<8x512xbf16>
    %c0_33 = arith.constant 0 : index
    %c0_34 = arith.constant 0 : index
    %59 = vector.load %arg13[%c0_33, %c0_34] : memref<512x512xbf16, #tpu.memory_space<vmem>>, vector<512x512xbf16>
    %cst_35 = arith.constant dense<0.000000e+00> : vector<8x512xf32>
    %60 = tpu.matmul %58, %59, %cst_35 {dimension_numbers = #tpu.dot_dimension_numbers<[1], [0], [0], [1], [0, 0, 1, 1], [], []>} : vector<8x512xbf16>, vector<512x512xbf16>, vector<8x512xf32> -> vector<8x512xf32>
    %c0_36 = arith.constant 0 : index
    %c0_37 = arith.constant 0 : index
    %61 = vector.load %arg14[%c0_36, %c0_37] : memref<1x512xf32, #tpu.memory_space<vmem>>, vector<1x512xf32>
    %62 = vector.broadcast %61 : vector<1x512xf32> to vector<8x512xf32>
    %63 = arith.addf %60, %62 : vector<8x512xf32>
    %cst_38 = arith.constant 0.000000e+00 : f32
    %64 = vector.broadcast %cst_38 : f32 to vector<8x512xf32>
    %65 = arith.maximumf %63, %64 : vector<8x512xf32>
    %66 = arith.truncf %65 : vector<8x512xf32> to vector<8x512xbf16>
    %c0_39 = arith.constant 0 : index
    %c0_40 = arith.constant 0 : index
    %67 = vector.load %arg15[%c0_39, %c0_40] : memref<512x64xbf16, #tpu.memory_space<vmem>>, vector<512x64xbf16>
    %cst_41 = arith.constant dense<0.000000e+00> : vector<8x64xf32>
    %68 = tpu.matmul %66, %67, %cst_41 {dimension_numbers = #tpu.dot_dimension_numbers<[1], [0], [0], [1], [0, 0, 1, 1], [], []>} : vector<8x512xbf16>, vector<512x64xbf16>, vector<8x64xf32> -> vector<8x64xf32>
    %c0_42 = arith.constant 0 : index
    %c0_43 = arith.constant 0 : index
    %69 = vector.load %arg16[%c0_42, %c0_43] : memref<1x64xf32, #tpu.memory_space<vmem>>, vector<1x64xf32>
    %70 = vector.broadcast %69 : vector<1x64xf32> to vector<8x64xf32>
    %71 = arith.addf %68, %70 : vector<8x64xf32>
    %72 = vector.extract_strided_slice %71 {offsets = [0, 0], sizes = [8, 32], strides = [1, 1]} : vector<8x64xf32> to vector<8x32xf32>
    %73 = vector.extract_strided_slice %71 {offsets = [0, 32], sizes = [8, 32], strides = [1, 1]} : vector<8x64xf32> to vector<8x32xf32>
    %74 = math.absf %73 : vector<8x32xf32>
    %cst_44 = arith.constant 0.000000e+00 : f32
    %75 = vector.broadcast %cst_44 : f32 to vector<8x32xf32>
    %76 = arith.subf %75, %74 : vector<8x32xf32>
    %77 = math.exp %76 : vector<8x32xf32>
    %78 = math.log1p %77 : vector<8x32xf32>
    %cst_45 = arith.constant 0.000000e+00 : f32
    %79 = vector.broadcast %cst_45 : f32 to vector<8x32xf32>
    %80 = arith.maximumf %73, %79 : vector<8x32xf32>
    %81 = arith.addf %78, %80 : vector<8x32xf32>
    %c0_46 = arith.constant 0 : index
    %c0_47 = arith.constant 0 : index
    %82 = vector.load %arg17[%c0_46, %c0_47] : memref<8x32xf32, #tpu.memory_space<vmem>>, vector<8x32xf32>
    %cst_48 = arith.constant 1.000000e-10 : f32
    %83 = vector.broadcast %cst_48 : f32 to vector<8x32xf32>
    %84 = arith.addf %81, %83 : vector<8x32xf32>
    %85 = math.sqrt %84 : vector<8x32xf32>
    %86 = arith.mulf %82, %85 : vector<8x32xf32>
    %87 = arith.addf %72, %86 : vector<8x32xf32>
    %c0_49 = arith.constant 0 : index
    %c0_50 = arith.constant 0 : index
    %88 = vector.load %arg18[%c0_49, %c0_50] : memref<8x144xf32, #tpu.memory_space<vmem>>, vector<8x16xf32>
    tpu.vector_store %arg18[%c0_49, %c0_50], %21 {strides = array<i32>} : memref<8x144xf32, #tpu.memory_space<vmem>>, vector<8x16xf32>,
    %c0_51 = arith.constant 0 : index
    %c16 = arith.constant 16 : index
    %89 = vector.load %arg18[%c0_51, %c16] : memref<8x144xf32, #tpu.memory_space<vmem>>, vector<8x16xf32>
    tpu.vector_store %arg18[%c0_51, %c16], %31 {strides = array<i32>} : memref<8x144xf32, #tpu.memory_space<vmem>>, vector<8x16xf32>,
    %c0_52 = arith.constant 0 : index
    %c32 = arith.constant 32 : index
    %90 = vector.load %arg18[%c0_52, %c32] : memref<8x144xf32, #tpu.memory_space<vmem>>, vector<8x16xf32>
    tpu.vector_store %arg18[%c0_52, %c32], %46 {strides = array<i32>} : memref<8x144xf32, #tpu.memory_space<vmem>>, vector<8x16xf32>,
    %c0_53 = arith.constant 0 : index
    %c48 = arith.constant 48 : index
    %91 = vector.load %arg18[%c0_53, %c48] : memref<8x144xf32, #tpu.memory_space<vmem>>, vector<8x32xf32>
    tpu.vector_store %arg18[%c0_53, %c48], %72 {strides = array<i32>} : memref<8x144xf32, #tpu.memory_space<vmem>>, vector<8x32xf32>,
    %c0_54 = arith.constant 0 : index
    %c80 = arith.constant 80 : index
    %92 = vector.load %arg18[%c0_54, %c80] : memref<8x144xf32, #tpu.memory_space<vmem>>, vector<8x32xf32>
    tpu.vector_store %arg18[%c0_54, %c80], %81 {strides = array<i32>} : memref<8x144xf32, #tpu.memory_space<vmem>>, vector<8x32xf32>,
    %c0_55 = arith.constant 0 : index
    %c112 = arith.constant 112 : index
    %93 = vector.load %arg18[%c0_55, %c112] : memref<8x144xf32, #tpu.memory_space<vmem>>, vector<8x32xf32>
    tpu.vector_store %arg18[%c0_55, %c112], %87 {strides = array<i32>} : memref<8x144xf32, #tpu.memory_space<vmem>>, vector<8x32xf32>,
    return
  }
  func.func @transform_0(%arg0: i32) -> i32 {
    %c0_i32 = arith.constant 0 : i32
    %c0_i32_0 = arith.constant 0 : i32
    return %c0_i32 : i32
  }
  func.func @transform_1(%arg0: i32) -> (i32, i32) {
    %c0_i32 = arith.constant 0 : i32
    %c0_i32_0 = arith.constant 0 : i32
    return %arg0, %c0_i32 : i32, i32
  }
  func.func @transform_2(%arg0: i32) -> (i32, i32) {
    %c0_i32 = arith.constant 0 : i32
    %c0_i32_0 = arith.constant 0 : i32
    %c0_i32_1 = arith.constant 0 : i32
    return %c0_i32, %c0_i32_0 : i32, i32
  }
  func.func @transform_3(%arg0: i32) -> (i32, i32) {
    %c0_i32 = arith.constant 0 : i32
    %c0_i32_0 = arith.constant 0 : i32
    %c0_i32_1 = arith.constant 0 : i32
    return %c0_i32, %c0_i32_0 : i32, i32
  }
  func.func @transform_4(%arg0: i32) -> (i32, i32) {
    %c0_i32 = arith.constant 0 : i32
    %c0_i32_0 = arith.constant 0 : i32
    %c0_i32_1 = arith.constant 0 : i32
    return %c0_i32, %c0_i32_0 : i32, i32
  }
  func.func @transform_5(%arg0: i32) -> (i32, i32) {
    %c0_i32 = arith.constant 0 : i32
    %c0_i32_0 = arith.constant 0 : i32
    %c0_i32_1 = arith.constant 0 : i32
    return %c0_i32, %c0_i32_0 : i32, i32
  }
  func.func @transform_6(%arg0: i32) -> (i32, i32) {
    %c0_i32 = arith.constant 0 : i32
    %c0_i32_0 = arith.constant 0 : i32
    %c0_i32_1 = arith.constant 0 : i32
    return %c0_i32, %c0_i32_0 : i32, i32
  }
  func.func @transform_7(%arg0: i32) -> (i32, i32) {
    %c0_i32 = arith.constant 0 : i32
    %c0_i32_0 = arith.constant 0 : i32
    %c0_i32_1 = arith.constant 0 : i32
    return %c0_i32, %c0_i32_0 : i32, i32
  }
  func.func @transform_8(%arg0: i32) -> (i32, i32) {
    %c0_i32 = arith.constant 0 : i32
    %c0_i32_0 = arith.constant 0 : i32
    return %arg0, %c0_i32 : i32, i32
  }
  func.func @transform_9(%arg0: i32) -> (i32, i32) {
    %c0_i32 = arith.constant 0 : i32
    %c0_i32_0 = arith.constant 0 : i32
    %c0_i32_1 = arith.constant 0 : i32
    return %c0_i32, %c0_i32_0 : i32, i32
  }
  func.func @transform_10(%arg0: i32) -> (i32, i32) {
    %c0_i32 = arith.constant 0 : i32
    %c0_i32_0 = arith.constant 0 : i32
    %c0_i32_1 = arith.constant 0 : i32
    return %c0_i32, %c0_i32_0 : i32, i32
  }
  func.func @transform_11(%arg0: i32) -> (i32, i32) {
    %c0_i32 = arith.constant 0 : i32
    %c0_i32_0 = arith.constant 0 : i32
    %c0_i32_1 = arith.constant 0 : i32
    return %c0_i32, %c0_i32_0 : i32, i32
  }
  func.func @transform_12(%arg0: i32) -> (i32, i32) {
    %c0_i32 = arith.constant 0 : i32
    %c0_i32_0 = arith.constant 0 : i32
    %c0_i32_1 = arith.constant 0 : i32
    return %c0_i32, %c0_i32_0 : i32, i32
  }
  func.func @transform_13(%arg0: i32) -> (i32, i32) {
    %c0_i32 = arith.constant 0 : i32
    %c0_i32_0 = arith.constant 0 : i32
    %c0_i32_1 = arith.constant 0 : i32
    return %c0_i32, %c0_i32_0 : i32, i32
  }
  func.func @transform_14(%arg0: i32) -> (i32, i32) {
    %c0_i32 = arith.constant 0 : i32
    %c0_i32_0 = arith.constant 0 : i32
    %c0_i32_1 = arith.constant 0 : i32
    return %c0_i32, %c0_i32_0 : i32, i32
  }
  func.func @transform_15(%arg0: i32) -> (i32, i32) {
    %c0_i32 = arith.constant 0 : i32
    %c0_i32_0 = arith.constant 0 : i32
    %c0_i32_1 = arith.constant 0 : i32
    return %c0_i32, %c0_i32_0 : i32, i32
  }
  func.func @transform_16(%arg0: i32) -> (i32, i32) {
    %c0_i32 = arith.constant 0 : i32
    %c0_i32_0 = arith.constant 0 : i32
    return %arg0, %c0_i32 : i32, i32
  }
  func.func @transform_17(%arg0: i32) -> (i32, i32) {
    %c0_i32 = arith.constant 0 : i32
    %c0_i32_0 = arith.constant 0 : i32
    return %arg0, %c0_i32 : i32, i32
  }
}

</mosaic_0001>

<llo_original>
// kernel: tpu_custom_call.1
$region0: #{tpu_custom_call.1}
  #allocation0 [shape = 'u32[]', space=smem, size = 0x4, offset = 0x4, fixed_abs, tag = 'smem constant byte address 0x4 - core index']
  #allocation1 [shape = 'u32[144,128]{1,0:T(1,128)}', space=vmem, size = 0x12000, scoped, tag = 'internal scratch']
  #allocation2 [shape = 'f32[1]{0:T(128)S(6)}', space=smem, size = 0x200, scoped, tag = 'scoped memory for tpu_custom_call.1']
  %s0 = inlined_call_operand.<no memory space> [shape: f32[1], index: 0, kind: input, shape index: {}]
  %s1 = inlined_call_operand.vmem [shape: bf16[8,64], index: 1, kind: input, shape index: {}]
  %s2 = inlined_call_operand.vmem [shape: bf16[64,512], index: 2, kind: input, shape index: {}]
  %s3 = inlined_call_operand.vmem [shape: f32[1,512], index: 3, kind: input, shape index: {}]
  %s4 = inlined_call_operand.hbm [shape: bf16[512,512], index: 4, kind: input, shape index: {}]
  %s5 = inlined_call_operand.vmem [shape: f32[1,512], index: 5, kind: input, shape index: {}]
  %s6 = inlined_call_operand.vmem [shape: bf16[512,16], index: 6, kind: input, shape index: {}]
  %s7 = inlined_call_operand.vmem [shape: f32[1,16], index: 7, kind: input, shape index: {}]
  %s8 = inlined_call_operand.vmem [shape: f32[8,16], index: 8, kind: input, shape index: {}]
  %s9 = inlined_call_operand.vmem [shape: bf16[64,512], index: 9, kind: input, shape index: {}]
  %s10 = inlined_call_operand.vmem [shape: bf16[16,512], index: 10, kind: input, shape index: {}]
  %s11 = inlined_call_operand.vmem [shape: f32[1,512], index: 11, kind: input, shape index: {}]
  %s12 = inlined_call_operand.hbm [shape: bf16[512,512], index: 12, kind: input, shape index: {}]
  %s13 = inlined_call_operand.vmem [shape: f32[1,512], index: 13, kind: input, shape index: {}]
  %s14 = inlined_call_operand.vmem [shape: bf16[512,64], index: 14, kind: input, shape index: {}]
  %s15 = inlined_call_operand.vmem [shape: f32[1,64], index: 15, kind: input, shape index: {}]
  %s16 = inlined_call_operand.vmem [shape: f32[8,32], index: 16, kind: input, shape index: {}]
  %s17 = inlined_call_operand.hbm [shape: f32[8,144], index: 17, kind: output, shape index: {}]
  %s18 = sld [smem:[#allocation0]]
  $region86: #{tpu_custom_call.1} parent=0
    _
  %s20 = ssub.s32 1, %s18
  %s21 = scalar_select 0, %s20, %s18
  %22 = sst [smem:[#allocation2]] %s0
  $region1: #{tpu_custom_call.1} parent=0
    #allocation3 [shape = 'u8[524288]{0}', space=vmem, size = 0x80000, scoped, tag = 'input window, operand 4, single buffered']
    #allocation4 [shape = 's32[1]{0}', space=sflag, size = 0x4, scoped, tag = 'scoped memory for tpu_custom_call.1']
    #allocation5 [shape = 's32[1]{0}', space=sflag, size = 0x4, scoped, tag = 'scoped memory for tpu_custom_call.1']
    #allocation6 [shape = 'u8[524288]{0}', space=vmem, size = 0x80000, scoped, tag = 'input window, operand 12, single buffered']
    #allocation7 [shape = 's32[1]{0}', space=sflag, size = 0x4, scoped, tag = 'scoped memory for tpu_custom_call.1']
    #allocation8 [shape = 'u8[8192]{0}', space=vmem, size = 0x2000, scoped, tag = 'output window, operand 0, single buffered']
    %23 = vsyncpa [#allocation4], 0
    %24 = vsyncpa [#allocation7], 0
    %25 = vsyncpa [#allocation5], 0
    // Predicated region
    $region2: #{tpu_custom_call.1} parent=1 // pred_check
      _
    $region3: #{tpu_custom_call.1} parent=1 // pred_check_branch
      %27 = sbr.rel (0) target = $region5
    $region4: #{tpu_custom_call.1} parent=1 // pred_region
      _
    $region5: #{tpu_custom_call.1} parent=1 // pred_fallthru
      _
    // Predicated region
    $region6: #{tpu_custom_call.1} parent=1 // pred_check
      _
    $region7: #{tpu_custom_call.1} parent=1 // pred_check_branch
      %29 = sbr.rel (0) target = $region9
    $region8: #{tpu_custom_call.1} parent=1 // pred_region
      _
    $region9: #{tpu_custom_call.1} parent=1 // pred_fallthru
      _
    // Predicated region
    $region10: #{tpu_custom_call.1} parent=1 // pred_check
      _
    $region11: #{tpu_custom_call.1} parent=1 // pred_check_branch
      %31 = sbr.rel (0) target = $region13
    $region12: #{tpu_custom_call.1} parent=1 // pred_region
      _
    $region13: #{tpu_custom_call.1} parent=1 // pred_fallthru
      _
    // Predicated region
    $region14: #{tpu_custom_call.1} parent=1 // pred_check
      _
    $region15: #{tpu_custom_call.1} parent=1 // pred_check_branch
      %33 = sbr.rel (0) target = $region17
    $region16: #{tpu_custom_call.1} parent=1 // pred_region
      _
    $region17: #{tpu_custom_call.1} parent=1 // pred_fallthru
      _
    // Predicated region
    $region18: #{tpu_custom_call.1} parent=1 // pred_check
      _
    $region19: #{tpu_custom_call.1} parent=1 // pred_check_branch
      %35 = sbr.rel (0) target = $region21
    $region20: #{tpu_custom_call.1} parent=1 // pred_region
      %s37 = ssub.s32 16384, 16384
      %38 = vsyncadd [#allocation4], %s37
      %s39 = sshll.u32 [#allocation3], 4
      %s40 = int_to_ptr.vmem [resolvable:$true] %s39
      %45 = dma.hbm_to_vmem [thread:$0]  %s4, 16384, %s40, [#allocation4], 256, 256, 16
    $region21: #{tpu_custom_call.1} parent=1 // pred_fallthru
      _
    // Predicated region
    $region22: #{tpu_custom_call.1} parent=1 // pred_check
      _
    $region23: #{tpu_custom_call.1} parent=1 // pred_check_branch
      %47 = sbr.rel (0) target = $region25
    $region24: #{tpu_custom_call.1} parent=1 // pred_region
      _
    $region25: #{tpu_custom_call.1} parent=1 // pred_fallthru
      _
    // Predicated region
    $region26: #{tpu_custom_call.1} parent=1 // pred_check
      _
    $region27: #{tpu_custom_call.1} parent=1 // pred_check_branch
      %49 = sbr.rel (0) target = $region29
    $region28: #{tpu_custom_call.1} parent=1 // pred_region
      _
    $region29: #{tpu_custom_call.1} parent=1 // pred_fallthru
      _
    // Predicated region
    $region30: #{tpu_custom_call.1} parent=1 // pred_check
      _
    $region31: #{tpu_custom_call.1} parent=1 // pred_check_branch
      %51 = sbr.rel (0) target = $region33
    $region32: #{tpu_custom_call.1} parent=1 // pred_region
      _
    $region33: #{tpu_custom_call.1} parent=1 // pred_fallthru
      _
    // Predicated region
    $region34: #{tpu_custom_call.1} parent=1 // pred_check
      _
    $region35: #{tpu_custom_call.1} parent=1 // pred_check_branch
      %53 = sbr.rel (0) target = $region37
    $region36: #{tpu_custom_call.1} parent=1 // pred_region
      _
    $region37: #{tpu_custom_call.1} parent=1 // pred_fallthru
      _
    // Predicated region
    $region38: #{tpu_custom_call.1} parent=1 // pred_check
      _
    $region39: #{tpu_custom_call.1} parent=1 // pred_check_branch
      %55 = sbr.rel (0) target = $region41
    $region40: #{tpu_custom_call.1} parent=1 // pred_region
      _
    $region41: #{tpu_custom_call.1} parent=1 // pred_fallthru
      _
    // Predicated region
    $region42: #{tpu_custom_call.1} parent=1 // pred_check
      _
    $region43: #{tpu_custom_call.1} parent=1 // pred_check_branch
      %57 = sbr.rel (0) target = $region45
    $region44: #{tpu_custom_call.1} parent=1 // pred_region
      _
    $region45: #{tpu_custom_call.1} parent=1 // pred_fallthru
      _
    // Predicated region
    $region46: #{tpu_custom_call.1} parent=1 // pred_check
      _
    $region47: #{tpu_custom_call.1} parent=1 // pred_check_branch
      %59 = sbr.rel (0) target = $region49
    $region48: #{tpu_custom_call.1} parent=1 // pred_region
      _
    $region49: #{tpu_custom_call.1} parent=1 // pred_fallthru
      _
    // Predicated region
    $region50: #{tpu_custom_call.1} parent=1 // pred_check
      _
    $region51: #{tpu_custom_call.1} parent=1 // pred_check_branch
      %61 = sbr.rel (0) target = $region53
    $region52: #{tpu_custom_call.1} parent=1 // pred_region
      %s63 = ssub.s32 16384, 16384
      %64 = vsyncadd [#allocation7], %s63
      %s65 = sshll.u32 [#allocation6], 4
      %s66 = int_to_ptr.vmem [resolvable:$true] %s65
      %71 = dma.hbm_to_vmem [thread:$0]  %s12, 16384, %s66, [#allocation7], 256, 256, 16
    $region53: #{tpu_custom_call.1} parent=1 // pred_fallthru
      _
    // Predicated region
    $region54: #{tpu_custom_call.1} parent=1 // pred_check
      _
    $region55: #{tpu_custom_call.1} parent=1 // pred_check_branch
      %73 = sbr.rel (0) target = $region57
    $region56: #{tpu_custom_call.1} parent=1 // pred_region
      _
    $region57: #{tpu_custom_call.1} parent=1 // pred_fallthru
      _
    // Predicated region
    $region58: #{tpu_custom_call.1} parent=1 // pred_check
      _
    $region59: #{tpu_custom_call.1} parent=1 // pred_check_branch
      %75 = sbr.rel (0) target = $region61
    $region60: #{tpu_custom_call.1} parent=1 // pred_region
      _
    $region61: #{tpu_custom_call.1} parent=1 // pred_fallthru
      _
    // Predicated region
    $region62: #{tpu_custom_call.1} parent=1 // pred_check
      _
    $region63: #{tpu_custom_call.1} parent=1 // pred_check_branch
      %77 = sbr.rel (0) target = $region65
    $region64: #{tpu_custom_call.1} parent=1 // pred_region
      _
    $region65: #{tpu_custom_call.1} parent=1 // pred_fallthru
      _
    // Predicated region
    $region66: #{tpu_custom_call.1} parent=1 // pred_check
      _
    $region67: #{tpu_custom_call.1} parent=1 // pred_check_branch
      %79 = sbr.rel (0) target = $region69
    $region68: #{tpu_custom_call.1} parent=1 // pred_region
      _
    $region69: #{tpu_custom_call.1} parent=1 // pred_fallthru
      _
    // Predicated region
    $region70: #{tpu_custom_call.1} parent=1 // pred_check
      _
    $region71: #{tpu_custom_call.1} parent=1 // pred_check_branch
      %81 = sbr.rel (0) target = $region73
    $region72: #{tpu_custom_call.1} parent=1 // pred_region
      %82 = dma.done [#allocation4], 16384
    $region73: #{tpu_custom_call.1} parent=1 // pred_fallthru
      _
    // Predicated region
    $region74: #{tpu_custom_call.1} parent=1 // pred_check
      _
    $region75: #{tpu_custom_call.1} parent=1 // pred_check_branch
      %84 = sbr.rel (0) target = $region77
    $region76: #{tpu_custom_call.1} parent=1 // pred_region
      %85 = dma.done [#allocation7], 16384
    $region77: #{tpu_custom_call.1} parent=1 // pred_fallthru
      _
    %v87 = vld [vmem:[%s1] sm:$0xf]
    %v88 = vld [vmem:[%s2] sm:$0xff]
    %v89 = vld [vmem:[%s2 + $0x8] sm:$0xff]
    %v90 = vld [vmem:[%s2 + $0x10] sm:$0xff]
    %v91 = vld [vmem:[%s2 + $0x18] sm:$0xff]
    %v92 = vld [vmem:[%s2 + $0x20] sm:$0xff]
    %v93 = vld [vmem:[%s2 + $0x28] sm:$0xff]
    %v94 = vld [vmem:[%s2 + $0x30] sm:$0xff]
    %v95 = vld [vmem:[%s2 + $0x38] sm:$0xff]
    %v96 = vld [vmem:[%s2 + $0x40] sm:$0xff]
    %v97 = vld [vmem:[%s2 + $0x48] sm:$0xff]
    %v98 = vld [vmem:[%s2 + $0x50] sm:$0xff]
    %v99 = vld [vmem:[%s2 + $0x58] sm:$0xff]
    %v100 = vld [vmem:[%s2 + $0x60] sm:$0xff]
    %v101 = vld [vmem:[%s2 + $0x68] sm:$0xff]
    %v102 = vld [vmem:[%s2 + $0x70] sm:$0xff]
    %v103 = vld [vmem:[%s2 + $0x78] sm:$0xff]
    %v104 = vld [vmem:[%s3] sm:$0xf]
    %v106 = vlaneseq
    %v107 = vshrl.u32 %v106, 7
    %v108 = vsub.s32 0, %v107
    %v109 = vrot.slane %v104, %v108
    %v110 = vlaneseq
    %v111 = vshrl.u32 %v110, 7
    %v112 = vsub.s32 1, %v111
    %v113 = vrot.slane %v104, %v112
    %v114 = vlaneseq
    %v115 = vshrl.u32 %v114, 7
    %v116 = vsub.s32 2, %v115
    %v117 = vrot.slane %v104, %v116
    %v118 = vlaneseq
    %v119 = vshrl.u32 %v118, 7
    %v120 = vsub.s32 3, %v119
    %v121 = vrot.slane %v104, %v120
    %v142 = vunpack.c.l.b16 %v88
    %v143 = vunpack.c.h.b16 %v88
    %v144 = vunpack.c.l.b16 %v89
    %v145 = vunpack.c.h.b16 %v89
    %v146 = vunpack.c.l.b16 %v90
    %v147 = vunpack.c.h.b16 %v90
    %v148 = vunpack.c.l.b16 %v91
    %v149 = vunpack.c.h.b16 %v91
    %v150 = vunpack.c.l.b16 %v92
    %v151 = vunpack.c.h.b16 %v92
    %v152 = vunpack.c.l.b16 %v93
    %v153 = vunpack.c.h.b16 %v93
    %v154 = vunpack.c.l.b16 %v94
    %v155 = vunpack.c.h.b16 %v94
    %v156 = vunpack.c.l.b16 %v95
    %v157 = vunpack.c.h.b16 %v95
    %v158 = vunpack.c.l.b16 %v96
    %v159 = vunpack.c.h.b16 %v96
    %v160 = vunpack.c.l.b16 %v97
    %v161 = vunpack.c.h.b16 %v97
    %v162 = vunpack.c.l.b16 %v98
    %v163 = vunpack.c.h.b16 %v98
    %v164 = vunpack.c.l.b16 %v99
    %v165 = vunpack.c.h.b16 %v99
    %v166 = vunpack.c.l.b16 %v100
    %v167 = vunpack.c.h.b16 %v100
    %v168 = vunpack.c.l.b16 %v101
    %v169 = vunpack.c.h.b16 %v101
    %v170 = vunpack.c.l.b16 %v102
    %v171 = vunpack.c.h.b16 %v102
    %v172 = vunpack.c.l.b16 %v103
    %v173 = vunpack.c.h.b16 %v103
    %v174 = vpack.c.b16 %v146, %v142
    %v175 = vpack.c.b16 %v147, %v143
    %v176 = vpack.c.b16 %v148, %v144
    %v177 = vpack.c.b16 %v149, %v145
    %v178 = vpack.c.b16 %v154, %v150
    %v179 = vpack.c.b16 %v155, %v151
    %v180 = vpack.c.b16 %v156, %v152
    %v181 = vpack.c.b16 %v157, %v153
    %v182 = vpack.c.b16 %v162, %v158
    %v183 = vpack.c.b16 %v163, %v159
    %v184 = vpack.c.b16 %v164, %v160
    %v185 = vpack.c.b16 %v165, %v161
    %v186 = vpack.c.b16 %v170, %v166
    %v187 = vpack.c.b16 %v171, %v167
    %v188 = vpack.c.b16 %v172, %v168
    %v189 = vpack.c.b16 %v173, %v169
    %vm206 = vcmask 523264
    %v208 = vsel %vm206, %v87, 0
    %210 = vmatprep.subr.bf16.mxu0 %v175
    %211 = vmatpush1.bf16.msra.mxu0 %v174
    %212 = vmatprep.subr.bf16.mxu0 %v179
    %213 = vmatpush1.bf16.msra.mxu0 %v178
    %214 = vmatprep.subr.bf16.mxu0 %v183
    %215 = vmatpush1.bf16.msra.mxu0 %v182
    %216 = vmatprep.subr.bf16.mxu0 %v187
    %217 = vmatpush1.bf16.msra.mxu0 %v186
    %218 = vmatprep.subr.bf16.mxu0 0
    %219 = vmatpush1.bf16.msra.mxu0 0
    %220 = vmatprep.subr.bf16.mxu0 0
    %221 = vmatpush1.bf16.msra.mxu0 0
    %222 = vmatprep.subr.bf16.mxu0 0
    %223 = vmatpush1.bf16.msra.mxu0 0
    %224 = vmatprep.subr.bf16.mxu0 0
    %225 = vmatpush1.bf16.msra.mxu0 0
    %226 = vmatprep.subr.bf16.mxu0 0
    %227 = vmatpush1.bf16.msra.mxu0 0
    %228 = vmatprep.subr.bf16.mxu0 0
    %229 = vmatpush1.bf16.msra.mxu0 0
    %230 = vmatprep.subr.bf16.mxu0 0
    %231 = vmatpush1.bf16.msra.mxu0 0
    %232 = vmatprep.subr.bf16.mxu0 0
    %233 = vmatpush1.bf16.msra.mxu0 0
    %234 = vmatprep.subr.bf16.mxu0 0
    %235 = vmatpush1.bf16.msra.mxu0 0
    %236 = vmatprep.subr.bf16.mxu0 0
    %237 = vmatpush1.bf16.msra.mxu0 0
    %238 = vmatprep.subr.bf16.mxu0 0
    %239 = vmatpush1.bf16.msra.mxu0 0
    %240 = vmatprep.subr.bf16.mxu0 0
    %241 = vmatpush1.bf16.msra.mxu0 0
    %242 = vmatprep.mubr.bf16.mxu0 0
    %243 = vmatmul.mubr.bf16.gmra.mrb[0].mxu0 %v208
    %v244 = vpop.f32.mrb[0].mxu0
    %v245 = vadd.f32 %v109, %v244
    %v246 = vpop.f32.mrb[0].mxu0
    %v247 = vadd.f32 %v113, %v246
    %v248 = vpop.f32.mrb[0].mxu0
    %v249 = vpop.f32.mrb[0].mxu0
    %250 = vdwg.mxu0
    %251 = vmatprep.subr.bf16.mxu0 %v177
    %252 = vmatpush1.bf16.msra.mxu0 %v176
    %253 = vmatprep.subr.bf16.mxu0 %v181
    %254 = vmatpush1.bf16.msra.mxu0 %v180
    %255 = vmatprep.subr.bf16.mxu0 %v185
    %256 = vmatpush1.bf16.msra.mxu0 %v184
    %257 = vmatprep.subr.bf16.mxu0 %v189
    %258 = vmatpush1.bf16.msra.mxu0 %v188
    %259 = vmatprep.subr.bf16.mxu0 0
    %260 = vmatpush1.bf16.msra.mxu0 0
    %261 = vmatprep.subr.bf16.mxu0 0
    %262 = vmatpush1.bf16.msra.mxu0 0
    %263 = vmatprep.subr.bf16.mxu0 0
    %264 = vmatpush1.bf16.msra.mxu0 0
    %265 = vmatprep.subr.bf16.mxu0 0
    %266 = vmatpush1.bf16.msra.mxu0 0
    %267 = vmatprep.subr.bf16.mxu0 0
    %268 = vmatpush1.bf16.msra.mxu0 0
    %269 = vmatprep.subr.bf16.mxu0 0
    %270 = vmatpush1.bf16.msra.mxu0 0
    %271 = vmatprep.subr.bf16.mxu0 0
    %272 = vmatpush1.bf16.msra.mxu0 0
    %273 = vmatprep.subr.bf16.mxu0 0
    %274 = vmatpush1.bf16.msra.mxu0 0
    %275 = vmatprep.subr.bf16.mxu0 0
    %276 = vmatpush1.bf16.msra.mxu0 0
    %277 = vmatprep.subr.bf16.mxu0 0
    %278 = vmatpush1.bf16.msra.mxu0 0
    %279 = vmatprep.subr.bf16.mxu0 0
    %280 = vmatpush1.bf16.msra.mxu0 0
    %281 = vmatprep.subr.bf16.mxu0 0
    %282 = vmatpush1.bf16.msra.mxu0 0
    %283 = vmatprep.mubr.bf16.mxu0 0
    %284 = vmatmul.mubr.bf16.gmra.mrb[0].mxu0 %v208
    %v285 = vpop.f32.mrb[0].mxu0
    %v286 = vadd.f32 %v117, %v285
    %v287 = vpop.f32.mrb[0].mxu0
    %v288 = vadd.f32 %v121, %v287
    %v289 = vpop.f32.mrb[0].mxu0
    %v290 = vpop.f32.mrb[0].mxu0
    %291 = vdwg.mxu0
    %v292 = vmax.f32 %v245, 0.0
    %v293 = vmax.f32 %v247, 0.0
    %v294 = vmax.f32 %v286, 0.0
    %v295 = vmax.f32 %v288, 0.0
    %v296 = vpack.c.bf16 %v292, %v292
    %v297 = vpack.c.bf16 %v293, %v293
    %v298 = vpack.c.bf16 %v294, %v294
    %v299 = vpack.c.bf16 %v295, %v295
    %v300 = vld [vmem:[#allocation3] sm:$0xff]
    %v301 = vld [vmem:[#allocation3 + $0x8] sm:$0xff]
    %v302 = vld [vmem:[#allocation3 + $0x10] sm:$0xff]
    %v303 = vld [vmem:[#allocation3 + $0x18] sm:$0xff]
    %v304 = vld [vmem:[#allocation3 + $0x20] sm:$0xff]
    %v305 = vld [vmem:[#allocation3 + $0x28] sm:$0xff]
    %v306 = vld [vmem:[#allocation3 + $0x30] sm:$0xff]
    %v307 = vld [vmem:[#allocation3 + $0x38] sm:$0xff]
    %v308 = vld [vmem:[#allocation3 + $0x40] sm:$0xff]
    %v309 = vld [vmem:[#allocation3 + $0x48] sm:$0xff]
    %v310 = vld [vmem:[#allocation3 + $0x50] sm:$0xff]
    %v311 = vld [vmem:[#allocation3 + $0x58] sm:$0xff]
    %v312 = vld [vmem:[#allocation3 + $0x60] sm:$0xff]
    %v313 = vld [vmem:[#allocation3 + $0x68] sm:$0xff]
    %v314 = vld [vmem:[#allocation3 + $0x70] sm:$0xff]
    %v315 = vld [vmem:[#allocation3 + $0x78] sm:$0xff]
    %v316 = vld [vmem:[#allocation3 + $0x80] sm:$0xff]
    %v317 = vld [vmem:[#allocation3 + $0x88] sm:$0xff]
    %v318 = vld [vmem:[#allocation3 + $0x90] sm:$0xff]
    %v319 = vld [vmem:[#allocation3 + $0x98] sm:$0xff]
    %v320 = vld [vmem:[#allocation3 + $0xa0] sm:$0xff]
    %v321 = vld [vmem:[#allocation3 + $0xa8] sm:$0xff]
    %v322 = vld [vmem:[#allocation3 + $0xb0] sm:$0xff]
    %v323 = vld [vmem:[#allocation3 + $0xb8] sm:$0xff]
    %v324 = vld [vmem:[#allocation3 + $0xc0] sm:$0xff]
    %v325 = vld [vmem:[#allocation3 + $0xc8] sm:$0xff]
    %v326 = vld [vmem:[#allocation3 + $0xd0] sm:$0xff]
    %v327 = vld [vmem:[#allocation3 + $0xd8] sm:$0xff]
    %v328 = vld [vmem:[#allocation3 + $0xe0] sm:$0xff]
    %v329 = vld [vmem:[#allocation3 + $0xe8] sm:$0xff]
    %v330 = vld [vmem:[#allocation3 + $0xf0] sm:$0xff]
    %v331 = vld [vmem:[#allocation3 + $0xf8] sm:$0xff]
    %v332 = vld [vmem:[#allocation3 + $0x100] sm:$0xff]
    %v333 = vld [vmem:[#allocation3 + $0x108] sm:$0xff]
    %v334 = vld [vmem:[#allocation3 + $0x110] sm:$0xff]
    %v335 = vld [vmem:[#allocation3 + $0x118] sm:$0xff]
    %v336 = vld [vmem:[#allocation3 + $0x120] sm:$0xff]
    %v337 = vld [vmem:[#allocation3 + $0x128] sm:$0xff]
    %v338 = vld [vmem:[#allocation3 + $0x130] sm:$0xff]
    %v339 = vld [vmem:[#allocation3 + $0x138] sm:$0xff]
    %v340 = vld [vmem:[#allocation3 + $0x140] sm:$0xff]
    %v341 = vld [vmem:[#allocation3 + $0x148] sm:$0xff]
    %v342 = vld [vmem:[#allocation3 + $0x150] sm:$0xff]
    %v343 = vld [vmem:[#allocation3 + $0x158] sm:$0xff]
    %v344 = vld [vmem:[#allocation3 + $0x160] sm:$0xff]
    %v345 = vld [vmem:[#allocation3 + $0x168] sm:$0xff]
    %v346 = vld [vmem:[#allocation3 + $0x170] sm:$0xff]
    %v347 = vld [vmem:[#allocation3 + $0x178] sm:$0xff]
    %v348 = vld [vmem:[#allocation3 + $0x180] sm:$0xff]
    %v349 = vld [vmem:[#allocation3 + $0x188] sm:$0xff]
    %v350 = vld [vmem:[#allocation3 + $0x190] sm:$0xff]
    %v351 = vld [vmem:[#allocation3 + $0x198] sm:$0xff]
    %v352 = vld [vmem:[#allocation3 + $0x1a0] sm:$0xff]
    %v353 = vld [vmem:[#allocation3 + $0x1a8] sm:$0xff]
    %v354 = vld [vmem:[#allocation3 + $0x1b0] sm:$0xff]
    %v355 = vld [vmem:[#allocation3 + $0x1b8] sm:$0xff]
    %v356 = vld [vmem:[#allocation3 + $0x1c0] sm:$0xff]
    %v357 = vld [vmem:[#allocation3 + $0x1c8] sm:$0xff]
    %v358 = vld [vmem:[#allocation3 + $0x1d0] sm:$0xff]
    %v359 = vld [vmem:[#allocation3 + $0x1d8] sm:$0xff]
    %v360 = vld [vmem:[#allocation3 + $0x1e0] sm:$0xff]
    %v361 = vld [vmem:[#allocation3 + $0x1e8] sm:$0xff]
    %v362 = vld [vmem:[#allocation3 + $0x1f0] sm:$0xff]
    %v363 = vld [vmem:[#allocation3 + $0x1f8] sm:$0xff]
    %v364 = vld [vmem:[#allocation3 + $0x200] sm:$0xff]
    %v365 = vld [vmem:[#allocation3 + $0x208] sm:$0xff]
    %v366 = vld [vmem:[#allocation3 + $0x210] sm:$0xff]
    %v367 = vld [vmem:[#allocation3 + $0x218] sm:$0xff]
    %v368 = vld [vmem:[#allocation3 + $0x220] sm:$0xff]
    %v369 = vld [vmem:[#allocation3 + $0x228] sm:$0xff]
    %v370 = vld [vmem:[#allocation3 + $0x230] sm:$0xff]
    %v371 = vld [vmem:[#allocation3 + $0x238] sm:$0xff]
    %v372 = vld [vmem:[#allocation3 + $0x240] sm:$0xff]
    %v373 = vld [vmem:[#allocation3 + $0x248] sm:$0xff]
    %v374 = vld [vmem:[#allocation3 + $0x250] sm:$0xff]
    %v375 = vld [vmem:[#allocation3 + $0x258] sm:$0xff]
    %v376 = vld [vmem:[#allocation3 + $0x260] sm:$0xff]
    %v377 = vld [vmem:[#allocation3 + $0x268] sm:$0xff]
    %v378 = vld [vmem:[#allocation3 + $0x270] sm:$0xff]
    %v379 = vld [vmem:[#allocation3 + $0x278] sm:$0xff]
    %v380 = vld [vmem:[#allocation3 + $0x280] sm:$0xff]
    %v381 = vld [vmem:[#allocation3 + $0x288] sm:$0xff]
    %v382 = vld [vmem:[#allocation3 + $0x290] sm:$0xff]
    %v383 = vld [vmem:[#allocation3 + $0x298] sm:$0xff]
    %v384 = vld [vmem:[#allocation3 + $0x2a0] sm:$0xff]
    %v385 = vld [vmem:[#allocation3 + $0x2a8] sm:$0xff]
    %v386 = vld [vmem:[#allocation3 + $0x2b0] sm:$0xff]
    %v387 = vld [vmem:[#allocation3 + $0x2b8] sm:$0xff]
    %v388 = vld [vmem:[#allocation3 + $0x2c0] sm:$0xff]
    %v389 = vld [vmem:[#allocation3 + $0x2c8] sm:$0xff]
    %v390 = vld [vmem:[#allocation3 + $0x2d0] sm:$0xff]
    %v391 = vld [vmem:[#allocation3 + $0x2d8] sm:$0xff]
    %v392 = vld [vmem:[#allocation3 + $0x2e0] sm:$0xff]
    %v393 = vld [vmem:[#allocation3 + $0x2e8] sm:$0xff]
    %v394 = vld [vmem:[#allocation3 + $0x2f0] sm:$0xff]
    %v395 = vld [vmem:[#allocation3 + $0x2f8] sm:$0xff]
    %v396 = vld [vmem:[#allocation3 + $0x300] sm:$0xff]
    %v397 = vld [vmem:[#allocation3 + $0x308] sm:$0xff]
    %v398 = vld [vmem:[#allocation3 + $0x310] sm:$0xff]
    %v399 = vld [vmem:[#allocation3 + $0x318] sm:$0xff]
    %v400 = vld [vmem:[#allocation3 + $0x320] sm:$0xff]
    %v401 = vld [vmem:[#allocation3 + $0x328] sm:$0xff]
    %v402 = vld [vmem:[#allocation3 + $0x330] sm:$0xff]
    %v403 = vld [vmem:[#allocation3 + $0x338] sm:$0xff]
    %v404 = vld [vmem:[#allocation3 + $0x340] sm:$0xff]
    %v405 = vld [vmem:[#allocation3 + $0x348] sm:$0xff]
    %v406 = vld [vmem:[#allocation3 + $0x350] sm:$0xff]
    %v407 = vld [vmem:[#allocation3 + $0x358] sm:$0xff]
    %v408 = vld [vmem:[#allocation3 + $0x360] sm:$0xff]
    %v409 = vld [vmem:[#allocation3 + $0x368] sm:$0xff]
    %v410 = vld [vmem:[#allocation3 + $0x370] sm:$0xff]
    %v411 = vld [vmem:[#allocation3 + $0x378] sm:$0xff]
    %v412 = vld [vmem:[#allocation3 + $0x380] sm:$0xff]
    %v413 = vld [vmem:[#allocation3 + $0x388] sm:$0xff]
    %v414 = vld [vmem:[#allocation3 + $0x390] sm:$0xff]
    %v415 = vld [vmem:[#allocation3 + $0x398] sm:$0xff]
    %v416 = vld [vmem:[#allocation3 + $0x3a0] sm:$0xff]
    %v417 = vld [vmem:[#allocation3 + $0x3a8] sm:$0xff]
    %v418 = vld [vmem:[#allocation3 + $0x3b0] sm:$0xff]
    %v419 = vld [vmem:[#allocation3 + $0x3b8] sm:$0xff]
    %v420 = vld [vmem:[#allocation3 + $0x3c0] sm:$0xff]
    %v421 = vld [vmem:[#allocation3 + $0x3c8] sm:$0xff]
    %v422 = vld [vmem:[#allocation3 + $0x3d0] sm:$0xff]
    %v423 = vld [vmem:[#allocation3 + $0x3d8] sm:$0xff]
    %v424 = vld [vmem:[#allocation3 + $0x3e0] sm:$0xff]
    %v425 = vld [vmem:[#allocation3 + $0x3e8] sm:$0xff]
    %v426 = vld [vmem:[#allocation3 + $0x3f0] sm:$0xff]
    %v427 = vld [vmem:[#allocation3 + $0x3f8] sm:$0xff]
    %v428 = vld [vmem:[%s5] sm:$0xf]
    %v430 = vlaneseq
    %v431 = vshrl.u32 %v430, 7
    %v432 = vsub.s32 0, %v431
    %v433 = vrot.slane %v428, %v432
    %v434 = vlaneseq
    %v435 = vshrl.u32 %v434, 7
    %v436 = vsub.s32 1, %v435
    %v437 = vrot.slane %v428, %v436
    %v438 = vlaneseq
    %v439 = vshrl.u32 %v438, 7
    %v440 = vsub.s32 2, %v439
    %v441 = vrot.slane %v428, %v440
    %v442 = vlaneseq
    %v443 = vshrl.u32 %v442, 7
    %v444 = vsub.s32 3, %v443
    %v445 = vrot.slane %v428, %v444
    %v578 = vunpack.c.l.b16 %v300
    %v579 = vunpack.c.h.b16 %v300
    %v580 = vunpack.c.l.b16 %v301
    %v581 = vunpack.c.h.b16 %v301
    %v582 = vunpack.c.l.b16 %v302
    %v583 = vunpack.c.h.b16 %v302
    %v584 = vunpack.c.l.b16 %v303
    %v585 = vunpack.c.h.b16 %v303
    %v586 = vunpack.c.l.b16 %v304
    %v587 = vunpack.c.h.b16 %v304
    %v588 = vunpack.c.l.b16 %v305
    %v589 = vunpack.c.h.b16 %v305
    %v590 = vunpack.c.l.b16 %v306
    %v591 = vunpack.c.h.b16 %v306
    %v592 = vunpack.c.l.b16 %v307
    %v593 = vunpack.c.h.b16 %v307
    %v594 = vunpack.c.l.b16 %v308
    %v595 = vunpack.c.h.b16 %v308
    %v596 = vunpack.c.l.b16 %v309
    %v597 = vunpack.c.h.b16 %v309
    %v598 = vunpack.c.l.b16 %v310
    %v599 = vunpack.c.h.b16 %v310
    %v600 = vunpack.c.l.b16 %v311
    %v601 = vunpack.c.h.b16 %v311
    %v602 = vunpack.c.l.b16 %v312
    %v603 = vunpack.c.h.b16 %v312
    %v604 = vunpack.c.l.b16 %v313
    %v605 = vunpack.c.h.b16 %v313
    %v606 = vunpack.c.l.b16 %v314
    %v607 = vunpack.c.h.b16 %v314
    %v608 = vunpack.c.l.b16 %v315
    %v609 = vunpack.c.h.b16 %v315
    %v610 = vunpack.c.l.b16 %v316
    %v611 = vunpack.c.h.b16 %v316
    %v612 = vunpack.c.l.b16 %v317
    %v613 = vunpack.c.h.b16 %v317
    %v614 = vunpack.c.l.b16 %v318
    %v615 = vunpack.c.h.b16 %v318
    %v616 = vunpack.c.l.b16 %v319
    %v617 = vunpack.c.h.b16 %v319
    %v618 = vunpack.c.l.b16 %v320
    %v619 = vunpack.c.h.b16 %v320
    %v620 = vunpack.c.l.b16 %v321
    %v621 = vunpack.c.h.b16 %v321
    %v622 = vunpack.c.l.b16 %v322
    %v623 = vunpack.c.h.b16 %v322
    %v624 = vunpack.c.l.b16 %v323
    %v625 = vunpack.c.h.b16 %v323
    %v626 = vunpack.c.l.b16 %v324
    %v627 = vunpack.c.h.b16 %v324
    %v628 = vunpack.c.l.b16 %v325
    %v629 = vunpack.c.h.b16 %v325
    %v630 = vunpack.c.l.b16 %v326
    %v631 = vunpack.c.h.b16 %v326
    %v632 = vunpack.c.l.b16 %v327
    %v633 = vunpack.c.h.b16 %v327
    %v634 = vunpack.c.l.b16 %v328
    %v635 = vunpack.c.h.b16 %v328
    %v636 = vunpack.c.l.b16 %v329
    %v637 = vunpack.c.h.b16 %v329
    %v638 = vunpack.c.l.b16 %v330
    %v639 = vunpack.c.h.b16 %v330
    %v640 = vunpack.c.l.b16 %v331
    %v641 = vunpack.c.h.b16 %v331
    %v642 = vunpack.c.l.b16 %v332
    %v643 = vunpack.c.h.b16 %v332
    %v644 = vunpack.c.l.b16 %v333
    %v645 = vunpack.c.h.b16 %v333
    %v646 = vunpack.c.l.b16 %v334
    %v647 = vunpack.c.h.b16 %v334
    %v648 = vunpack.c.l.b16 %v335
    %v649 = vunpack.c.h.b16 %v335
    %v650 = vunpack.c.l.b16 %v336
    %v651 = vunpack.c.h.b16 %v336
    %v652 = vunpack.c.l.b16 %v337
    %v653 = vunpack.c.h.b16 %v337
    %v654 = vunpack.c.l.b16 %v338
    %v655 = vunpack.c.h.b16 %v338
    %v656 = vunpack.c.l.b16 %v339
    %v657 = vunpack.c.h.b16 %v339
    %v658 = vunpack.c.l.b16 %v340
    %v659 = vunpack.c.h.b16 %v340
    %v660 = vunpack.c.l.b16 %v341
    %v661 = vunpack.c.h.b16 %v341
    %v662 = vunpack.c.l.b16 %v342
    %v663 = vunpack.c.h.b16 %v342
    %v664 = vunpack.c.l.b16 %v343
    %v665 = vunpack.c.h.b16 %v343
    %v666 = vunpack.c.l.b16 %v344
    %v667 = vunpack.c.h.b16 %v344
    %v668 = vunpack.c.l.b16 %v345
    %v669 = vunpack.c.h.b16 %v345
    %v670 = vunpack.c.l.b16 %v346
    %v671 = vunpack.c.h.b16 %v346
    %v672 = vunpack.c.l.b16 %v347
    %v673 = vunpack.c.h.b16 %v347
    %v674 = vunpack.c.l.b16 %v348
    %v675 = vunpack.c.h.b16 %v348
    %v676 = vunpack.c.l.b16 %v349
    %v677 = vunpack.c.h.b16 %v349
    %v678 = vunpack.c.l.b16 %v350
    %v679 = vunpack.c.h.b16 %v350
    %v680 = vunpack.c.l.b16 %v351
    %v681 = vunpack.c.h.b16 %v351
    %v682 = vunpack.c.l.b16 %v352
    %v683 = vunpack.c.h.b16 %v352
    %v684 = vunpack.c.l.b16 %v353
    %v685 = vunpack.c.h.b16 %v353
    %v686 = vunpack.c.l.b16 %v354
    %v687 = vunpack.c.h.b16 %v354
    %v688 = vunpack.c.l.b16 %v355
    %v689 = vunpack.c.h.b16 %v355
    %v690 = vunpack.c.l.b16 %v356
    %v691 = vunpack.c.h.b16 %v356
    %v692 = vunpack.c.l.b16 %v357
    %v693 = vunpack.c.h.b16 %v357
    %v694 = vunpack.c.l.b16 %v358
    %v695 = vunpack.c.h.b16 %v358
    %v696 = vunpack.c.l.b16 %v359
    %v697 = vunpack.c.h.b16 %v359
    %v698 = vunpack.c.l.b16 %v360
    %v699 = vunpack.c.h.b16 %v360
    %v700 = vunpack.c.l.b16 %v361
    %v701 = vunpack.c.h.b16 %v361
    %v702 = vunpack.c.l.b16 %v362
    %v703 = vunpack.c.h.b16 %v362
    %v704 = vunpack.c.l.b16 %v363
    %v705 = vunpack.c.h.b16 %v363
    %v706 = vunpack.c.l.b16 %v364
    %v707 = vunpack.c.h.b16 %v364
    %v708 = vunpack.c.l.b16 %v365
    %v709 = vunpack.c.h.b16 %v365
    %v710 = vunpack.c.l.b16 %v366
    %v711 = vunpack.c.h.b16 %v366
    %v712 = vunpack.c.l.b16 %v367
    %v713 = vunpack.c.h.b16 %v367
    %v714 = vunpack.c.l.b16 %v368
    %v715 = vunpack.c.h.b16 %v368
    %v716 = vunpack.c.l.b16 %v369
    %v717 = vunpack.c.h.b16 %v369
    %v718 = vunpack.c.l.b16 %v370
    %v719 = vunpack.c.h.b16 %v370
    %v720 = vunpack.c.l.b16 %v371
    %v721 = vunpack.c.h.b16 %v371
    %v722 = vunpack.c.l.b16 %v372
    %v723 = vunpack.c.h.b16 %v372
    %v724 = vunpack.c.l.b16 %v373
    %v725 = vunpack.c.h.b16 %v373
    %v726 = vunpack.c.l.b16 %v374
    %v727 = vunpack.c.h.b16 %v374
    %v728 = vunpack.c.l.b16 %v375
    %v729 = vunpack.c.h.b16 %v375
    %v730 = vunpack.c.l.b16 %v376
    %v731 = vunpack.c.h.b16 %v376
    %v732 = vunpack.c.l.b16 %v377
    %v733 = vunpack.c.h.b16 %v377
    %v734 = vunpack.c.l.b16 %v378
    %v735 = vunpack.c.h.b16 %v378
    %v736 = vunpack.c.l.b16 %v379
    %v737 = vunpack.c.h.b16 %v379
    %v738 = vunpack.c.l.b16 %v380
    %v739 = vunpack.c.h.b16 %v380
    %v740 = vunpack.c.l.b16 %v381
    %v741 = vunpack.c.h.b16 %v381
    %v742 = vunpack.c.l.b16 %v382
    %v743 = vunpack.c.h.b16 %v382
    %v744 = vunpack.c.l.b16 %v383
    %v745 = vunpack.c.h.b16 %v383
    %v746 = vunpack.c.l.b16 %v384
    %v747 = vunpack.c.h.b16 %v384
    %v748 = vunpack.c.l.b16 %v385
    %v749 = vunpack.c.h.b16 %v385
    %v750 = vunpack.c.l.b16 %v386
    %v751 = vunpack.c.h.b16 %v386
    %v752 = vunpack.c.l.b16 %v387
    %v753 = vunpack.c.h.b16 %v387
    %v754 = vunpack.c.l.b16 %v388
    %v755 = vunpack.c.h.b16 %v388
    %v756 = vunpack.c.l.b16 %v389
    %v757 = vunpack.c.h.b16 %v389
    %v758 = vunpack.c.l.b16 %v390
    %v759 = vunpack.c.h.b16 %v390
    %v760 = vunpack.c.l.b16 %v391
    %v761 = vunpack.c.h.b16 %v391
    %v762 = vunpack.c.l.b16 %v392
    %v763 = vunpack.c.h.b16 %v392
    %v764 = vunpack.c.l.b16 %v393
    %v765 = vunpack.c.h.b16 %v393
    %v766 = vunpack.c.l.b16 %v394
    %v767 = vunpack.c.h.b16 %v394
    %v768 = vunpack.c.l.b16 %v395
    %v769 = vunpack.c.h.b16 %v395
    %v770 = vunpack.c.l.b16 %v396
    %v771 = vunpack.c.h.b16 %v396
    %v772 = vunpack.c.l.b16 %v397
    %v773 = vunpack.c.h.b16 %v397
    %v774 = vunpack.c.l.b16 %v398
    %v775 = vunpack.c.h.b16 %v398
    %v776 = vunpack.c.l.b16 %v399
    %v777 = vunpack.c.h.b16 %v399
    %v778 = vunpack.c.l.b16 %v400
    %v779 = vunpack.c.h.b16 %v400
    %v780 = vunpack.c.l.b16 %v401
    %v781 = vunpack.c.h.b16 %v401
    %v782 = vunpack.c.l.b16 %v402
    %v783 = vunpack.c.h.b16 %v402
    %v784 = vunpack.c.l.b16 %v403
    %v785 = vunpack.c.h.b16 %v403
    %v786 = vunpack.c.l.b16 %v404
    %v787 = vunpack.c.h.b16 %v404
    %v788 = vunpack.c.l.b16 %v405
    %v789 = vunpack.c.h.b16 %v405
    %v790 = vunpack.c.l.b16 %v406
    %v791 = vunpack.c.h.b16 %v406
    %v792 = vunpack.c.l.b16 %v407
    %v793 = vunpack.c.h.b16 %v407
    %v794 = vunpack.c.l.b16 %v408
    %v795 = vunpack.c.h.b16 %v408
    %v796 = vunpack.c.l.b16 %v409
    %v797 = vunpack.c.h.b16 %v409
    %v798 = vunpack.c.l.b16 %v410
    %v799 = vunpack.c.h.b16 %v410
    %v800 = vunpack.c.l.b16 %v411
    %v801 = vunpack.c.h.b16 %v411
    %v802 = vunpack.c.l.b16 %v412
    %v803 = vunpack.c.h.b16 %v412
    %v804 = vunpack.c.l.b16 %v413
    %v805 = vunpack.c.h.b16 %v413
    %v806 = vunpack.c.l.b16 %v414
    %v807 = vunpack.c.h.b16 %v414
    %v808 = vunpack.c.l.b16 %v415
    %v809 = vunpack.c.h.b16 %v415
    %v810 = vunpack.c.l.b16 %v416
    %v811 = vunpack.c.h.b16 %v416
    %v812 = vunpack.c.l.b16 %v417
    %v813 = vunpack.c.h.b16 %v417
    %v814 = vunpack.c.l.b16 %v418
    %v815 = vunpack.c.h.b16 %v418
    %v816 = vunpack.c.l.b16 %v419
    %v817 = vunpack.c.h.b16 %v419
    %v818 = vunpack.c.l.b16 %v420
    %v819 = vunpack.c.h.b16 %v420
    %v820 = vunpack.c.l.b16 %v421
    %v821 = vunpack.c.h.b16 %v421
    %v822 = vunpack.c.l.b16 %v422
    %v823 = vunpack.c.h.b16 %v422
    %v824 = vunpack.c.l.b16 %v423
    %v825 = vunpack.c.h.b16 %v423
    %v826 = vunpack.c.l.b16 %v424
    %v827 = vunpack.c.h.b16 %v424
    %v828 = vunpack.c.l.b16 %v425
    %v829 = vunpack.c.h.b16 %v425
    %v830 = vunpack.c.l.b16 %v426
    %v831 = vunpack.c.h.b16 %v426
    %v832 = vunpack.c.l.b16 %v427
    %v833 = vunpack.c.h.b16 %v427
    %v834 = vpack.c.b16 %v582, %v578
    %v835 = vpack.c.b16 %v583, %v579
    %v836 = vpack.c.b16 %v584, %v580
    %v837 = vpack.c.b16 %v585, %v581
    %v838 = vpack.c.b16 %v590, %v586
    %v839 = vpack.c.b16 %v591, %v587
    %v840 = vpack.c.b16 %v592, %v588
    %v841 = vpack.c.b16 %v593, %v589
    %v842 = vpack.c.b16 %v598, %v594
    %v843 = vpack.c.b16 %v599, %v595
    %v844 = vpack.c.b16 %v600, %v596
    %v845 = vpack.c.b16 %v601, %v597
    %v846 = vpack.c.b16 %v606, %v602
    %v847 = vpack.c.b16 %v607, %v603
    %v848 = vpack.c.b16 %v608, %v604
    %v849 = vpack.c.b16 %v609, %v605
    %v850 = vpack.c.b16 %v614, %v610
    %v851 = vpack.c.b16 %v615, %v611
    %v852 = vpack.c.b16 %v616, %v612
    %v853 = vpack.c.b16 %v617, %v613
    %v854 = vpack.c.b16 %v622, %v618
    %v855 = vpack.c.b16 %v623, %v619
    %v856 = vpack.c.b16 %v624, %v620
    %v857 = vpack.c.b16 %v625, %v621
    %v858 = vpack.c.b16 %v630, %v626
    %v859 = vpack.c.b16 %v631, %v627
    %v860 = vpack.c.b16 %v632, %v628
    %v861 = vpack.c.b16 %v633, %v629
    %v862 = vpack.c.b16 %v638, %v634
    %v863 = vpack.c.b16 %v639, %v635
    %v864 = vpack.c.b16 %v640, %v636
    %v865 = vpack.c.b16 %v641, %v637
    %v866 = vpack.c.b16 %v646, %v642
    %v867 = vpack.c.b16 %v647, %v643
    %v868 = vpack.c.b16 %v648, %v644
    %v869 = vpack.c.b16 %v649, %v645
    %v870 = vpack.c.b16 %v654, %v650
    %v871 = vpack.c.b16 %v655, %v651
    %v872 = vpack.c.b16 %v656, %v652
    %v873 = vpack.c.b16 %v657, %v653
    %v874 = vpack.c.b16 %v662, %v658
    %v875 = vpack.c.b16 %v663, %v659
    %v876 = vpack.c.b16 %v664, %v660
    %v877 = vpack.c.b16 %v665, %v661
    %v878 = vpack.c.b16 %v670, %v666
    %v879 = vpack.c.b16 %v671, %v667
    %v880 = vpack.c.b16 %v672, %v668
    %v881 = vpack.c.b16 %v673, %v669
    %v882 = vpack.c.b16 %v678, %v674
    %v883 = vpack.c.b16 %v679, %v675
    %v884 = vpack.c.b16 %v680, %v676
    %v885 = vpack.c.b16 %v681, %v677
    %v886 = vpack.c.b16 %v686, %v682
    %v887 = vpack.c.b16 %v687, %v683
    %v888 = vpack.c.b16 %v688, %v684
    %v889 = vpack.c.b16 %v689, %v685
    %v890 = vpack.c.b16 %v694, %v690
    %v891 = vpack.c.b16 %v695, %v691
    %v892 = vpack.c.b16 %v696, %v692
    %v893 = vpack.c.b16 %v697, %v693
    %v894 = vpack.c.b16 %v702, %v698
    %v895 = vpack.c.b16 %v703, %v699
    %v896 = vpack.c.b16 %v704, %v700
    %v897 = vpack.c.b16 %v705, %v701
    %v898 = vpack.c.b16 %v710, %v706
    %v899 = vpack.c.b16 %v711, %v707
    %v900 = vpack.c.b16 %v712, %v708
    %v901 = vpack.c.b16 %v713, %v709
    %v902 = vpack.c.b16 %v718, %v714
    %v903 = vpack.c.b16 %v719, %v715
    %v904 = vpack.c.b16 %v720, %v716
    %v905 = vpack.c.b16 %v721, %v717
    %v906 = vpack.c.b16 %v726, %v722
    %v907 = vpack.c.b16 %v727, %v723
    %v908 = vpack.c.b16 %v728, %v724
    %v909 = vpack.c.b16 %v729, %v725
    %v910 = vpack.c.b16 %v734, %v730
    %v911 = vpack.c.b16 %v735, %v731
    %v912 = vpack.c.b16 %v736, %v732
    %v913 = vpack.c.b16 %v737, %v733
    %v914 = vpack.c.b16 %v742, %v738
    %v915 = vpack.c.b16 %v743, %v739
    %v916 = vpack.c.b16 %v744, %v740
    %v917 = vpack.c.b16 %v745, %v741
    %v918 = vpack.c.b16 %v750, %v746
    %v919 = vpack.c.b16 %v751, %v747
    %v920 = vpack.c.b16 %v752, %v748
    %v921 = vpack.c.b16 %v753, %v749
    %v922 = vpack.c.b16 %v758, %v754
    %v923 = vpack.c.b16 %v759, %v755
    %v924 = vpack.c.b16 %v760, %v756
    %v925 = vpack.c.b16 %v761, %v757
    %v926 = vpack.c.b16 %v766, %v762
    %v927 = vpack.c.b16 %v767, %v763
    %v928 = vpack.c.b16 %v768, %v764
    %v929 = vpack.c.b16 %v769, %v765
    %v930 = vpack.c.b16 %v774, %v770
    %v931 = vpack.c.b16 %v775, %v771
    %v932 = vpack.c.b16 %v776, %v772
    %v933 = vpack.c.b16 %v777, %v773
    %v934 = vpack.c.b16 %v782, %v778
    %v935 = vpack.c.b16 %v783, %v779
    %v936 = vpack.c.b16 %v784, %v780
    %v937 = vpack.c.b16 %v785, %v781
    %v938 = vpack.c.b16 %v790, %v786
    %v939 = vpack.c.b16 %v791, %v787
    %v940 = vpack.c.b16 %v792, %v788
    %v941 = vpack.c.b16 %v793, %v789
    %v942 = vpack.c.b16 %v798, %v794
    %v943 = vpack.c.b16 %v799, %v795
    %v944 = vpack.c.b16 %v800, %v796
    %v945 = vpack.c.b16 %v801, %v797
    %v946 = vpack.c.b16 %v806, %v802
    %v947 = vpack.c.b16 %v807, %v803
    %v948 = vpack.c.b16 %v808, %v804
    %v949 = vpack.c.b16 %v809, %v805
    %v950 = vpack.c.b16 %v814, %v810
    %v951 = vpack.c.b16 %v815, %v811
    %v952 = vpack.c.b16 %v816, %v812
    %v953 = vpack.c.b16 %v817, %v813
    %v954 = vpack.c.b16 %v822, %v818
    %v955 = vpack.c.b16 %v823, %v819
    %v956 = vpack.c.b16 %v824, %v820
    %v957 = vpack.c.b16 %v825, %v821
    %v958 = vpack.c.b16 %v830, %v826
    %v959 = vpack.c.b16 %v831, %v827
    %v960 = vpack.c.b16 %v832, %v828
    %v961 = vpack.c.b16 %v833, %v829
    %1090 = vmatprep.subr.bf16.mxu0 %v835
    %1091 = vmatpush1.bf16.msra.mxu0 %v834
    %1092 = vmatprep.subr.bf16.mxu0 %v839
    %1093 = vmatpush1.bf16.msra.mxu0 %v838
    %1094 = vmatprep.subr.bf16.mxu0 %v843
    %1095 = vmatpush1.bf16.msra.mxu0 %v842
    %1096 = vmatprep.subr.bf16.mxu0 %v847
    %1097 = vmatpush1.bf16.msra.mxu0 %v846
    %1098 = vmatprep.subr.bf16.mxu0 %v851
    %1099 = vmatpush1.bf16.msra.mxu0 %v850
    %1100 = vmatprep.subr.bf16.mxu0 %v855
    %1101 = vmatpush1.bf16.msra.mxu0 %v854
    %1102 = vmatprep.subr.bf16.mxu0 %v859
    %1103 = vmatpush1.bf16.msra.mxu0 %v858
    %1104 = vmatprep.subr.bf16.mxu0 %v863
    %1105 = vmatpush1.bf16.msra.mxu0 %v862
    %1106 = vmatprep.subr.bf16.mxu0 %v867
    %1107 = vmatpush1.bf16.msra.mxu0 %v866
    %1108 = vmatprep.subr.bf16.mxu0 %v871
    %1109 = vmatpush1.bf16.msra.mxu0 %v870
    %1110 = vmatprep.subr.bf16.mxu0 %v875
    %1111 = vmatpush1.bf16.msra.mxu0 %v874
    %1112 = vmatprep.subr.bf16.mxu0 %v879
    %1113 = vmatpush1.bf16.msra.mxu0 %v878
    %1114 = vmatprep.subr.bf16.mxu0 %v883
    %1115 = vmatpush1.bf16.msra.mxu0 %v882
    %1116 = vmatprep.subr.bf16.mxu0 %v887
    %1117 = vmatpush1.bf16.msra.mxu0 %v886
    %1118 = vmatprep.subr.bf16.mxu0 %v891
    %1119 = vmatpush1.bf16.msra.mxu0 %v890
    %1120 = vmatprep.subr.bf16.mxu0 %v895
    %1121 = vmatpush1.bf16.msra.mxu0 %v894
    %1122 = vmatprep.mubr.bf16.mxu0 %v297
    %1123 = vmatmul.mubr.bf16.gmra.mrb[0].mxu0 %v296
    %v1124 = vpop.f32.mrb[0].mxu0
    %v1125 = vadd.f32 %v433, %v1124
    %v1126 = vpop.f32.mrb[0].mxu0
    %v1127 = vadd.f32 %v437, %v1126
    %v1128 = vpop.f32.mrb[0].mxu0
    %v1129 = vpop.f32.mrb[0].mxu0
    %1130 = vdwg.mxu0
    %1131 = vmatprep.subr.bf16.mxu0 %v899
    %1132 = vmatpush1.bf16.msra.mxu0 %v898
    %1133 = vmatprep.subr.bf16.mxu0 %v903
    %1134 = vmatpush1.bf16.msra.mxu0 %v902
    %1135 = vmatprep.subr.bf16.mxu0 %v907
    %1136 = vmatpush1.bf16.msra.mxu0 %v906
    %1137 = vmatprep.subr.bf16.mxu0 %v911
    %1138 = vmatpush1.bf16.msra.mxu0 %v910
    %1139 = vmatprep.subr.bf16.mxu0 %v915
    %1140 = vmatpush1.bf16.msra.mxu0 %v914
    %1141 = vmatprep.subr.bf16.mxu0 %v919
    %1142 = vmatpush1.bf16.msra.mxu0 %v918
    %1143 = vmatprep.subr.bf16.mxu0 %v923
    %1144 = vmatpush1.bf16.msra.mxu0 %v922
    %1145 = vmatprep.subr.bf16.mxu0 %v927
    %1146 = vmatpush1.bf16.msra.mxu0 %v926
    %1147 = vmatprep.subr.bf16.mxu0 %v931
    %1148 = vmatpush1.bf16.msra.mxu0 %v930
    %1149 = vmatprep.subr.bf16.mxu0 %v935
    %1150 = vmatpush1.bf16.msra.mxu0 %v934
    %1151 = vmatprep.subr.bf16.mxu0 %v939
    %1152 = vmatpush1.bf16.msra.mxu0 %v938
    %1153 = vmatprep.subr.bf16.mxu0 %v943
    %1154 = vmatpush1.bf16.msra.mxu0 %v942
    %1155 = vmatprep.subr.bf16.mxu0 %v947
    %1156 = vmatpush1.bf16.msra.mxu0 %v946
    %1157 = vmatprep.subr.bf16.mxu0 %v951
    %1158 = vmatpush1.bf16.msra.mxu0 %v950
    %1159 = vmatprep.subr.bf16.mxu0 %v955
    %1160 = vmatpush1.bf16.msra.mxu0 %v954
    %1161 = vmatprep.subr.bf16.mxu0 %v959
    %1162 = vmatpush1.bf16.msra.mxu0 %v958
    %1163 = vmatprep.mubr.bf16.mxu0 %v299
    %1164 = vmatmul.mubr.bf16.gmra.mrb[0].mxu0 %v298
    %v1165 = vpop.f32.mrb[0].mxu0
    %v1166 = vadd.f32 %v1125, %v1165
    %v1167 = vpop.f32.mrb[0].mxu0
    %v1168 = vadd.f32 %v1127, %v1167
    %v1169 = vpop.f32.mrb[0].mxu0
    %v1170 = vpop.f32.mrb[0].mxu0
    %1171 = vdwg.mxu0
    %1172 = vmatprep.subr.bf16.mxu0 %v837
    %1173 = vmatpush1.bf16.msra.mxu0 %v836
    %1174 = vmatprep.subr.bf16.mxu0 %v841
    %1175 = vmatpush1.bf16.msra.mxu0 %v840
    %1176 = vmatprep.subr.bf16.mxu0 %v845
    %1177 = vmatpush1.bf16.msra.mxu0 %v844
    %1178 = vmatprep.subr.bf16.mxu0 %v849
    %1179 = vmatpush1.bf16.msra.mxu0 %v848
    %1180 = vmatprep.subr.bf16.mxu0 %v853
    %1181 = vmatpush1.bf16.msra.mxu0 %v852
    %1182 = vmatprep.subr.bf16.mxu0 %v857
    %1183 = vmatpush1.bf16.msra.mxu0 %v856
    %1184 = vmatprep.subr.bf16.mxu0 %v861
    %1185 = vmatpush1.bf16.msra.mxu0 %v860
    %1186 = vmatprep.subr.bf16.mxu0 %v865
    %1187 = vmatpush1.bf16.msra.mxu0 %v864
    %1188 = vmatprep.subr.bf16.mxu0 %v869
    %1189 = vmatpush1.bf16.msra.mxu0 %v868
    %1190 = vmatprep.subr.bf16.mxu0 %v873
    %1191 = vmatpush1.bf16.msra.mxu0 %v872
    %1192 = vmatprep.subr.bf16.mxu0 %v877
    %1193 = vmatpush1.bf16.msra.mxu0 %v876
    %1194 = vmatprep.subr.bf16.mxu0 %v881
    %1195 = vmatpush1.bf16.msra.mxu0 %v880
    %1196 = vmatprep.subr.bf16.mxu0 %v885
    %1197 = vmatpush1.bf16.msra.mxu0 %v884
    %1198 = vmatprep.subr.bf16.mxu0 %v889
    %1199 = vmatpush1.bf16.msra.mxu0 %v888
    %1200 = vmatprep.subr.bf16.mxu0 %v893
    %1201 = vmatpush1.bf16.msra.mxu0 %v892
    %1202 = vmatprep.subr.bf16.mxu0 %v897
    %1203 = vmatpush1.bf16.msra.mxu0 %v896
    %1204 = vmatprep.mubr.bf16.mxu0 %v297
    %1205 = vmatmul.mubr.bf16.gmra.mrb[0].mxu0 %v296
    %v1206 = vpop.f32.mrb[0].mxu0
    %v1207 = vadd.f32 %v441, %v1206
    %v1208 = vpop.f32.mrb[0].mxu0
    %v1209 = vadd.f32 %v445, %v1208
    %v1210 = vpop.f32.mrb[0].mxu0
    %v1211 = vpop.f32.mrb[0].mxu0
    %1212 = vdwg.mxu0
    %1213 = vmatprep.subr.bf16.mxu0 %v901
    %1214 = vmatpush1.bf16.msra.mxu0 %v900
    %1215 = vmatprep.subr.bf16.mxu0 %v905
    %1216 = vmatpush1.bf16.msra.mxu0 %v904
    %1217 = vmatprep.subr.bf16.mxu0 %v909
    %1218 = vmatpush1.bf16.msra.mxu0 %v908
    %1219 = vmatprep.subr.bf16.mxu0 %v913
    %1220 = vmatpush1.bf16.msra.mxu0 %v912
    %1221 = vmatprep.subr.bf16.mxu0 %v917
    %1222 = vmatpush1.bf16.msra.mxu0 %v916
    %1223 = vmatprep.subr.bf16.mxu0 %v921
    %1224 = vmatpush1.bf16.msra.mxu0 %v920
    %1225 = vmatprep.subr.bf16.mxu0 %v925
    %1226 = vmatpush1.bf16.msra.mxu0 %v924
    %1227 = vmatprep.subr.bf16.mxu0 %v929
    %1228 = vmatpush1.bf16.msra.mxu0 %v928
    %1229 = vmatprep.subr.bf16.mxu0 %v933
    %1230 = vmatpush1.bf16.msra.mxu0 %v932
    %1231 = vmatprep.subr.bf16.mxu0 %v937
    %1232 = vmatpush1.bf16.msra.mxu0 %v936
    %1233 = vmatprep.subr.bf16.mxu0 %v941
    %1234 = vmatpush1.bf16.msra.mxu0 %v940
    %1235 = vmatprep.subr.bf16.mxu0 %v945
    %1236 = vmatpush1.bf16.msra.mxu0 %v944
    %1237 = vmatprep.subr.bf16.mxu0 %v949
    %1238 = vmatpush1.bf16.msra.mxu0 %v948
    %1239 = vmatprep.subr.bf16.mxu0 %v953
    %1240 = vmatpush1.bf16.msra.mxu0 %v952
    %1241 = vmatprep.subr.bf16.mxu0 %v957
    %1242 = vmatpush1.bf16.msra.mxu0 %v956
    %1243 = vmatprep.subr.bf16.mxu0 %v961
    %1244 = vmatpush1.bf16.msra.mxu0 %v960
    %1245 = vmatprep.mubr.bf16.mxu0 %v299
    %1246 = vmatmul.mubr.bf16.gmra.mrb[0].mxu0 %v298
    %v1247 = vpop.f32.mrb[0].mxu0
    %v1248 = vadd.f32 %v1207, %v1247
    %v1249 = vpop.f32.mrb[0].mxu0
    %v1250 = vadd.f32 %v1209, %v1249
    %v1251 = vpop.f32.mrb[0].mxu0
    %v1252 = vpop.f32.mrb[0].mxu0
    %1253 = vdwg.mxu0
    %v1254 = vmax.f32 %v1166, 0.0
    %v1255 = vmax.f32 %v1168, 0.0
    %v1256 = vmax.f32 %v1248, 0.0
    %v1257 = vmax.f32 %v1250, 0.0
    %v1258 = vpack.c.bf16 %v1254, %v1254
    %v1259 = vpack.c.bf16 %v1255, %v1255
    %v1260 = vpack.c.bf16 %v1256, %v1256
    %v1261 = vpack.c.bf16 %v1257, %v1257
    %v1262 = vld [vmem:[%s6] sm:$0xf]
    %v1263 = vld [vmem:[%s6 + $0x4] sm:$0xf]
    %v1264 = vld [vmem:[%s6 + $0x8] sm:$0xf]
    %v1265 = vld [vmem:[%s6 + $0xc] sm:$0xf]
    %v1266 = vld [vmem:[%s6 + $0x10] sm:$0xf]
    %v1267 = vld [vmem:[%s6 + $0x14] sm:$0xf]
    %v1268 = vld [vmem:[%s6 + $0x18] sm:$0xf]
    %v1269 = vld [vmem:[%s6 + $0x1c] sm:$0xf]
    %v1270 = vld [vmem:[%s6 + $0x20] sm:$0xf]
    %v1271 = vld [vmem:[%s6 + $0x24] sm:$0xf]
    %v1272 = vld [vmem:[%s6 + $0x28] sm:$0xf]
    %v1273 = vld [vmem:[%s6 + $0x2c] sm:$0xf]
    %v1274 = vld [vmem:[%s6 + $0x30] sm:$0xf]
    %v1275 = vld [vmem:[%s6 + $0x34] sm:$0xf]
    %v1276 = vld [vmem:[%s6 + $0x38] sm:$0xf]
    %v1277 = vld [vmem:[%s6 + $0x3c] sm:$0xf]
    %v1278 = vld [vmem:[%s6 + $0x40] sm:$0xf]
    %v1279 = vld [vmem:[%s6 + $0x44] sm:$0xf]
    %v1280 = vld [vmem:[%s6 + $0x48] sm:$0xf]
    %v1281 = vld [vmem:[%s6 + $0x4c] sm:$0xf]
    %v1282 = vld [vmem:[%s6 + $0x50] sm:$0xf]
    %v1283 = vld [vmem:[%s6 + $0x54] sm:$0xf]
    %v1284 = vld [vmem:[%s6 + $0x58] sm:$0xf]
    %v1285 = vld [vmem:[%s6 + $0x5c] sm:$0xf]
    %v1286 = vld [vmem:[%s6 + $0x60] sm:$0xf]
    %v1287 = vld [vmem:[%s6 + $0x64] sm:$0xf]
    %v1288 = vld [vmem:[%s6 + $0x68] sm:$0xf]
    %v1289 = vld [vmem:[%s6 + $0x6c] sm:$0xf]
    %v1290 = vld [vmem:[%s6 + $0x70] sm:$0xf]
    %v1291 = vld [vmem:[%s6 + $0x74] sm:$0xf]
    %v1292 = vld [vmem:[%s6 + $0x78] sm:$0xf]
    %v1293 = vld [vmem:[%s6 + $0x7c] sm:$0xf]
    %v1294 = vld [vmem:[%s6 + $0x80] sm:$0xf]
    %v1295 = vld [vmem:[%s6 + $0x84] sm:$0xf]
    %v1296 = vld [vmem:[%s6 + $0x88] sm:$0xf]
    %v1297 = vld [vmem:[%s6 + $0x8c] sm:$0xf]
    %v1298 = vld [vmem:[%s6 + $0x90] sm:$0xf]
    %v1299 = vld [vmem:[%s6 + $0x94] sm:$0xf]
    %v1300 = vld [vmem:[%s6 + $0x98] sm:$0xf]
    %v1301 = vld [vmem:[%s6 + $0x9c] sm:$0xf]
    %v1302 = vld [vmem:[%s6 + $0xa0] sm:$0xf]
    %v1303 = vld [vmem:[%s6 + $0xa4] sm:$0xf]
    %v1304 = vld [vmem:[%s6 + $0xa8] sm:$0xf]
    %v1305 = vld [vmem:[%s6 + $0xac] sm:$0xf]
    %v1306 = vld [vmem:[%s6 + $0xb0] sm:$0xf]
    %v1307 = vld [vmem:[%s6 + $0xb4] sm:$0xf]
    %v1308 = vld [vmem:[%s6 + $0xb8] sm:$0xf]
    %v1309 = vld [vmem:[%s6 + $0xbc] sm:$0xf]
    %v1310 = vld [vmem:[%s6 + $0xc0] sm:$0xf]
    %v1311 = vld [vmem:[%s6 + $0xc4] sm:$0xf]
    %v1312 = vld [vmem:[%s6 + $0xc8] sm:$0xf]
    %v1313 = vld [vmem:[%s6 + $0xcc] sm:$0xf]
    %v1314 = vld [vmem:[%s6 + $0xd0] sm:$0xf]
    %v1315 = vld [vmem:[%s6 + $0xd4] sm:$0xf]
    %v1316 = vld [vmem:[%s6 + $0xd8] sm:$0xf]
    %v1317 = vld [vmem:[%s6 + $0xdc] sm:$0xf]
    %v1318 = vld [vmem:[%s6 + $0xe0] sm:$0xf]
    %v1319 = vld [vmem:[%s6 + $0xe4] sm:$0xf]
    %v1320 = vld [vmem:[%s6 + $0xe8] sm:$0xf]
    %v1321 = vld [vmem:[%s6 + $0xec] sm:$0xf]
    %v1322 = vld [vmem:[%s6 + $0xf0] sm:$0xf]
    %v1323 = vld [vmem:[%s6 + $0xf4] sm:$0xf]
    %v1324 = vld [vmem:[%s6 + $0xf8] sm:$0xf]
    %v1325 = vld [vmem:[%s6 + $0xfc] sm:$0xf]
    %v1326 = vld [vmem:[%s7] sm:$0x1]
    %v1328 = vlaneseq
    %v1329 = vshrl.u32 %v1328, 7
    %v1330 = vsub.s32 0, %v1329
    %v1331 = vrot.slane %v1326, %v1330
    %v1397 = vunpack.c.l.b16 %v1262
    %v1398 = vunpack.c.l.b16 %v1263
    %v1399 = vunpack.c.l.b16 %v1264
    %v1400 = vunpack.c.l.b16 %v1265
    %v1401 = vunpack.c.l.b16 %v1266
    %v1402 = vunpack.c.l.b16 %v1267
    %v1403 = vunpack.c.l.b16 %v1268
    %v1404 = vunpack.c.l.b16 %v1269
    %v1405 = vunpack.c.l.b16 %v1270
    %v1406 = vunpack.c.l.b16 %v1271
    %v1407 = vunpack.c.l.b16 %v1272
    %v1408 = vunpack.c.l.b16 %v1273
    %v1409 = vunpack.c.l.b16 %v1274
    %v1410 = vunpack.c.l.b16 %v1275
    %v1411 = vunpack.c.l.b16 %v1276
    %v1412 = vunpack.c.l.b16 %v1277
    %v1413 = vunpack.c.l.b16 %v1278
    %v1414 = vunpack.c.l.b16 %v1279
    %v1415 = vunpack.c.l.b16 %v1280
    %v1416 = vunpack.c.l.b16 %v1281
    %v1417 = vunpack.c.l.b16 %v1282
    %v1418 = vunpack.c.l.b16 %v1283
    %v1419 = vunpack.c.l.b16 %v1284
    %v1420 = vunpack.c.l.b16 %v1285
    %v1421 = vunpack.c.l.b16 %v1286
    %v1422 = vunpack.c.l.b16 %v1287
    %v1423 = vunpack.c.l.b16 %v1288
    %v1424 = vunpack.c.l.b16 %v1289
    %v1425 = vunpack.c.l.b16 %v1290
    %v1426 = vunpack.c.l.b16 %v1291
    %v1427 = vunpack.c.l.b16 %v1292
    %v1428 = vunpack.c.l.b16 %v1293
    %v1429 = vunpack.c.l.b16 %v1294
    %v1430 = vunpack.c.l.b16 %v1295
    %v1431 = vunpack.c.l.b16 %v1296
    %v1432 = vunpack.c.l.b16 %v1297
    %v1433 = vunpack.c.l.b16 %v1298
    %v1434 = vunpack.c.l.b16 %v1299
    %v1435 = vunpack.c.l.b16 %v1300
    %v1436 = vunpack.c.l.b16 %v1301
    %v1437 = vunpack.c.l.b16 %v1302
    %v1438 = vunpack.c.l.b16 %v1303
    %v1439 = vunpack.c.l.b16 %v1304
    %v1440 = vunpack.c.l.b16 %v1305
    %v1441 = vunpack.c.l.b16 %v1306
    %v1442 = vunpack.c.l.b16 %v1307
    %v1443 = vunpack.c.l.b16 %v1308
    %v1444 = vunpack.c.l.b16 %v1309
    %v1445 = vunpack.c.l.b16 %v1310
    %v1446 = vunpack.c.l.b16 %v1311
    %v1447 = vunpack.c.l.b16 %v1312
    %v1448 = vunpack.c.l.b16 %v1313
    %v1449 = vunpack.c.l.b16 %v1314
    %v1450 = vunpack.c.l.b16 %v1315
    %v1451 = vunpack.c.l.b16 %v1316
    %v1452 = vunpack.c.l.b16 %v1317
    %v1453 = vunpack.c.l.b16 %v1318
    %v1454 = vunpack.c.l.b16 %v1319
    %v1455 = vunpack.c.l.b16 %v1320
    %v1456 = vunpack.c.l.b16 %v1321
    %v1457 = vunpack.c.l.b16 %v1322
    %v1458 = vunpack.c.l.b16 %v1323
    %v1459 = vunpack.c.l.b16 %v1324
    %v1460 = vunpack.c.l.b16 %v1325
    %v1461 = vpack.c.b16 %v1398, %v1397
    %v1462 = vpack.c.b16 %v1400, %v1399
    %v1463 = vpack.c.b16 %v1402, %v1401
    %v1464 = vpack.c.b16 %v1404, %v1403
    %v1465 = vpack.c.b16 %v1406, %v1405
    %v1466 = vpack.c.b16 %v1408, %v1407
    %v1467 = vpack.c.b16 %v1410, %v1409
    %v1468 = vpack.c.b16 %v1412, %v1411
    %v1469 = vpack.c.b16 %v1414, %v1413
    %v1470 = vpack.c.b16 %v1416, %v1415
    %v1471 = vpack.c.b16 %v1418, %v1417
    %v1472 = vpack.c.b16 %v1420, %v1419
    %v1473 = vpack.c.b16 %v1422, %v1421
    %v1474 = vpack.c.b16 %v1424, %v1423
    %v1475 = vpack.c.b16 %v1426, %v1425
    %v1476 = vpack.c.b16 %v1428, %v1427
    %v1477 = vpack.c.b16 %v1430, %v1429
    %v1478 = vpack.c.b16 %v1432, %v1431
    %v1479 = vpack.c.b16 %v1434, %v1433
    %v1480 = vpack.c.b16 %v1436, %v1435
    %v1481 = vpack.c.b16 %v1438, %v1437
    %v1482 = vpack.c.b16 %v1440, %v1439
    %v1483 = vpack.c.b16 %v1442, %v1441
    %v1484 = vpack.c.b16 %v1444, %v1443
    %v1485 = vpack.c.b16 %v1446, %v1445
    %v1486 = vpack.c.b16 %v1448, %v1447
    %v1487 = vpack.c.b16 %v1450, %v1449
    %v1488 = vpack.c.b16 %v1452, %v1451
    %v1489 = vpack.c.b16 %v1454, %v1453
    %v1490 = vpack.c.b16 %v1456, %v1455
    %v1491 = vpack.c.b16 %v1458, %v1457
    %v1492 = vpack.c.b16 %v1460, %v1459
    %1525 = vmatprep.subr.bf16.mxu0 0
    %1526 = vmatpush1.bf16.msra.mxu0 %v1461
    %1527 = vmatprep.subr.bf16.mxu0 0
    %1528 = vmatpush1.bf16.msra.mxu0 %v1462
    %1529 = vmatprep.subr.bf16.mxu0 0
    %1530 = vmatpush1.bf16.msra.mxu0 %v1463
    %1531 = vmatprep.subr.bf16.mxu0 0
    %1532 = vmatpush1.bf16.msra.mxu0 %v1464
    %1533 = vmatprep.subr.bf16.mxu0 0
    %1534 = vmatpush1.bf16.msra.mxu0 %v1465
    %1535 = vmatprep.subr.bf16.mxu0 0
    %1536 = vmatpush1.bf16.msra.mxu0 %v1466
    %1537 = vmatprep.subr.bf16.mxu0 0
    %1538 = vmatpush1.bf16.msra.mxu0 %v1467
    %1539 = vmatprep.subr.bf16.mxu0 0
    %1540 = vmatpush1.bf16.msra.mxu0 %v1468
    %1541 = vmatprep.subr.bf16.mxu0 0
    %1542 = vmatpush1.bf16.msra.mxu0 %v1469
    %1543 = vmatprep.subr.bf16.mxu0 0
    %1544 = vmatpush1.bf16.msra.mxu0 %v1470
    %1545 = vmatprep.subr.bf16.mxu0 0
    %1546 = vmatpush1.bf16.msra.mxu0 %v1471
    %1547 = vmatprep.subr.bf16.mxu0 0
    %1548 = vmatpush1.bf16.msra.mxu0 %v1472
    %1549 = vmatprep.subr.bf16.mxu0 0
    %1550 = vmatpush1.bf16.msra.mxu0 %v1473
    %1551 = vmatprep.subr.bf16.mxu0 0
    %1552 = vmatpush1.bf16.msra.mxu0 %v1474
    %1553 = vmatprep.subr.bf16.mxu0 0
    %1554 = vmatpush1.bf16.msra.mxu0 %v1475
    %1555 = vmatprep.subr.bf16.mxu0 0
    %1556 = vmatpush1.bf16.msra.mxu0 %v1476
    %1557 = vmatprep.mubr.bf16.mxu0 %v1259
    %1558 = vmatmul.mubr.bf16.gmra.mrb[0].mxu0 %v1258
    %v1559 = vpop.f32.mrb[0].mxu0
    %v1560 = vadd.f32 %v1331, %v1559
    %v1561 = vpop.f32.mrb[0].mxu0
    %v1562 = vpop.f32.mrb[0].mxu0
    %v1563 = vpop.f32.mrb[0].mxu0
    %1564 = vdwg.mxu0
    %1565 = vmatprep.subr.bf16.mxu0 0
    %1566 = vmatpush1.bf16.msra.mxu0 %v1477
    %1567 = vmatprep.subr.bf16.mxu0 0
    %1568 = vmatpush1.bf16.msra.mxu0 %v1478
    %1569 = vmatprep.subr.bf16.mxu0 0
    %1570 = vmatpush1.bf16.msra.mxu0 %v1479
    %1571 = vmatprep.subr.bf16.mxu0 0
    %1572 = vmatpush1.bf16.msra.mxu0 %v1480
    %1573 = vmatprep.subr.bf16.mxu0 0
    %1574 = vmatpush1.bf16.msra.mxu0 %v1481
    %1575 = vmatprep.subr.bf16.mxu0 0
    %1576 = vmatpush1.bf16.msra.mxu0 %v1482
    %1577 = vmatprep.subr.bf16.mxu0 0
    %1578 = vmatpush1.bf16.msra.mxu0 %v1483
    %1579 = vmatprep.subr.bf16.mxu0 0
    %1580 = vmatpush1.bf16.msra.mxu0 %v1484
    %1581 = vmatprep.subr.bf16.mxu0 0
    %1582 = vmatpush1.bf16.msra.mxu0 %v1485
    %1583 = vmatprep.subr.bf16.mxu0 0
    %1584 = vmatpush1.bf16.msra.mxu0 %v1486
    %1585 = vmatprep.subr.bf16.mxu0 0
    %1586 = vmatpush1.bf16.msra.mxu0 %v1487
    %1587 = vmatprep.subr.bf16.mxu0 0
    %1588 = vmatpush1.bf16.msra.mxu0 %v1488
    %1589 = vmatprep.subr.bf16.mxu0 0
    %1590 = vmatpush1.bf16.msra.mxu0 %v1489
    %1591 = vmatprep.subr.bf16.mxu0 0
    %1592 = vmatpush1.bf16.msra.mxu0 %v1490
    %1593 = vmatprep.subr.bf16.mxu0 0
    %1594 = vmatpush1.bf16.msra.mxu0 %v1491
    %1595 = vmatprep.subr.bf16.mxu0 0
    %1596 = vmatpush1.bf16.msra.mxu0 %v1492
    %1597 = vmatprep.mubr.bf16.mxu0 %v1261
    %1598 = vmatmul.mubr.bf16.gmra.mrb[0].mxu0 %v1260
    %v1599 = vpop.f32.mrb[0].mxu0
    %v1600 = vadd.f32 %v1560, %v1599
    %v1601 = vpop.f32.mrb[0].mxu0
    %v1602 = vpop.f32.mrb[0].mxu0
    %v1603 = vpop.f32.mrb[0].mxu0
    %1604 = vdwg.mxu0
    %vm1605 = vcmask 130048
    %v1606 = vsel %vm1605, %v1600, -inf
    %1607 = vmax.xlane.f32.xlu0 %v1606
    %v1608 = vpop.xlane.xlu0 %1607
    %v1609 = vsub.f32 %v1600, %v1608
    %v1610 = vmul.f32 %v1609, 1.442695
    %v1611 = vpow.pop %v1610
    %v1612 = vsel %vm1605, %v1611, 0.0
    %1613 = vadd.xlane.f32.xlu0 %v1612
    %v1614 = vpop.xlane.xlu0 %1613
    %v1615 = vrcp.pop %v1614
    %v1616 = vmul.f32 %v1611, %v1615
    %s1617 = sld [smem:[#allocation2]]
    %v1618 = vld [vmem:[%s8] sm:$0xff]
    %v1619 = vadd.f32 %v1600, %v1618
    %v1620 = vstv %s1617
    %v1621 = vmul.f32 %v1619, %v1620
    %v1622 = vsel %vm1605, %v1621, -inf
    %1623 = vmax.xlane.f32.xlu0 %v1622
    %v1624 = vpop.xlane.xlu0 %1623
    %v1625 = vsub.f32 %v1621, %v1624
    %v1626 = vmul.f32 %v1625, 1.442695
    %v1627 = vpow.pop %v1626
    %v1628 = vsel %vm1605, %v1627, 0.0
    %1629 = vadd.xlane.f32.xlu0 %v1628
    %v1630 = vpop.xlane.xlu0 %1629
    %v1631 = vrcp.pop %v1630
    %v1632 = vmul.f32 %v1627, %v1631
    %v1633 = vld [vmem:[%s9] sm:$0xff]
    %v1634 = vld [vmem:[%s9 + $0x8] sm:$0xff]
    %v1635 = vld [vmem:[%s9 + $0x10] sm:$0xff]
    %v1636 = vld [vmem:[%s9 + $0x18] sm:$0xff]
    %v1637 = vld [vmem:[%s9 + $0x20] sm:$0xff]
    %v1638 = vld [vmem:[%s9 + $0x28] sm:$0xff]
    %v1639 = vld [vmem:[%s9 + $0x30] sm:$0xff]
    %v1640 = vld [vmem:[%s9 + $0x38] sm:$0xff]
    %v1641 = vld [vmem:[%s9 + $0x40] sm:$0xff]
    %v1642 = vld [vmem:[%s9 + $0x48] sm:$0xff]
    %v1643 = vld [vmem:[%s9 + $0x50] sm:$0xff]
    %v1644 = vld [vmem:[%s9 + $0x58] sm:$0xff]
    %v1645 = vld [vmem:[%s9 + $0x60] sm:$0xff]
    %v1646 = vld [vmem:[%s9 + $0x68] sm:$0xff]
    %v1647 = vld [vmem:[%s9 + $0x70] sm:$0xff]
    %v1648 = vld [vmem:[%s9 + $0x78] sm:$0xff]
    %v1649 = vpack.c.bf16 %v1632, %v1632
    %v1650 = vld [vmem:[%s10] sm:$0xff]
    %v1651 = vld [vmem:[%s10 + $0x8] sm:$0xff]
    %v1652 = vld [vmem:[%s10 + $0x10] sm:$0xff]
    %v1653 = vld [vmem:[%s10 + $0x18] sm:$0xff]
    %v1658 = vunpack.c.l.b16 %v1650
    %v1659 = vunpack.c.h.b16 %v1650
    %v1660 = vunpack.c.l.b16 %v1651
    %v1661 = vunpack.c.h.b16 %v1651
    %v1662 = vunpack.c.l.b16 %v1652
    %v1663 = vunpack.c.h.b16 %v1652
    %v1664 = vunpack.c.l.b16 %v1653
    %v1665 = vunpack.c.h.b16 %v1653
    %v1666 = vpack.c.b16 %v1662, %v1658
    %v1667 = vpack.c.b16 %v1663, %v1659
    %v1668 = vpack.c.b16 %v1664, %v1660
    %v1669 = vpack.c.b16 %v1665, %v1661
    %v1675 = vsel %vm1605, %v1649, 0
    %1677 = vmatprep.subr.bf16.mxu0 %v1667
    %1678 = vmatpush1.bf16.msra.mxu0 %v1666
    %1679 = vmatprep.subr.bf16.mxu0 0
    %1680 = vmatpush1.bf16.msra.mxu0 0
    %1681 = vmatprep.subr.bf16.mxu0 0
    %1682 = vmatpush1.bf16.msra.mxu0 0
    %1683 = vmatprep.subr.bf16.mxu0 0
    %1684 = vmatpush1.bf16.msra.mxu0 0
    %1685 = vmatprep.subr.bf16.mxu0 0
    %1686 = vmatpush1.bf16.msra.mxu0 0
    %1687 = vmatprep.subr.bf16.mxu0 0
    %1688 = vmatpush1.bf16.msra.mxu0 0
    %1689 = vmatprep.subr.bf16.mxu0 0
    %1690 = vmatpush1.bf16.msra.mxu0 0
    %1691 = vmatprep.subr.bf16.mxu0 0
    %1692 = vmatpush1.bf16.msra.mxu0 0
    %1693 = vmatprep.subr.bf16.mxu0 0
    %1694 = vmatpush1.bf16.msra.mxu0 0
    %1695 = vmatprep.subr.bf16.mxu0 0
    %1696 = vmatpush1.bf16.msra.mxu0 0
    %1697 = vmatprep.subr.bf16.mxu0 0
    %1698 = vmatpush1.bf16.msra.mxu0 0
    %1699 = vmatprep.subr.bf16.mxu0 0
    %1700 = vmatpush1.bf16.msra.mxu0 0
    %1701 = vmatprep.subr.bf16.mxu0 0
    %1702 = vmatpush1.bf16.msra.mxu0 0
    %1703 = vmatprep.subr.bf16.mxu0 0
    %1704 = vmatpush1.bf16.msra.mxu0 0
    %1705 = vmatprep.subr.bf16.mxu0 0
    %1706 = vmatpush1.bf16.msra.mxu0 0
    %1707 = vmatprep.subr.bf16.mxu0 0
    %1708 = vmatpush1.bf16.msra.mxu0 0
    %1709 = vmatprep.mubr.bf16.mxu0 0
    %1710 = vmatmul.mubr.bf16.gmra.mrb[0].mxu0 %v1675
    %v1711 = vpop.f32.mrb[0].mxu0
    %v1712 = vadd.f32 0.0, %v1711
    %v1713 = vpop.f32.mrb[0].mxu0
    %v1714 = vadd.f32 0.0, %v1713
    %v1715 = vpop.f32.mrb[0].mxu0
    %v1716 = vpop.f32.mrb[0].mxu0
    %1717 = vdwg.mxu0
    %1718 = vmatprep.subr.bf16.mxu0 %v1669
    %1719 = vmatpush1.bf16.msra.mxu0 %v1668
    %1720 = vmatprep.subr.bf16.mxu0 0
    %1721 = vmatpush1.bf16.msra.mxu0 0
    %1722 = vmatprep.subr.bf16.mxu0 0
    %1723 = vmatpush1.bf16.msra.mxu0 0
    %1724 = vmatprep.subr.bf16.mxu0 0
    %1725 = vmatpush1.bf16.msra.mxu0 0
    %1726 = vmatprep.subr.bf16.mxu0 0
    %1727 = vmatpush1.bf16.msra.mxu0 0
    %1728 = vmatprep.subr.bf16.mxu0 0
    %1729 = vmatpush1.bf16.msra.mxu0 0
    %1730 = vmatprep.subr.bf16.mxu0 0
    %1731 = vmatpush1.bf16.msra.mxu0 0
    %1732 = vmatprep.subr.bf16.mxu0 0
    %1733 = vmatpush1.bf16.msra.mxu0 0
    %1734 = vmatprep.subr.bf16.mxu0 0
    %1735 = vmatpush1.bf16.msra.mxu0 0
    %1736 = vmatprep.subr.bf16.mxu0 0
    %1737 = vmatpush1.bf16.msra.mxu0 0
    %1738 = vmatprep.subr.bf16.mxu0 0
    %1739 = vmatpush1.bf16.msra.mxu0 0
    %1740 = vmatprep.subr.bf16.mxu0 0
    %1741 = vmatpush1.bf16.msra.mxu0 0
    %1742 = vmatprep.subr.bf16.mxu0 0
    %1743 = vmatpush1.bf16.msra.mxu0 0
    %1744 = vmatprep.subr.bf16.mxu0 0
    %1745 = vmatpush1.bf16.msra.mxu0 0
    %1746 = vmatprep.subr.bf16.mxu0 0
    %1747 = vmatpush1.bf16.msra.mxu0 0
    %1748 = vmatprep.subr.bf16.mxu0 0
    %1749 = vmatpush1.bf16.msra.mxu0 0
    %1750 = vmatprep.mubr.bf16.mxu0 0
    %1751 = vmatmul.mubr.bf16.gmra.mrb[0].mxu0 %v1675
    %v1752 = vpop.f32.mrb[0].mxu0
    %v1753 = vadd.f32 0.0, %v1752
    %v1754 = vpop.f32.mrb[0].mxu0
    %v1755 = vadd.f32 0.0, %v1754
    %v1756 = vpop.f32.mrb[0].mxu0
    %v1757 = vpop.f32.mrb[0].mxu0
    %1758 = vdwg.mxu0
    %v1775 = vunpack.c.l.b16 %v1633
    %v1776 = vunpack.c.h.b16 %v1633
    %v1777 = vunpack.c.l.b16 %v1634
    %v1778 = vunpack.c.h.b16 %v1634
    %v1779 = vunpack.c.l.b16 %v1635
    %v1780 = vunpack.c.h.b16 %v1635
    %v1781 = vunpack.c.l.b16 %v1636
    %v1782 = vunpack.c.h.b16 %v1636
    %v1783 = vunpack.c.l.b16 %v1637
    %v1784 = vunpack.c.h.b16 %v1637
    %v1785 = vunpack.c.l.b16 %v1638
    %v1786 = vunpack.c.h.b16 %v1638
    %v1787 = vunpack.c.l.b16 %v1639
    %v1788 = vunpack.c.h.b16 %v1639
    %v1789 = vunpack.c.l.b16 %v1640
    %v1790 = vunpack.c.h.b16 %v1640
    %v1791 = vunpack.c.l.b16 %v1641
    %v1792 = vunpack.c.h.b16 %v1641
    %v1793 = vunpack.c.l.b16 %v1642
    %v1794 = vunpack.c.h.b16 %v1642
    %v1795 = vunpack.c.l.b16 %v1643
    %v1796 = vunpack.c.h.b16 %v1643
    %v1797 = vunpack.c.l.b16 %v1644
    %v1798 = vunpack.c.h.b16 %v1644
    %v1799 = vunpack.c.l.b16 %v1645
    %v1800 = vunpack.c.h.b16 %v1645
    %v1801 = vunpack.c.l.b16 %v1646
    %v1802 = vunpack.c.h.b16 %v1646
    %v1803 = vunpack.c.l.b16 %v1647
    %v1804 = vunpack.c.h.b16 %v1647
    %v1805 = vunpack.c.l.b16 %v1648
    %v1806 = vunpack.c.h.b16 %v1648
    %v1807 = vpack.c.b16 %v1779, %v1775
    %v1808 = vpack.c.b16 %v1780, %v1776
    %v1809 = vpack.c.b16 %v1781, %v1777
    %v1810 = vpack.c.b16 %v1782, %v1778
    %v1811 = vpack.c.b16 %v1787, %v1783
    %v1812 = vpack.c.b16 %v1788, %v1784
    %v1813 = vpack.c.b16 %v1789, %v1785
    %v1814 = vpack.c.b16 %v1790, %v1786
    %v1815 = vpack.c.b16 %v1795, %v1791
    %v1816 = vpack.c.b16 %v1796, %v1792
    %v1817 = vpack.c.b16 %v1797, %v1793
    %v1818 = vpack.c.b16 %v1798, %v1794
    %v1819 = vpack.c.b16 %v1803, %v1799
    %v1820 = vpack.c.b16 %v1804, %v1800
    %v1821 = vpack.c.b16 %v1805, %v1801
    %v1822 = vpack.c.b16 %v1806, %v1802
    %1839 = vmatprep.subr.bf16.mxu0 %v1808
    %1840 = vmatpush1.bf16.msra.mxu0 %v1807
    %1841 = vmatprep.subr.bf16.mxu0 %v1812
    %1842 = vmatpush1.bf16.msra.mxu0 %v1811
    %1843 = vmatprep.subr.bf16.mxu0 %v1816
    %1844 = vmatpush1.bf16.msra.mxu0 %v1815
    %1845 = vmatprep.subr.bf16.mxu0 %v1820
    %1846 = vmatpush1.bf16.msra.mxu0 %v1819
    %1847 = vmatprep.subr.bf16.mxu0 0
    %1848 = vmatpush1.bf16.msra.mxu0 0
    %1849 = vmatprep.subr.bf16.mxu0 0
    %1850 = vmatpush1.bf16.msra.mxu0 0
    %1851 = vmatprep.subr.bf16.mxu0 0
    %1852 = vmatpush1.bf16.msra.mxu0 0
    %1853 = vmatprep.subr.bf16.mxu0 0
    %1854 = vmatpush1.bf16.msra.mxu0 0
    %1855 = vmatprep.subr.bf16.mxu0 0
    %1856 = vmatpush1.bf16.msra.mxu0 0
    %1857 = vmatprep.subr.bf16.mxu0 0
    %1858 = vmatpush1.bf16.msra.mxu0 0
    %1859 = vmatprep.subr.bf16.mxu0 0
    %1860 = vmatpush1.bf16.msra.mxu0 0
    %1861 = vmatprep.subr.bf16.mxu0 0
    %1862 = vmatpush1.bf16.msra.mxu0 0
    %1863 = vmatprep.subr.bf16.mxu0 0
    %1864 = vmatpush1.bf16.msra.mxu0 0
    %1865 = vmatprep.subr.bf16.mxu0 0
    %1866 = vmatpush1.bf16.msra.mxu0 0
    %1867 = vmatprep.subr.bf16.mxu0 0
    %1868 = vmatpush1.bf16.msra.mxu0 0
    %1869 = vmatprep.subr.bf16.mxu0 0
    %1870 = vmatpush1.bf16.msra.mxu0 0
    %1871 = vmatprep.mubr.bf16.mxu0 0
    %1872 = vmatmul.mubr.bf16.gmra.mrb[0].mxu0 %v208
    %v1873 = vpop.f32.mrb[0].mxu0
    %v1874 = vadd.f32 %v1712, %v1873
    %v1875 = vpop.f32.mrb[0].mxu0
    %v1876 = vadd.f32 %v1714, %v1875
    %v1877 = vpop.f32.mrb[0].mxu0
    %v1878 = vpop.f32.mrb[0].mxu0
    %1879 = vdwg.mxu0
    %1880 = vmatprep.subr.bf16.mxu0 %v1810
    %1881 = vmatpush1.bf16.msra.mxu0 %v1809
    %1882 = vmatprep.subr.bf16.mxu0 %v1814
    %1883 = vmatpush1.bf16.msra.mxu0 %v1813
    %1884 = vmatprep.subr.bf16.mxu0 %v1818
    %1885 = vmatpush1.bf16.msra.mxu0 %v1817
    %1886 = vmatprep.subr.bf16.mxu0 %v1822
    %1887 = vmatpush1.bf16.msra.mxu0 %v1821
    %1888 = vmatprep.subr.bf16.mxu0 0
    %1889 = vmatpush1.bf16.msra.mxu0 0
    %1890 = vmatprep.subr.bf16.mxu0 0
    %1891 = vmatpush1.bf16.msra.mxu0 0
    %1892 = vmatprep.subr.bf16.mxu0 0
    %1893 = vmatpush1.bf16.msra.mxu0 0
    %1894 = vmatprep.subr.bf16.mxu0 0
    %1895 = vmatpush1.bf16.msra.mxu0 0
    %1896 = vmatprep.subr.bf16.mxu0 0
    %1897 = vmatpush1.bf16.msra.mxu0 0
    %1898 = vmatprep.subr.bf16.mxu0 0
    %1899 = vmatpush1.bf16.msra.mxu0 0
    %1900 = vmatprep.subr.bf16.mxu0 0
    %1901 = vmatpush1.bf16.msra.mxu0 0
    %1902 = vmatprep.subr.bf16.mxu0 0
    %1903 = vmatpush1.bf16.msra.mxu0 0
    %1904 = vmatprep.subr.bf16.mxu0 0
    %1905 = vmatpush1.bf16.msra.mxu0 0
    %1906 = vmatprep.subr.bf16.mxu0 0
    %1907 = vmatpush1.bf16.msra.mxu0 0
    %1908 = vmatprep.subr.bf16.mxu0 0
    %1909 = vmatpush1.bf16.msra.mxu0 0
    %1910 = vmatprep.subr.bf16.mxu0 0
    %1911 = vmatpush1.bf16.msra.mxu0 0
    %1912 = vmatprep.mubr.bf16.mxu0 0
    %1913 = vmatmul.mubr.bf16.gmra.mrb[0].mxu0 %v208
    %v1914 = vpop.f32.mrb[0].mxu0
    %v1915 = vadd.f32 %v1753, %v1914
    %v1916 = vpop.f32.mrb[0].mxu0
    %v1917 = vadd.f32 %v1755, %v1916
    %v1918 = vpop.f32.mrb[0].mxu0
    %v1919 = vpop.f32.mrb[0].mxu0
    %1920 = vdwg.mxu0
    %v1921 = vld [vmem:[%s11] sm:$0xf]
    %v1923 = vlaneseq
    %v1924 = vshrl.u32 %v1923, 7
    %v1925 = vsub.s32 0, %v1924
    %v1926 = vrot.slane %v1921, %v1925
    %v1927 = vlaneseq
    %v1928 = vshrl.u32 %v1927, 7
    %v1929 = vsub.s32 1, %v1928
    %v1930 = vrot.slane %v1921, %v1929
    %v1931 = vlaneseq
    %v1932 = vshrl.u32 %v1931, 7
    %v1933 = vsub.s32 2, %v1932
    %v1934 = vrot.slane %v1921, %v1933
    %v1935 = vlaneseq
    %v1936 = vshrl.u32 %v1935, 7
    %v1937 = vsub.s32 3, %v1936
    %v1938 = vrot.slane %v1921, %v1937
    %v1943 = vadd.f32 %v1874, %v1926
    %v1944 = vadd.f32 %v1876, %v1930
    %v1945 = vadd.f32 %v1915, %v1934
    %v1946 = vadd.f32 %v1917, %v1938
    %v1947 = vmax.f32 %v1943, 0.0
    %v1948 = vmax.f32 %v1944, 0.0
    %v1949 = vmax.f32 %v1945, 0.0
    %v1950 = vmax.f32 %v1946, 0.0
    %v1951 = vpack.c.bf16 %v1947, %v1947
    %v1952 = vpack.c.bf16 %v1948, %v1948
    %v1953 = vpack.c.bf16 %v1949, %v1949
    %v1954 = vpack.c.bf16 %v1950, %v1950
    %v1955 = vld [vmem:[#allocation6] sm:$0xff]
    %v1956 = vld [vmem:[#allocation6 + $0x8] sm:$0xff]
    %v1957 = vld [vmem:[#allocation6 + $0x10] sm:$0xff]
    %v1958 = vld [vmem:[#allocation6 + $0x18] sm:$0xff]
    %v1959 = vld [vmem:[#allocation6 + $0x20] sm:$0xff]
    %v1960 = vld [vmem:[#allocation6 + $0x28] sm:$0xff]
    %v1961 = vld [vmem:[#allocation6 + $0x30] sm:$0xff]
    %v1962 = vld [vmem:[#allocation6 + $0x38] sm:$0xff]
    %v1963 = vld [vmem:[#allocation6 + $0x40] sm:$0xff]
    %v1964 = vld [vmem:[#allocation6 + $0x48] sm:$0xff]
    %v1965 = vld [vmem:[#allocation6 + $0x50] sm:$0xff]
    %v1966 = vld [vmem:[#allocation6 + $0x58] sm:$0xff]
    %v1967 = vld [vmem:[#allocation6 + $0x60] sm:$0xff]
    %v1968 = vld [vmem:[#allocation6 + $0x68] sm:$0xff]
    %v1969 = vld [vmem:[#allocation6 + $0x70] sm:$0xff]
    %v1970 = vld [vmem:[#allocation6 + $0x78] sm:$0xff]
    %v1971 = vld [vmem:[#allocation6 + $0x80] sm:$0xff]
    %v1972 = vld [vmem:[#allocation6 + $0x88] sm:$0xff]
    %v1973 = vld [vmem:[#allocation6 + $0x90] sm:$0xff]
    %v1974 = vld [vmem:[#allocation6 + $0x98] sm:$0xff]
    %v1975 = vld [vmem:[#allocation6 + $0xa0] sm:$0xff]
    %v1976 = vld [vmem:[#allocation6 + $0xa8] sm:$0xff]
    %v1977 = vld [vmem:[#allocation6 + $0xb0] sm:$0xff]
    %v1978 = vld [vmem:[#allocation6 + $0xb8] sm:$0xff]
    %v1979 = vld [vmem:[#allocation6 + $0xc0] sm:$0xff]
    %v1980 = vld [vmem:[#allocation6 + $0xc8] sm:$0xff]
    %v1981 = vld [vmem:[#allocation6 + $0xd0] sm:$0xff]
    %v1982 = vld [vmem:[#allocation6 + $0xd8] sm:$0xff]
    %v1983 = vld [vmem:[#allocation6 + $0xe0] sm:$0xff]
    %v1984 = vld [vmem:[#allocation6 + $0xe8] sm:$0xff]
    %v1985 = vld [vmem:[#allocation6 + $0xf0] sm:$0xff]
    %v1986 = vld [vmem:[#allocation6 + $0xf8] sm:$0xff]
    %v1987 = vld [vmem:[#allocation6 + $0x100] sm:$0xff]
    %v1988 = vld [vmem:[#allocation6 + $0x108] sm:$0xff]
    %v1989 = vld [vmem:[#allocation6 + $0x110] sm:$0xff]
    %v1990 = vld [vmem:[#allocation6 + $0x118] sm:$0xff]
    %v1991 = vld [vmem:[#allocation6 + $0x120] sm:$0xff]
    %v1992 = vld [vmem:[#allocation6 + $0x128] sm:$0xff]
    %v1993 = vld [vmem:[#allocation6 + $0x130] sm:$0xff]
    %v1994 = vld [vmem:[#allocation6 + $0x138] sm:$0xff]
    %v1995 = vld [vmem:[#allocation6 + $0x140] sm:$0xff]
    %v1996 = vld [vmem:[#allocation6 + $0x148] sm:$0xff]
    %v1997 = vld [vmem:[#allocation6 + $0x150] sm:$0xff]
    %v1998 = vld [vmem:[#allocation6 + $0x158] sm:$0xff]
    %v1999 = vld [vmem:[#allocation6 + $0x160] sm:$0xff]
    %v2000 = vld [vmem:[#allocation6 + $0x168] sm:$0xff]
    %v2001 = vld [vmem:[#allocation6 + $0x170] sm:$0xff]
    %v2002 = vld [vmem:[#allocation6 + $0x178] sm:$0xff]
    %v2003 = vld [vmem:[#allocation6 + $0x180] sm:$0xff]
    %v2004 = vld [vmem:[#allocation6 + $0x188] sm:$0xff]
    %v2005 = vld [vmem:[#allocation6 + $0x190] sm:$0xff]
    %v2006 = vld [vmem:[#allocation6 + $0x198] sm:$0xff]
    %v2007 = vld [vmem:[#allocation6 + $0x1a0] sm:$0xff]
    %v2008 = vld [vmem:[#allocation6 + $0x1a8] sm:$0xff]
    %v2009 = vld [vmem:[#allocation6 + $0x1b0] sm:$0xff]
    %v2010 = vld [vmem:[#allocation6 + $0x1b8] sm:$0xff]
    %v2011 = vld [vmem:[#allocation6 + $0x1c0] sm:$0xff]
    %v2012 = vld [vmem:[#allocation6 + $0x1c8] sm:$0xff]
    %v2013 = vld [vmem:[#allocation6 + $0x1d0] sm:$0xff]
    %v2014 = vld [vmem:[#allocation6 + $0x1d8] sm:$0xff]
    %v2015 = vld [vmem:[#allocation6 + $0x1e0] sm:$0xff]
    %v2016 = vld [vmem:[#allocation6 + $0x1e8] sm:$0xff]
    %v2017 = vld [vmem:[#allocation6 + $0x1f0] sm:$0xff]
    %v2018 = vld [vmem:[#allocation6 + $0x1f8] sm:$0xff]
    %v2019 = vld [vmem:[#allocation6 + $0x200] sm:$0xff]
    %v2020 = vld [vmem:[#allocation6 + $0x208] sm:$0xff]
    %v2021 = vld [vmem:[#allocation6 + $0x210] sm:$0xff]
    %v2022 = vld [vmem:[#allocation6 + $0x218] sm:$0xff]
    %v2023 = vld [vmem:[#allocation6 + $0x220] sm:$0xff]
    %v2024 = vld [vmem:[#allocation6 + $0x228] sm:$0xff]
    %v2025 = vld [vmem:[#allocation6 + $0x230] sm:$0xff]
    %v2026 = vld [vmem:[#allocation6 + $0x238] sm:$0xff]
    %v2027 = vld [vmem:[#allocation6 + $0x240] sm:$0xff]
    %v2028 = vld [vmem:[#allocation6 + $0x248] sm:$0xff]
    %v2029 = vld [vmem:[#allocation6 + $0x250] sm:$0xff]
    %v2030 = vld [vmem:[#allocation6 + $0x258] sm:$0xff]
    %v2031 = vld [vmem:[#allocation6 + $0x260] sm:$0xff]
    %v2032 = vld [vmem:[#allocation6 + $0x268] sm:$0xff]
    %v2033 = vld [vmem:[#allocation6 + $0x270] sm:$0xff]
    %v2034 = vld [vmem:[#allocation6 + $0x278] sm:$0xff]
    %v2035 = vld [vmem:[#allocation6 + $0x280] sm:$0xff]
    %v2036 = vld [vmem:[#allocation6 + $0x288] sm:$0xff]
    %v2037 = vld [vmem:[#allocation6 + $0x290] sm:$0xff]
    %v2038 = vld [vmem:[#allocation6 + $0x298] sm:$0xff]
    %v2039 = vld [vmem:[#allocation6 + $0x2a0] sm:$0xff]
    %v2040 = vld [vmem:[#allocation6 + $0x2a8] sm:$0xff]
    %v2041 = vld [vmem:[#allocation6 + $0x2b0] sm:$0xff]
    %v2042 = vld [vmem:[#allocation6 + $0x2b8] sm:$0xff]
    %v2043 = vld [vmem:[#allocation6 + $0x2c0] sm:$0xff]
    %v2044 = vld [vmem:[#allocation6 + $0x2c8] sm:$0xff]
    %v2045 = vld [vmem:[#allocation6 + $0x2d0] sm:$0xff]
    %v2046 = vld [vmem:[#allocation6 + $0x2d8] sm:$0xff]
    %v2047 = vld [vmem:[#allocation6 + $0x2e0] sm:$0xff]
    %v2048 = vld [vmem:[#allocation6 + $0x2e8] sm:$0xff]
    %v2049 = vld [vmem:[#allocation6 + $0x2f0] sm:$0xff]
    %v2050 = vld [vmem:[#allocation6 + $0x2f8] sm:$0xff]
    %v2051 = vld [vmem:[#allocation6 + $0x300] sm:$0xff]
    %v2052 = vld [vmem:[#allocation6 + $0x308] sm:$0xff]
    %v2053 = vld [vmem:[#allocation6 + $0x310] sm:$0xff]
    %v2054 = vld [vmem:[#allocation6 + $0x318] sm:$0xff]
    %v2055 = vld [vmem:[#allocation6 + $0x320] sm:$0xff]
    %v2056 = vld [vmem:[#allocation6 + $0x328] sm:$0xff]
    %v2057 = vld [vmem:[#allocation6 + $0x330] sm:$0xff]
    %v2058 = vld [vmem:[#allocation6 + $0x338] sm:$0xff]
    %v2059 = vld [vmem:[#allocation6 + $0x340] sm:$0xff]
    %v2060 = vld [vmem:[#allocation6 + $0x348] sm:$0xff]
    %v2061 = vld [vmem:[#allocation6 + $0x350] sm:$0xff]
    %v2062 = vld [vmem:[#allocation6 + $0x358] sm:$0xff]
    %v2063 = vld [vmem:[#allocation6 + $0x360] sm:$0xff]
    %v2064 = vld [vmem:[#allocation6 + $0x368] sm:$0xff]
    %v2065 = vld [vmem:[#allocation6 + $0x370] sm:$0xff]
    %v2066 = vld [vmem:[#allocation6 + $0x378] sm:$0xff]
    %v2067 = vld [vmem:[#allocation6 + $0x380] sm:$0xff]
    %v2068 = vld [vmem:[#allocation6 + $0x388] sm:$0xff]
    %v2069 = vld [vmem:[#allocation6 + $0x390] sm:$0xff]
    %v2070 = vld [vmem:[#allocation6 + $0x398] sm:$0xff]
    %v2071 = vld [vmem:[#allocation6 + $0x3a0] sm:$0xff]
    %v2072 = vld [vmem:[#allocation6 + $0x3a8] sm:$0xff]
    %v2073 = vld [vmem:[#allocation6 + $0x3b0] sm:$0xff]
    %v2074 = vld [vmem:[#allocation6 + $0x3b8] sm:$0xff]
    %v2075 = vld [vmem:[#allocation6 + $0x3c0] sm:$0xff]
    %v2076 = vld [vmem:[#allocation6 + $0x3c8] sm:$0xff]
    %v2077 = vld [vmem:[#allocation6 + $0x3d0] sm:$0xff]
    %v2078 = vld [vmem:[#allocation6 + $0x3d8] sm:$0xff]
    %v2079 = vld [vmem:[#allocation6 + $0x3e0] sm:$0xff]
    %v2080 = vld [vmem:[#allocation6 + $0x3e8] sm:$0xff]
    %v2081 = vld [vmem:[#allocation6 + $0x3f0] sm:$0xff]
    %v2082 = vld [vmem:[#allocation6 + $0x3f8] sm:$0xff]
    %v2083 = vld [vmem:[%s13] sm:$0xf]
    %v2085 = vlaneseq
    %v2086 = vshrl.u32 %v2085, 7
    %v2087 = vsub.s32 0, %v2086
    %v2088 = vrot.slane %v2083, %v2087
    %v2089 = vlaneseq
    %v2090 = vshrl.u32 %v2089, 7
    %v2091 = vsub.s32 1, %v2090
    %v2092 = vrot.slane %v2083, %v2091
    %v2093 = vlaneseq
    %v2094 = vshrl.u32 %v2093, 7
    %v2095 = vsub.s32 2, %v2094
    %v2096 = vrot.slane %v2083, %v2095
    %v2097 = vlaneseq
    %v2098 = vshrl.u32 %v2097, 7
    %v2099 = vsub.s32 3, %v2098
    %v2100 = vrot.slane %v2083, %v2099
    %v2233 = vunpack.c.l.b16 %v1955
    %v2234 = vunpack.c.h.b16 %v1955
    %v2235 = vunpack.c.l.b16 %v1956
    %v2236 = vunpack.c.h.b16 %v1956
    %v2237 = vunpack.c.l.b16 %v1957
    %v2238 = vunpack.c.h.b16 %v1957
    %v2239 = vunpack.c.l.b16 %v1958
    %v2240 = vunpack.c.h.b16 %v1958
    %v2241 = vunpack.c.l.b16 %v1959
    %v2242 = vunpack.c.h.b16 %v1959
    %v2243 = vunpack.c.l.b16 %v1960
    %v2244 = vunpack.c.h.b16 %v1960
    %v2245 = vunpack.c.l.b16 %v1961
    %v2246 = vunpack.c.h.b16 %v1961
    %v2247 = vunpack.c.l.b16 %v1962
    %v2248 = vunpack.c.h.b16 %v1962
    %v2249 = vunpack.c.l.b16 %v1963
    %v2250 = vunpack.c.h.b16 %v1963
    %v2251 = vunpack.c.l.b16 %v1964
    %v2252 = vunpack.c.h.b16 %v1964
    %v2253 = vunpack.c.l.b16 %v1965
    %v2254 = vunpack.c.h.b16 %v1965
    %v2255 = vunpack.c.l.b16 %v1966
    %v2256 = vunpack.c.h.b16 %v1966
    %v2257 = vunpack.c.l.b16 %v1967
    %v2258 = vunpack.c.h.b16 %v1967
    %v2259 = vunpack.c.l.b16 %v1968
    %v2260 = vunpack.c.h.b16 %v1968
    %v2261 = vunpack.c.l.b16 %v1969
    %v2262 = vunpack.c.h.b16 %v1969
    %v2263 = vunpack.c.l.b16 %v1970
    %v2264 = vunpack.c.h.b16 %v1970
    %v2265 = vunpack.c.l.b16 %v1971
    %v2266 = vunpack.c.h.b16 %v1971
    %v2267 = vunpack.c.l.b16 %v1972
    %v2268 = vunpack.c.h.b16 %v1972
    %v2269 = vunpack.c.l.b16 %v1973
    %v2270 = vunpack.c.h.b16 %v1973
    %v2271 = vunpack.c.l.b16 %v1974
    %v2272 = vunpack.c.h.b16 %v1974
    %v2273 = vunpack.c.l.b16 %v1975
    %v2274 = vunpack.c.h.b16 %v1975
    %v2275 = vunpack.c.l.b16 %v1976
    %v2276 = vunpack.c.h.b16 %v1976
    %v2277 = vunpack.c.l.b16 %v1977
    %v2278 = vunpack.c.h.b16 %v1977
    %v2279 = vunpack.c.l.b16 %v1978
    %v2280 = vunpack.c.h.b16 %v1978
    %v2281 = vunpack.c.l.b16 %v1979
    %v2282 = vunpack.c.h.b16 %v1979
    %v2283 = vunpack.c.l.b16 %v1980
    %v2284 = vunpack.c.h.b16 %v1980
    %v2285 = vunpack.c.l.b16 %v1981
    %v2286 = vunpack.c.h.b16 %v1981
    %v2287 = vunpack.c.l.b16 %v1982
    %v2288 = vunpack.c.h.b16 %v1982
    %v2289 = vunpack.c.l.b16 %v1983
    %v2290 = vunpack.c.h.b16 %v1983
    %v2291 = vunpack.c.l.b16 %v1984
    %v2292 = vunpack.c.h.b16 %v1984
    %v2293 = vunpack.c.l.b16 %v1985
    %v2294 = vunpack.c.h.b16 %v1985
    %v2295 = vunpack.c.l.b16 %v1986
    %v2296 = vunpack.c.h.b16 %v1986
    %v2297 = vunpack.c.l.b16 %v1987
    %v2298 = vunpack.c.h.b16 %v1987
    %v2299 = vunpack.c.l.b16 %v1988
    %v2300 = vunpack.c.h.b16 %v1988
    %v2301 = vunpack.c.l.b16 %v1989
    %v2302 = vunpack.c.h.b16 %v1989
    %v2303 = vunpack.c.l.b16 %v1990
    %v2304 = vunpack.c.h.b16 %v1990
    %v2305 = vunpack.c.l.b16 %v1991
    %v2306 = vunpack.c.h.b16 %v1991
    %v2307 = vunpack.c.l.b16 %v1992
    %v2308 = vunpack.c.h.b16 %v1992
    %v2309 = vunpack.c.l.b16 %v1993
    %v2310 = vunpack.c.h.b16 %v1993
    %v2311 = vunpack.c.l.b16 %v1994
    %v2312 = vunpack.c.h.b16 %v1994
    %v2313 = vunpack.c.l.b16 %v1995
    %v2314 = vunpack.c.h.b16 %v1995
    %v2315 = vunpack.c.l.b16 %v1996
    %v2316 = vunpack.c.h.b16 %v1996
    %v2317 = vunpack.c.l.b16 %v1997
    %v2318 = vunpack.c.h.b16 %v1997
    %v2319 = vunpack.c.l.b16 %v1998
    %v2320 = vunpack.c.h.b16 %v1998
    %v2321 = vunpack.c.l.b16 %v1999
    %v2322 = vunpack.c.h.b16 %v1999
    %v2323 = vunpack.c.l.b16 %v2000
    %v2324 = vunpack.c.h.b16 %v2000
    %v2325 = vunpack.c.l.b16 %v2001
    %v2326 = vunpack.c.h.b16 %v2001
    %v2327 = vunpack.c.l.b16 %v2002
    %v2328 = vunpack.c.h.b16 %v2002
    %v2329 = vunpack.c.l.b16 %v2003
    %v2330 = vunpack.c.h.b16 %v2003
    %v2331 = vunpack.c.l.b16 %v2004
    %v2332 = vunpack.c.h.b16 %v2004
    %v2333 = vunpack.c.l.b16 %v2005
    %v2334 = vunpack.c.h.b16 %v2005
    %v2335 = vunpack.c.l.b16 %v2006
    %v2336 = vunpack.c.h.b16 %v2006
    %v2337 = vunpack.c.l.b16 %v2007
    %v2338 = vunpack.c.h.b16 %v2007
    %v2339 = vunpack.c.l.b16 %v2008
    %v2340 = vunpack.c.h.b16 %v2008
    %v2341 = vunpack.c.l.b16 %v2009
    %v2342 = vunpack.c.h.b16 %v2009
    %v2343 = vunpack.c.l.b16 %v2010
    %v2344 = vunpack.c.h.b16 %v2010
    %v2345 = vunpack.c.l.b16 %v2011
    %v2346 = vunpack.c.h.b16 %v2011
    %v2347 = vunpack.c.l.b16 %v2012
    %v2348 = vunpack.c.h.b16 %v2012
    %v2349 = vunpack.c.l.b16 %v2013
    %v2350 = vunpack.c.h.b16 %v2013
    %v2351 = vunpack.c.l.b16 %v2014
    %v2352 = vunpack.c.h.b16 %v2014
    %v2353 = vunpack.c.l.b16 %v2015
    %v2354 = vunpack.c.h.b16 %v2015
    %v2355 = vunpack.c.l.b16 %v2016
    %v2356 = vunpack.c.h.b16 %v2016
    %v2357 = vunpack.c.l.b16 %v2017
    %v2358 = vunpack.c.h.b16 %v2017
    %v2359 = vunpack.c.l.b16 %v2018
    %v2360 = vunpack.c.h.b16 %v2018
    %v2361 = vunpack.c.l.b16 %v2019
    %v2362 = vunpack.c.h.b16 %v2019
    %v2363 = vunpack.c.l.b16 %v2020
    %v2364 = vunpack.c.h.b16 %v2020
    %v2365 = vunpack.c.l.b16 %v2021
    %v2366 = vunpack.c.h.b16 %v2021
    %v2367 = vunpack.c.l.b16 %v2022
    %v2368 = vunpack.c.h.b16 %v2022
    %v2369 = vunpack.c.l.b16 %v2023
    %v2370 = vunpack.c.h.b16 %v2023
    %v2371 = vunpack.c.l.b16 %v2024
    %v2372 = vunpack.c.h.b16 %v2024
    %v2373 = vunpack.c.l.b16 %v2025
    %v2374 = vunpack.c.h.b16 %v2025
    %v2375 = vunpack.c.l.b16 %v2026
    %v2376 = vunpack.c.h.b16 %v2026
    %v2377 = vunpack.c.l.b16 %v2027
    %v2378 = vunpack.c.h.b16 %v2027
    %v2379 = vunpack.c.l.b16 %v2028
    %v2380 = vunpack.c.h.b16 %v2028
    %v2381 = vunpack.c.l.b16 %v2029
    %v2382 = vunpack.c.h.b16 %v2029
    %v2383 = vunpack.c.l.b16 %v2030
    %v2384 = vunpack.c.h.b16 %v2030
    %v2385 = vunpack.c.l.b16 %v2031
    %v2386 = vunpack.c.h.b16 %v2031
    %v2387 = vunpack.c.l.b16 %v2032
    %v2388 = vunpack.c.h.b16 %v2032
    %v2389 = vunpack.c.l.b16 %v2033
    %v2390 = vunpack.c.h.b16 %v2033
    %v2391 = vunpack.c.l.b16 %v2034
    %v2392 = vunpack.c.h.b16 %v2034
    %v2393 = vunpack.c.l.b16 %v2035
    %v2394 = vunpack.c.h.b16 %v2035
    %v2395 = vunpack.c.l.b16 %v2036
    %v2396 = vunpack.c.h.b16 %v2036
    %v2397 = vunpack.c.l.b16 %v2037
    %v2398 = vunpack.c.h.b16 %v2037
    %v2399 = vunpack.c.l.b16 %v2038
    %v2400 = vunpack.c.h.b16 %v2038
    %v2401 = vunpack.c.l.b16 %v2039
    %v2402 = vunpack.c.h.b16 %v2039
    %v2403 = vunpack.c.l.b16 %v2040
    %v2404 = vunpack.c.h.b16 %v2040
    %v2405 = vunpack.c.l.b16 %v2041
    %v2406 = vunpack.c.h.b16 %v2041
    %v2407 = vunpack.c.l.b16 %v2042
    %v2408 = vunpack.c.h.b16 %v2042
    %v2409 = vunpack.c.l.b16 %v2043
    %v2410 = vunpack.c.h.b16 %v2043
    %v2411 = vunpack.c.l.b16 %v2044
    %v2412 = vunpack.c.h.b16 %v2044
    %v2413 = vunpack.c.l.b16 %v2045
    %v2414 = vunpack.c.h.b16 %v2045
    %v2415 = vunpack.c.l.b16 %v2046
    %v2416 = vunpack.c.h.b16 %v2046
    %v2417 = vunpack.c.l.b16 %v2047
    %v2418 = vunpack.c.h.b16 %v2047
    %v2419 = vunpack.c.l.b16 %v2048
    %v2420 = vunpack.c.h.b16 %v2048
    %v2421 = vunpack.c.l.b16 %v2049
    %v2422 = vunpack.c.h.b16 %v2049
    %v2423 = vunpack.c.l.b16 %v2050
    %v2424 = vunpack.c.h.b16 %v2050
    %v2425 = vunpack.c.l.b16 %v2051
    %v2426 = vunpack.c.h.b16 %v2051
    %v2427 = vunpack.c.l.b16 %v2052
    %v2428 = vunpack.c.h.b16 %v2052
    %v2429 = vunpack.c.l.b16 %v2053
    %v2430 = vunpack.c.h.b16 %v2053
    %v2431 = vunpack.c.l.b16 %v2054
    %v2432 = vunpack.c.h.b16 %v2054
    %v2433 = vunpack.c.l.b16 %v2055
    %v2434 = vunpack.c.h.b16 %v2055
    %v2435 = vunpack.c.l.b16 %v2056
    %v2436 = vunpack.c.h.b16 %v2056
    %v2437 = vunpack.c.l.b16 %v2057
    %v2438 = vunpack.c.h.b16 %v2057
    %v2439 = vunpack.c.l.b16 %v2058
    %v2440 = vunpack.c.h.b16 %v2058
    %v2441 = vunpack.c.l.b16 %v2059
    %v2442 = vunpack.c.h.b16 %v2059
    %v2443 = vunpack.c.l.b16 %v2060
    %v2444 = vunpack.c.h.b16 %v2060
    %v2445 = vunpack.c.l.b16 %v2061
    %v2446 = vunpack.c.h.b16 %v2061
    %v2447 = vunpack.c.l.b16 %v2062
    %v2448 = vunpack.c.h.b16 %v2062
    %v2449 = vunpack.c.l.b16 %v2063
    %v2450 = vunpack.c.h.b16 %v2063
    %v2451 = vunpack.c.l.b16 %v2064
    %v2452 = vunpack.c.h.b16 %v2064
    %v2453 = vunpack.c.l.b16 %v2065
    %v2454 = vunpack.c.h.b16 %v2065
    %v2455 = vunpack.c.l.b16 %v2066
    %v2456 = vunpack.c.h.b16 %v2066
    %v2457 = vunpack.c.l.b16 %v2067
    %v2458 = vunpack.c.h.b16 %v2067
    %v2459 = vunpack.c.l.b16 %v2068
    %v2460 = vunpack.c.h.b16 %v2068
    %v2461 = vunpack.c.l.b16 %v2069
    %v2462 = vunpack.c.h.b16 %v2069
    %v2463 = vunpack.c.l.b16 %v2070
    %v2464 = vunpack.c.h.b16 %v2070
    %v2465 = vunpack.c.l.b16 %v2071
    %v2466 = vunpack.c.h.b16 %v2071
    %v2467 = vunpack.c.l.b16 %v2072
    %v2468 = vunpack.c.h.b16 %v2072
    %v2469 = vunpack.c.l.b16 %v2073
    %v2470 = vunpack.c.h.b16 %v2073
    %v2471 = vunpack.c.l.b16 %v2074
    %v2472 = vunpack.c.h.b16 %v2074
    %v2473 = vunpack.c.l.b16 %v2075
    %v2474 = vunpack.c.h.b16 %v2075
    %v2475 = vunpack.c.l.b16 %v2076
    %v2476 = vunpack.c.h.b16 %v2076
    %v2477 = vunpack.c.l.b16 %v2077
    %v2478 = vunpack.c.h.b16 %v2077
    %v2479 = vunpack.c.l.b16 %v2078
    %v2480 = vunpack.c.h.b16 %v2078
    %v2481 = vunpack.c.l.b16 %v2079
    %v2482 = vunpack.c.h.b16 %v2079
    %v2483 = vunpack.c.l.b16 %v2080
    %v2484 = vunpack.c.h.b16 %v2080
    %v2485 = vunpack.c.l.b16 %v2081
    %v2486 = vunpack.c.h.b16 %v2081
    %v2487 = vunpack.c.l.b16 %v2082
    %v2488 = vunpack.c.h.b16 %v2082
    %v2489 = vpack.c.b16 %v2237, %v2233
    %v2490 = vpack.c.b16 %v2238, %v2234
    %v2491 = vpack.c.b16 %v2239, %v2235
    %v2492 = vpack.c.b16 %v2240, %v2236
    %v2493 = vpack.c.b16 %v2245, %v2241
    %v2494 = vpack.c.b16 %v2246, %v2242
    %v2495 = vpack.c.b16 %v2247, %v2243
    %v2496 = vpack.c.b16 %v2248, %v2244
    %v2497 = vpack.c.b16 %v2253, %v2249
    %v2498 = vpack.c.b16 %v2254, %v2250
    %v2499 = vpack.c.b16 %v2255, %v2251
    %v2500 = vpack.c.b16 %v2256, %v2252
    %v2501 = vpack.c.b16 %v2261, %v2257
    %v2502 = vpack.c.b16 %v2262, %v2258
    %v2503 = vpack.c.b16 %v2263, %v2259
    %v2504 = vpack.c.b16 %v2264, %v2260
    %v2505 = vpack.c.b16 %v2269, %v2265
    %v2506 = vpack.c.b16 %v2270, %v2266
    %v2507 = vpack.c.b16 %v2271, %v2267
    %v2508 = vpack.c.b16 %v2272, %v2268
    %v2509 = vpack.c.b16 %v2277, %v2273
    %v2510 = vpack.c.b16 %v2278, %v2274
    %v2511 = vpack.c.b16 %v2279, %v2275
    %v2512 = vpack.c.b16 %v2280, %v2276
    %v2513 = vpack.c.b16 %v2285, %v2281
    %v2514 = vpack.c.b16 %v2286, %v2282
    %v2515 = vpack.c.b16 %v2287, %v2283
    %v2516 = vpack.c.b16 %v2288, %v2284
    %v2517 = vpack.c.b16 %v2293, %v2289
    %v2518 = vpack.c.b16 %v2294, %v2290
    %v2519 = vpack.c.b16 %v2295, %v2291
    %v2520 = vpack.c.b16 %v2296, %v2292
    %v2521 = vpack.c.b16 %v2301, %v2297
    %v2522 = vpack.c.b16 %v2302, %v2298
    %v2523 = vpack.c.b16 %v2303, %v2299
    %v2524 = vpack.c.b16 %v2304, %v2300
    %v2525 = vpack.c.b16 %v2309, %v2305
    %v2526 = vpack.c.b16 %v2310, %v2306
    %v2527 = vpack.c.b16 %v2311, %v2307
    %v2528 = vpack.c.b16 %v2312, %v2308
    %v2529 = vpack.c.b16 %v2317, %v2313
    %v2530 = vpack.c.b16 %v2318, %v2314
    %v2531 = vpack.c.b16 %v2319, %v2315
    %v2532 = vpack.c.b16 %v2320, %v2316
    %v2533 = vpack.c.b16 %v2325, %v2321
    %v2534 = vpack.c.b16 %v2326, %v2322
    %v2535 = vpack.c.b16 %v2327, %v2323
    %v2536 = vpack.c.b16 %v2328, %v2324
    %v2537 = vpack.c.b16 %v2333, %v2329
    %v2538 = vpack.c.b16 %v2334, %v2330
    %v2539 = vpack.c.b16 %v2335, %v2331
    %v2540 = vpack.c.b16 %v2336, %v2332
    %v2541 = vpack.c.b16 %v2341, %v2337
    %v2542 = vpack.c.b16 %v2342, %v2338
    %v2543 = vpack.c.b16 %v2343, %v2339
    %v2544 = vpack.c.b16 %v2344, %v2340
    %v2545 = vpack.c.b16 %v2349, %v2345
    %v2546 = vpack.c.b16 %v2350, %v2346
    %v2547 = vpack.c.b16 %v2351, %v2347
    %v2548 = vpack.c.b16 %v2352, %v2348
    %v2549 = vpack.c.b16 %v2357, %v2353
    %v2550 = vpack.c.b16 %v2358, %v2354
    %v2551 = vpack.c.b16 %v2359, %v2355
    %v2552 = vpack.c.b16 %v2360, %v2356
    %v2553 = vpack.c.b16 %v2365, %v2361
    %v2554 = vpack.c.b16 %v2366, %v2362
    %v2555 = vpack.c.b16 %v2367, %v2363
    %v2556 = vpack.c.b16 %v2368, %v2364
    %v2557 = vpack.c.b16 %v2373, %v2369
    %v2558 = vpack.c.b16 %v2374, %v2370
    %v2559 = vpack.c.b16 %v2375, %v2371
    %v2560 = vpack.c.b16 %v2376, %v2372
    %v2561 = vpack.c.b16 %v2381, %v2377
    %v2562 = vpack.c.b16 %v2382, %v2378
    %v2563 = vpack.c.b16 %v2383, %v2379
    %v2564 = vpack.c.b16 %v2384, %v2380
    %v2565 = vpack.c.b16 %v2389, %v2385
    %v2566 = vpack.c.b16 %v2390, %v2386
    %v2567 = vpack.c.b16 %v2391, %v2387
    %v2568 = vpack.c.b16 %v2392, %v2388
    %v2569 = vpack.c.b16 %v2397, %v2393
    %v2570 = vpack.c.b16 %v2398, %v2394
    %v2571 = vpack.c.b16 %v2399, %v2395
    %v2572 = vpack.c.b16 %v2400, %v2396
    %v2573 = vpack.c.b16 %v2405, %v2401
    %v2574 = vpack.c.b16 %v2406, %v2402
    %v2575 = vpack.c.b16 %v2407, %v2403
    %v2576 = vpack.c.b16 %v2408, %v2404
    %v2577 = vpack.c.b16 %v2413, %v2409
    %v2578 = vpack.c.b16 %v2414, %v2410
    %v2579 = vpack.c.b16 %v2415, %v2411
    %v2580 = vpack.c.b16 %v2416, %v2412
    %v2581 = vpack.c.b16 %v2421, %v2417
    %v2582 = vpack.c.b16 %v2422, %v2418
    %v2583 = vpack.c.b16 %v2423, %v2419
    %v2584 = vpack.c.b16 %v2424, %v2420
    %v2585 = vpack.c.b16 %v2429, %v2425
    %v2586 = vpack.c.b16 %v2430, %v2426
    %v2587 = vpack.c.b16 %v2431, %v2427
    %v2588 = vpack.c.b16 %v2432, %v2428
    %v2589 = vpack.c.b16 %v2437, %v2433
    %v2590 = vpack.c.b16 %v2438, %v2434
    %v2591 = vpack.c.b16 %v2439, %v2435
    %v2592 = vpack.c.b16 %v2440, %v2436
    %v2593 = vpack.c.b16 %v2445, %v2441
    %v2594 = vpack.c.b16 %v2446, %v2442
    %v2595 = vpack.c.b16 %v2447, %v2443
    %v2596 = vpack.c.b16 %v2448, %v2444
    %v2597 = vpack.c.b16 %v2453, %v2449
    %v2598 = vpack.c.b16 %v2454, %v2450
    %v2599 = vpack.c.b16 %v2455, %v2451
    %v2600 = vpack.c.b16 %v2456, %v2452
    %v2601 = vpack.c.b16 %v2461, %v2457
    %v2602 = vpack.c.b16 %v2462, %v2458
    %v2603 = vpack.c.b16 %v2463, %v2459
    %v2604 = vpack.c.b16 %v2464, %v2460
    %v2605 = vpack.c.b16 %v2469, %v2465
    %v2606 = vpack.c.b16 %v2470, %v2466
    %v2607 = vpack.c.b16 %v2471, %v2467
    %v2608 = vpack.c.b16 %v2472, %v2468
    %v2609 = vpack.c.b16 %v2477, %v2473
    %v2610 = vpack.c.b16 %v2478, %v2474
    %v2611 = vpack.c.b16 %v2479, %v2475
    %v2612 = vpack.c.b16 %v2480, %v2476
    %v2613 = vpack.c.b16 %v2485, %v2481
    %v2614 = vpack.c.b16 %v2486, %v2482
    %v2615 = vpack.c.b16 %v2487, %v2483
    %v2616 = vpack.c.b16 %v2488, %v2484
    %2745 = vmatprep.subr.bf16.mxu0 %v2490
    %2746 = vmatpush1.bf16.msra.mxu0 %v2489
    %2747 = vmatprep.subr.bf16.mxu0 %v2494
    %2748 = vmatpush1.bf16.msra.mxu0 %v2493
    %2749 = vmatprep.subr.bf16.mxu0 %v2498
    %2750 = vmatpush1.bf16.msra.mxu0 %v2497
    %2751 = vmatprep.subr.bf16.mxu0 %v2502
    %2752 = vmatpush1.bf16.msra.mxu0 %v2501
    %2753 = vmatprep.subr.bf16.mxu0 %v2506
    %2754 = vmatpush1.bf16.msra.mxu0 %v2505
    %2755 = vmatprep.subr.bf16.mxu0 %v2510
    %2756 = vmatpush1.bf16.msra.mxu0 %v2509
    %2757 = vmatprep.subr.bf16.mxu0 %v2514
    %2758 = vmatpush1.bf16.msra.mxu0 %v2513
    %2759 = vmatprep.subr.bf16.mxu0 %v2518
    %2760 = vmatpush1.bf16.msra.mxu0 %v2517
    %2761 = vmatprep.subr.bf16.mxu0 %v2522
    %2762 = vmatpush1.bf16.msra.mxu0 %v2521
    %2763 = vmatprep.subr.bf16.mxu0 %v2526
    %2764 = vmatpush1.bf16.msra.mxu0 %v2525
    %2765 = vmatprep.subr.bf16.mxu0 %v2530
    %2766 = vmatpush1.bf16.msra.mxu0 %v2529
    %2767 = vmatprep.subr.bf16.mxu0 %v2534
    %2768 = vmatpush1.bf16.msra.mxu0 %v2533
    %2769 = vmatprep.subr.bf16.mxu0 %v2538
    %2770 = vmatpush1.bf16.msra.mxu0 %v2537
    %2771 = vmatprep.subr.bf16.mxu0 %v2542
    %2772 = vmatpush1.bf16.msra.mxu0 %v2541
    %2773 = vmatprep.subr.bf16.mxu0 %v2546
    %2774 = vmatpush1.bf16.msra.mxu0 %v2545
    %2775 = vmatprep.subr.bf16.mxu0 %v2550
    %2776 = vmatpush1.bf16.msra.mxu0 %v2549
    %2777 = vmatprep.mubr.bf16.mxu0 %v1952
    %2778 = vmatmul.mubr.bf16.gmra.mrb[0].mxu0 %v1951
    %v2779 = vpop.f32.mrb[0].mxu0
    %v2780 = vadd.f32 %v2088, %v2779
    %v2781 = vpop.f32.mrb[0].mxu0
    %v2782 = vadd.f32 %v2092, %v2781
    %v2783 = vpop.f32.mrb[0].mxu0
    %v2784 = vpop.f32.mrb[0].mxu0
    %2785 = vdwg.mxu0
    %2786 = vmatprep.subr.bf16.mxu0 %v2554
    %2787 = vmatpush1.bf16.msra.mxu0 %v2553
    %2788 = vmatprep.subr.bf16.mxu0 %v2558
    %2789 = vmatpush1.bf16.msra.mxu0 %v2557
    %2790 = vmatprep.subr.bf16.mxu0 %v2562
    %2791 = vmatpush1.bf16.msra.mxu0 %v2561
    %2792 = vmatprep.subr.bf16.mxu0 %v2566
    %2793 = vmatpush1.bf16.msra.mxu0 %v2565
    %2794 = vmatprep.subr.bf16.mxu0 %v2570
    %2795 = vmatpush1.bf16.msra.mxu0 %v2569
    %2796 = vmatprep.subr.bf16.mxu0 %v2574
    %2797 = vmatpush1.bf16.msra.mxu0 %v2573
    %2798 = vmatprep.subr.bf16.mxu0 %v2578
    %2799 = vmatpush1.bf16.msra.mxu0 %v2577
    %2800 = vmatprep.subr.bf16.mxu0 %v2582
    %2801 = vmatpush1.bf16.msra.mxu0 %v2581
    %2802 = vmatprep.subr.bf16.mxu0 %v2586
    %2803 = vmatpush1.bf16.msra.mxu0 %v2585
    %2804 = vmatprep.subr.bf16.mxu0 %v2590
    %2805 = vmatpush1.bf16.msra.mxu0 %v2589
    %2806 = vmatprep.subr.bf16.mxu0 %v2594
    %2807 = vmatpush1.bf16.msra.mxu0 %v2593
    %2808 = vmatprep.subr.bf16.mxu0 %v2598
    %2809 = vmatpush1.bf16.msra.mxu0 %v2597
    %2810 = vmatprep.subr.bf16.mxu0 %v2602
    %2811 = vmatpush1.bf16.msra.mxu0 %v2601
    %2812 = vmatprep.subr.bf16.mxu0 %v2606
    %2813 = vmatpush1.bf16.msra.mxu0 %v2605
    %2814 = vmatprep.subr.bf16.mxu0 %v2610
    %2815 = vmatpush1.bf16.msra.mxu0 %v2609
    %2816 = vmatprep.subr.bf16.mxu0 %v2614
    %2817 = vmatpush1.bf16.msra.mxu0 %v2613
    %2818 = vmatprep.mubr.bf16.mxu0 %v1954
    %2819 = vmatmul.mubr.bf16.gmra.mrb[0].mxu0 %v1953
    %v2820 = vpop.f32.mrb[0].mxu0
    %v2821 = vadd.f32 %v2780, %v2820
    %v2822 = vpop.f32.mrb[0].mxu0
    %v2823 = vadd.f32 %v2782, %v2822
    %v2824 = vpop.f32.mrb[0].mxu0
    %v2825 = vpop.f32.mrb[0].mxu0
    %2826 = vdwg.mxu0
    %2827 = vmatprep.subr.bf16.mxu0 %v2492
    %2828 = vmatpush1.bf16.msra.mxu0 %v2491
    %2829 = vmatprep.subr.bf16.mxu0 %v2496
    %2830 = vmatpush1.bf16.msra.mxu0 %v2495
    %2831 = vmatprep.subr.bf16.mxu0 %v2500
    %2832 = vmatpush1.bf16.msra.mxu0 %v2499
    %2833 = vmatprep.subr.bf16.mxu0 %v2504
    %2834 = vmatpush1.bf16.msra.mxu0 %v2503
    %2835 = vmatprep.subr.bf16.mxu0 %v2508
    %2836 = vmatpush1.bf16.msra.mxu0 %v2507
    %2837 = vmatprep.subr.bf16.mxu0 %v2512
    %2838 = vmatpush1.bf16.msra.mxu0 %v2511
    %2839 = vmatprep.subr.bf16.mxu0 %v2516
    %2840 = vmatpush1.bf16.msra.mxu0 %v2515
    %2841 = vmatprep.subr.bf16.mxu0 %v2520
    %2842 = vmatpush1.bf16.msra.mxu0 %v2519
    %2843 = vmatprep.subr.bf16.mxu0 %v2524
    %2844 = vmatpush1.bf16.msra.mxu0 %v2523
    %2845 = vmatprep.subr.bf16.mxu0 %v2528
    %2846 = vmatpush1.bf16.msra.mxu0 %v2527
    %2847 = vmatprep.subr.bf16.mxu0 %v2532
    %2848 = vmatpush1.bf16.msra.mxu0 %v2531
    %2849 = vmatprep.subr.bf16.mxu0 %v2536
    %2850 = vmatpush1.bf16.msra.mxu0 %v2535
    %2851 = vmatprep.subr.bf16.mxu0 %v2540
    %2852 = vmatpush1.bf16.msra.mxu0 %v2539
    %2853 = vmatprep.subr.bf16.mxu0 %v2544
    %2854 = vmatpush1.bf16.msra.mxu0 %v2543
    %2855 = vmatprep.subr.bf16.mxu0 %v2548
    %2856 = vmatpush1.bf16.msra.mxu0 %v2547
    %2857 = vmatprep.subr.bf16.mxu0 %v2552
    %2858 = vmatpush1.bf16.msra.mxu0 %v2551
    %2859 = vmatprep.mubr.bf16.mxu0 %v1952
    %2860 = vmatmul.mubr.bf16.gmra.mrb[0].mxu0 %v1951
    %v2861 = vpop.f32.mrb[0].mxu0
    %v2862 = vadd.f32 %v2096, %v2861
    %v2863 = vpop.f32.mrb[0].mxu0
    %v2864 = vadd.f32 %v2100, %v2863
    %v2865 = vpop.f32.mrb[0].mxu0
    %v2866 = vpop.f32.mrb[0].mxu0
    %2867 = vdwg.mxu0
    %2868 = vmatprep.subr.bf16.mxu0 %v2556
    %2869 = vmatpush1.bf16.msra.mxu0 %v2555
    %2870 = vmatprep.subr.bf16.mxu0 %v2560
    %2871 = vmatpush1.bf16.msra.mxu0 %v2559
    %2872 = vmatprep.subr.bf16.mxu0 %v2564
    %2873 = vmatpush1.bf16.msra.mxu0 %v2563
    %2874 = vmatprep.subr.bf16.mxu0 %v2568
    %2875 = vmatpush1.bf16.msra.mxu0 %v2567
    %2876 = vmatprep.subr.bf16.mxu0 %v2572
    %2877 = vmatpush1.bf16.msra.mxu0 %v2571
    %2878 = vmatprep.subr.bf16.mxu0 %v2576
    %2879 = vmatpush1.bf16.msra.mxu0 %v2575
    %2880 = vmatprep.subr.bf16.mxu0 %v2580
    %2881 = vmatpush1.bf16.msra.mxu0 %v2579
    %2882 = vmatprep.subr.bf16.mxu0 %v2584
    %2883 = vmatpush1.bf16.msra.mxu0 %v2583
    %2884 = vmatprep.subr.bf16.mxu0 %v2588
    %2885 = vmatpush1.bf16.msra.mxu0 %v2587
    %2886 = vmatprep.subr.bf16.mxu0 %v2592
    %2887 = vmatpush1.bf16.msra.mxu0 %v2591
    %2888 = vmatprep.subr.bf16.mxu0 %v2596
    %2889 = vmatpush1.bf16.msra.mxu0 %v2595
    %2890 = vmatprep.subr.bf16.mxu0 %v2600
    %2891 = vmatpush1.bf16.msra.mxu0 %v2599
    %2892 = vmatprep.subr.bf16.mxu0 %v2604
    %2893 = vmatpush1.bf16.msra.mxu0 %v2603
    %2894 = vmatprep.subr.bf16.mxu0 %v2608
    %2895 = vmatpush1.bf16.msra.mxu0 %v2607
    %2896 = vmatprep.subr.bf16.mxu0 %v2612
    %2897 = vmatpush1.bf16.msra.mxu0 %v2611
    %2898 = vmatprep.subr.bf16.mxu0 %v2616
    %2899 = vmatpush1.bf16.msra.mxu0 %v2615
    %2900 = vmatprep.mubr.bf16.mxu0 %v1954
    %2901 = vmatmul.mubr.bf16.gmra.mrb[0].mxu0 %v1953
    %v2902 = vpop.f32.mrb[0].mxu0
    %v2903 = vadd.f32 %v2862, %v2902
    %v2904 = vpop.f32.mrb[0].mxu0
    %v2905 = vadd.f32 %v2864, %v2904
    %v2906 = vpop.f32.mrb[0].mxu0
    %v2907 = vpop.f32.mrb[0].mxu0
    %2908 = vdwg.mxu0
    %v2909 = vmax.f32 %v2821, 0.0
    %v2910 = vmax.f32 %v2823, 0.0
    %v2911 = vmax.f32 %v2903, 0.0
    %v2912 = vmax.f32 %v2905, 0.0
    %v2913 = vpack.c.bf16 %v2909, %v2909
    %v2914 = vpack.c.bf16 %v2910, %v2910
    %v2915 = vpack.c.bf16 %v2911, %v2911
    %v2916 = vpack.c.bf16 %v2912, %v2912
    %v2917 = vld [vmem:[%s14] sm:$0xf]
    %v2918 = vld [vmem:[%s14 + $0x4] sm:$0xf]
    %v2919 = vld [vmem:[%s14 + $0x8] sm:$0xf]
    %v2920 = vld [vmem:[%s14 + $0xc] sm:$0xf]
    %v2921 = vld [vmem:[%s14 + $0x10] sm:$0xf]
    %v2922 = vld [vmem:[%s14 + $0x14] sm:$0xf]
    %v2923 = vld [vmem:[%s14 + $0x18] sm:$0xf]
    %v2924 = vld [vmem:[%s14 + $0x1c] sm:$0xf]
    %v2925 = vld [vmem:[%s14 + $0x20] sm:$0xf]
    %v2926 = vld [vmem:[%s14 + $0x24] sm:$0xf]
    %v2927 = vld [vmem:[%s14 + $0x28] sm:$0xf]
    %v2928 = vld [vmem:[%s14 + $0x2c] sm:$0xf]
    %v2929 = vld [vmem:[%s14 + $0x30] sm:$0xf]
    %v2930 = vld [vmem:[%s14 + $0x34] sm:$0xf]
    %v2931 = vld [vmem:[%s14 + $0x38] sm:$0xf]
    %v2932 = vld [vmem:[%s14 + $0x3c] sm:$0xf]
    %v2933 = vld [vmem:[%s14 + $0x40] sm:$0xf]
    %v2934 = vld [vmem:[%s14 + $0x44] sm:$0xf]
    %v2935 = vld [vmem:[%s14 + $0x48] sm:$0xf]
    %v2936 = vld [vmem:[%s14 + $0x4c] sm:$0xf]
    %v2937 = vld [vmem:[%s14 + $0x50] sm:$0xf]
    %v2938 = vld [vmem:[%s14 + $0x54] sm:$0xf]
    %v2939 = vld [vmem:[%s14 + $0x58] sm:$0xf]
    %v2940 = vld [vmem:[%s14 + $0x5c] sm:$0xf]
    %v2941 = vld [vmem:[%s14 + $0x60] sm:$0xf]
    %v2942 = vld [vmem:[%s14 + $0x64] sm:$0xf]
    %v2943 = vld [vmem:[%s14 + $0x68] sm:$0xf]
    %v2944 = vld [vmem:[%s14 + $0x6c] sm:$0xf]
    %v2945 = vld [vmem:[%s14 + $0x70] sm:$0xf]
    %v2946 = vld [vmem:[%s14 + $0x74] sm:$0xf]
    %v2947 = vld [vmem:[%s14 + $0x78] sm:$0xf]
    %v2948 = vld [vmem:[%s14 + $0x7c] sm:$0xf]
    %v2949 = vld [vmem:[%s14 + $0x80] sm:$0xf]
    %v2950 = vld [vmem:[%s14 + $0x84] sm:$0xf]
    %v2951 = vld [vmem:[%s14 + $0x88] sm:$0xf]
    %v2952 = vld [vmem:[%s14 + $0x8c] sm:$0xf]
    %v2953 = vld [vmem:[%s14 + $0x90] sm:$0xf]
    %v2954 = vld [vmem:[%s14 + $0x94] sm:$0xf]
    %v2955 = vld [vmem:[%s14 + $0x98] sm:$0xf]
    %v2956 = vld [vmem:[%s14 + $0x9c] sm:$0xf]
    %v2957 = vld [vmem:[%s14 + $0xa0] sm:$0xf]
    %v2958 = vld [vmem:[%s14 + $0xa4] sm:$0xf]
    %v2959 = vld [vmem:[%s14 + $0xa8] sm:$0xf]
    %v2960 = vld [vmem:[%s14 + $0xac] sm:$0xf]
    %v2961 = vld [vmem:[%s14 + $0xb0] sm:$0xf]
    %v2962 = vld [vmem:[%s14 + $0xb4] sm:$0xf]
    %v2963 = vld [vmem:[%s14 + $0xb8] sm:$0xf]
    %v2964 = vld [vmem:[%s14 + $0xbc] sm:$0xf]
    %v2965 = vld [vmem:[%s14 + $0xc0] sm:$0xf]
    %v2966 = vld [vmem:[%s14 + $0xc4] sm:$0xf]
    %v2967 = vld [vmem:[%s14 + $0xc8] sm:$0xf]
    %v2968 = vld [vmem:[%s14 + $0xcc] sm:$0xf]
    %v2969 = vld [vmem:[%s14 + $0xd0] sm:$0xf]
    %v2970 = vld [vmem:[%s14 + $0xd4] sm:$0xf]
    %v2971 = vld [vmem:[%s14 + $0xd8] sm:$0xf]
    %v2972 = vld [vmem:[%s14 + $0xdc] sm:$0xf]
    %v2973 = vld [vmem:[%s14 + $0xe0] sm:$0xf]
    %v2974 = vld [vmem:[%s14 + $0xe4] sm:$0xf]
    %v2975 = vld [vmem:[%s14 + $0xe8] sm:$0xf]
    %v2976 = vld [vmem:[%s14 + $0xec] sm:$0xf]
    %v2977 = vld [vmem:[%s14 + $0xf0] sm:$0xf]
    %v2978 = vld [vmem:[%s14 + $0xf4] sm:$0xf]
    %v2979 = vld [vmem:[%s14 + $0xf8] sm:$0xf]
    %v2980 = vld [vmem:[%s14 + $0xfc] sm:$0xf]
    %v2981 = vld [vmem:[%s15] sm:$0x1]
    %v2983 = vlaneseq
    %v2984 = vshrl.u32 %v2983, 7
    %v2985 = vsub.s32 0, %v2984
    %v2986 = vrot.slane %v2981, %v2985
    %v3052 = vunpack.c.l.b16 %v2917
    %v3053 = vunpack.c.l.b16 %v2918
    %v3054 = vunpack.c.l.b16 %v2919
    %v3055 = vunpack.c.l.b16 %v2920
    %v3056 = vunpack.c.l.b16 %v2921
    %v3057 = vunpack.c.l.b16 %v2922
    %v3058 = vunpack.c.l.b16 %v2923
    %v3059 = vunpack.c.l.b16 %v2924
    %v3060 = vunpack.c.l.b16 %v2925
    %v3061 = vunpack.c.l.b16 %v2926
    %v3062 = vunpack.c.l.b16 %v2927
    %v3063 = vunpack.c.l.b16 %v2928
    %v3064 = vunpack.c.l.b16 %v2929
    %v3065 = vunpack.c.l.b16 %v2930
    %v3066 = vunpack.c.l.b16 %v2931
    %v3067 = vunpack.c.l.b16 %v2932
    %v3068 = vunpack.c.l.b16 %v2933
    %v3069 = vunpack.c.l.b16 %v2934
    %v3070 = vunpack.c.l.b16 %v2935
    %v3071 = vunpack.c.l.b16 %v2936
    %v3072 = vunpack.c.l.b16 %v2937
    %v3073 = vunpack.c.l.b16 %v2938
    %v3074 = vunpack.c.l.b16 %v2939
    %v3075 = vunpack.c.l.b16 %v2940
    %v3076 = vunpack.c.l.b16 %v2941
    %v3077 = vunpack.c.l.b16 %v2942
    %v3078 = vunpack.c.l.b16 %v2943
    %v3079 = vunpack.c.l.b16 %v2944
    %v3080 = vunpack.c.l.b16 %v2945
    %v3081 = vunpack.c.l.b16 %v2946
    %v3082 = vunpack.c.l.b16 %v2947
    %v3083 = vunpack.c.l.b16 %v2948
    %v3084 = vunpack.c.l.b16 %v2949
    %v3085 = vunpack.c.l.b16 %v2950
    %v3086 = vunpack.c.l.b16 %v2951
    %v3087 = vunpack.c.l.b16 %v2952
    %v3088 = vunpack.c.l.b16 %v2953
    %v3089 = vunpack.c.l.b16 %v2954
    %v3090 = vunpack.c.l.b16 %v2955
    %v3091 = vunpack.c.l.b16 %v2956
    %v3092 = vunpack.c.l.b16 %v2957
    %v3093 = vunpack.c.l.b16 %v2958
    %v3094 = vunpack.c.l.b16 %v2959
    %v3095 = vunpack.c.l.b16 %v2960
    %v3096 = vunpack.c.l.b16 %v2961
    %v3097 = vunpack.c.l.b16 %v2962
    %v3098 = vunpack.c.l.b16 %v2963
    %v3099 = vunpack.c.l.b16 %v2964
    %v3100 = vunpack.c.l.b16 %v2965
    %v3101 = vunpack.c.l.b16 %v2966
    %v3102 = vunpack.c.l.b16 %v2967
    %v3103 = vunpack.c.l.b16 %v2968
    %v3104 = vunpack.c.l.b16 %v2969
    %v3105 = vunpack.c.l.b16 %v2970
    %v3106 = vunpack.c.l.b16 %v2971
    %v3107 = vunpack.c.l.b16 %v2972
    %v3108 = vunpack.c.l.b16 %v2973
    %v3109 = vunpack.c.l.b16 %v2974
    %v3110 = vunpack.c.l.b16 %v2975
    %v3111 = vunpack.c.l.b16 %v2976
    %v3112 = vunpack.c.l.b16 %v2977
    %v3113 = vunpack.c.l.b16 %v2978
    %v3114 = vunpack.c.l.b16 %v2979
    %v3115 = vunpack.c.l.b16 %v2980
    %v3116 = vpack.c.b16 %v3053, %v3052
    %v3117 = vpack.c.b16 %v3055, %v3054
    %v3118 = vpack.c.b16 %v3057, %v3056
    %v3119 = vpack.c.b16 %v3059, %v3058
    %v3120 = vpack.c.b16 %v3061, %v3060
    %v3121 = vpack.c.b16 %v3063, %v3062
    %v3122 = vpack.c.b16 %v3065, %v3064
    %v3123 = vpack.c.b16 %v3067, %v3066
    %v3124 = vpack.c.b16 %v3069, %v3068
    %v3125 = vpack.c.b16 %v3071, %v3070
    %v3126 = vpack.c.b16 %v3073, %v3072
    %v3127 = vpack.c.b16 %v3075, %v3074
    %v3128 = vpack.c.b16 %v3077, %v3076
    %v3129 = vpack.c.b16 %v3079, %v3078
    %v3130 = vpack.c.b16 %v3081, %v3080
    %v3131 = vpack.c.b16 %v3083, %v3082
    %v3132 = vpack.c.b16 %v3085, %v3084
    %v3133 = vpack.c.b16 %v3087, %v3086
    %v3134 = vpack.c.b16 %v3089, %v3088
    %v3135 = vpack.c.b16 %v3091, %v3090
    %v3136 = vpack.c.b16 %v3093, %v3092
    %v3137 = vpack.c.b16 %v3095, %v3094
    %v3138 = vpack.c.b16 %v3097, %v3096
    %v3139 = vpack.c.b16 %v3099, %v3098
    %v3140 = vpack.c.b16 %v3101, %v3100
    %v3141 = vpack.c.b16 %v3103, %v3102
    %v3142 = vpack.c.b16 %v3105, %v3104
    %v3143 = vpack.c.b16 %v3107, %v3106
    %v3144 = vpack.c.b16 %v3109, %v3108
    %v3145 = vpack.c.b16 %v3111, %v3110
    %v3146 = vpack.c.b16 %v3113, %v3112
    %v3147 = vpack.c.b16 %v3115, %v3114
    %3180 = vmatprep.subr.bf16.mxu0 0
    %3181 = vmatpush1.bf16.msra.mxu0 %v3116
    %3182 = vmatprep.subr.bf16.mxu0 0
    %3183 = vmatpush1.bf16.msra.mxu0 %v3117
    %3184 = vmatprep.subr.bf16.mxu0 0
    %3185 = vmatpush1.bf16.msra.mxu0 %v3118
    %3186 = vmatprep.subr.bf16.mxu0 0
    %3187 = vmatpush1.bf16.msra.mxu0 %v3119
    %3188 = vmatprep.subr.bf16.mxu0 0
    %3189 = vmatpush1.bf16.msra.mxu0 %v3120
    %3190 = vmatprep.subr.bf16.mxu0 0
    %3191 = vmatpush1.bf16.msra.mxu0 %v3121
    %3192 = vmatprep.subr.bf16.mxu0 0
    %3193 = vmatpush1.bf16.msra.mxu0 %v3122
    %3194 = vmatprep.subr.bf16.mxu0 0
    %3195 = vmatpush1.bf16.msra.mxu0 %v3123
    %3196 = vmatprep.subr.bf16.mxu0 0
    %3197 = vmatpush1.bf16.msra.mxu0 %v3124
    %3198 = vmatprep.subr.bf16.mxu0 0
    %3199 = vmatpush1.bf16.msra.mxu0 %v3125
    %3200 = vmatprep.subr.bf16.mxu0 0
    %3201 = vmatpush1.bf16.msra.mxu0 %v3126
    %3202 = vmatprep.subr.bf16.mxu0 0
    %3203 = vmatpush1.bf16.msra.mxu0 %v3127
    %3204 = vmatprep.subr.bf16.mxu0 0
    %3205 = vmatpush1.bf16.msra.mxu0 %v3128
    %3206 = vmatprep.subr.bf16.mxu0 0
    %3207 = vmatpush1.bf16.msra.mxu0 %v3129
    %3208 = vmatprep.subr.bf16.mxu0 0
    %3209 = vmatpush1.bf16.msra.mxu0 %v3130
    %3210 = vmatprep.subr.bf16.mxu0 0
    %3211 = vmatpush1.bf16.msra.mxu0 %v3131
    %3212 = vmatprep.mubr.bf16.mxu0 %v2914
    %3213 = vmatmul.mubr.bf16.gmra.mrb[0].mxu0 %v2913
    %v3214 = vpop.f32.mrb[0].mxu0
    %v3215 = vadd.f32 %v2986, %v3214
    %v3216 = vpop.f32.mrb[0].mxu0
    %v3217 = vpop.f32.mrb[0].mxu0
    %v3218 = vpop.f32.mrb[0].mxu0
    %3219 = vdwg.mxu0
    %3220 = vmatprep.subr.bf16.mxu0 0
    %3221 = vmatpush1.bf16.msra.mxu0 %v3132
    %3222 = vmatprep.subr.bf16.mxu0 0
    %3223 = vmatpush1.bf16.msra.mxu0 %v3133
    %3224 = vmatprep.subr.bf16.mxu0 0
    %3225 = vmatpush1.bf16.msra.mxu0 %v3134
    %3226 = vmatprep.subr.bf16.mxu0 0
    %3227 = vmatpush1.bf16.msra.mxu0 %v3135
    %3228 = vmatprep.subr.bf16.mxu0 0
    %3229 = vmatpush1.bf16.msra.mxu0 %v3136
    %3230 = vmatprep.subr.bf16.mxu0 0
    %3231 = vmatpush1.bf16.msra.mxu0 %v3137
    %3232 = vmatprep.subr.bf16.mxu0 0
    %3233 = vmatpush1.bf16.msra.mxu0 %v3138
    %3234 = vmatprep.subr.bf16.mxu0 0
    %3235 = vmatpush1.bf16.msra.mxu0 %v3139
    %3236 = vmatprep.subr.bf16.mxu0 0
    %3237 = vmatpush1.bf16.msra.mxu0 %v3140
    %3238 = vmatprep.subr.bf16.mxu0 0
    %3239 = vmatpush1.bf16.msra.mxu0 %v3141
    %3240 = vmatprep.subr.bf16.mxu0 0
    %3241 = vmatpush1.bf16.msra.mxu0 %v3142
    %3242 = vmatprep.subr.bf16.mxu0 0
    %3243 = vmatpush1.bf16.msra.mxu0 %v3143
    %3244 = vmatprep.subr.bf16.mxu0 0
    %3245 = vmatpush1.bf16.msra.mxu0 %v3144
    %3246 = vmatprep.subr.bf16.mxu0 0
    %3247 = vmatpush1.bf16.msra.mxu0 %v3145
    %3248 = vmatprep.subr.bf16.mxu0 0
    %3249 = vmatpush1.bf16.msra.mxu0 %v3146
    %3250 = vmatprep.subr.bf16.mxu0 0
    %3251 = vmatpush1.bf16.msra.mxu0 %v3147
    %3252 = vmatprep.mubr.bf16.mxu0 %v2916
    %3253 = vmatmul.mubr.bf16.gmra.mrb[0].mxu0 %v2915
    %v3254 = vpop.f32.mrb[0].mxu0
    %v3255 = vadd.f32 %v3215, %v3254
    %v3256 = vpop.f32.mrb[0].mxu0
    %v3257 = vpop.f32.mrb[0].mxu0
    %v3258 = vpop.f32.mrb[0].mxu0
    %3259 = vdwg.mxu0
    %v3260 = vand.u32 2147483647, %v3255
    %v3261 = vsub.f32 0.0, %v3260
    %v3262 = vmul.f32 %v3261, 1.442695
    %v3263 = vpow.pop %v3262
    %v3264 = vadd.f32 %v3263, 1.0
    %v3265 = vlog2.pop %v3264
    %v3266 = vmul.f32 %v3265, 0.6931472
    %v3267 = vmul.f32 -0.5, %v3263
    %v3268 = vadd.f32 %v3267, 1.0
    %v3269 = vmul.f32 %v3268, %v3263
    %v3270 = vand.u32 2147483647, %v3263
    %vm3271 = vcmp.lt.f32.partialorder %v3270, 0.0004427343
    %v3272 = vsel %vm3271, %v3269, %v3266
    %v3273 = vmax.f32 %v3255, 0.0
    %v3274 = vadd.f32 %v3272, %v3273
    %v3275 = vld [vmem:[%s16] sm:$0xff]
    %v3276 = vadd.f32 %v3274, 1e-10
    %v3277 = vrsqrt.pop %v3276
    %v3278 = vmul.f32 %v3276, %v3277
    %vm3279 = vcmp.eq.f32.partialorder %v3276, inf
    %v3280 = vsel %vm3279, %v3276, %v3278
    %vm3281 = vcmp.eq.f32.partialorder %v3276, 0.0
    %v3282 = vand.u32 %v3276, 2147483648
    %v3283 = vsel %vm3281, %v3282, %v3280
    %3285 = vrot.lane.b32.xlu0 %v3283, 96
    %v3286 = vpop.permute.xlu0 %3285
    %v3288 = vmul.f32 %v3275, %v3286
    %v3289 = vadd.f32 %v3255, %v3288
    %3290 = vst.msk [vmem:[#allocation8] sm:$0xff] %vm1605, %v1600
    %3292 = vrot.lane.b32.xlu0 %v1616, 16
    %v3293 = vpop.permute.xlu0 %3292
    %vm3295 = vcmask 261248
    %3296 = vst.msk [vmem:[#allocation8] sm:$0xff] %vm3295, %v3293
    %3298 = vrot.lane.b32.xlu0 %v1632, 32
    %v3299 = vpop.permute.xlu0 %3298
    %vm3301 = vcmask 392448
    %3302 = vst.msk [vmem:[#allocation8] sm:$0xff] %vm3301, %v3299
    %3304 = vrot.lane.b32.xlu0 %v3255, 48
    %v3305 = vpop.permute.xlu0 %3304
    %vm3307 = vcmask 654720
    %3308 = vst.msk [vmem:[#allocation8] sm:$0xff] %vm3307, %v3305
    %3310 = vrot.lane.b32.xlu0 %v3274, 48
    %v3311 = vpop.permute.xlu0 %3310
    %vm3313 = vcmask 917120
    %3314 = vst.msk [vmem:[#allocation8] sm:$0xff] %vm3313, %v3311
    %3316 = vrot.lane.b32.xlu0 %v3289, 112
    %v3317 = vpop.permute.xlu0 %3316
    %vm3319 = vcmask 1048448
    %3320 = vst.msk [vmem:[#allocation8] sm:$0xff] %vm3319, %v3317
    %3321 = vst.msk [vmem:[#allocation8 + $0x8] sm:$0xff] %vm1605, %v3317
    // Predicated region
    $region78: #{tpu_custom_call.1} parent=1 // pred_check
      _
    $region79: #{tpu_custom_call.1} parent=1 // pred_check_branch
      %3323 = sbr.rel (0) target = $region81
    $region80: #{tpu_custom_call.1} parent=1 // pred_region
      %s3325 = ssub.s32 256, 256
      %3326 = vsyncadd [#allocation5], %s3325
      %s3328 = sshll.u32 [#allocation8], 4
      %s3329 = int_to_ptr.vmem [resolvable:$true] %s3328
      %3331 = dma.vmem_to_hbm [thread:$0]  %s3329, 256, %s17, [#allocation5]
    $region81: #{tpu_custom_call.1} parent=1 // pred_fallthru
      _
    // Predicated region
    $region82: #{tpu_custom_call.1} parent=1 // pred_check
      _
    $region83: #{tpu_custom_call.1} parent=1 // pred_check_branch
      %3333 = sbr.rel (0) target = $region85
    $region84: #{tpu_custom_call.1} parent=1 // pred_region
      %3334 = dma.done [#allocation5], 256
    $region85: #{tpu_custom_call.1} parent=1 // pred_fallthru
      _
    %3335 = vsyncpa [#allocation4], 1
    %3336 = vsyncpa [#allocation7], 1
    %3337 = vsyncpa [#allocation5], 1

</llo_original>
